<compile_context>
chip_gen: v5e
topology: v5e:2x2
jax: 0.10.0
libtpu: 0.0.40
codegen_flags: <defaults>
</compile_context>

<pallas_src>
import jax
import jax.numpy as jnp
from jax import lax
import numpy as np
from jax.experimental import pallas as pl
from jax.experimental.pallas import tpu as pltpu

EPS = 1e-5
_LUCONV_VMEM_LIMIT = 48 * 1024 * 1024   # explicit scoped-VMEM limit (<= v7x 64 MiB physical)


# ----------------------------------------------------------------------------
# Kernel 1: ConvTranspose2d(k=2, s=2) as a row-tiled matmul over channels
# (the 4 sub-filters stacked on the output axis), fused with folded
# BatchNorm(eval) + ReLU. bf16 MXU operands, f32 accumulation + epilogue.
# ----------------------------------------------------------------------------
def _upconv_kernel(x_ref, w_ref, scale_ref, shift_ref, o_ref):
    y = jnp.dot(x_ref[...].astype(jnp.bfloat16), w_ref[...],
                preferred_element_type=jnp.float32)
    y = y * scale_ref[...] + shift_ref[...]
    o_ref[...] = jnp.maximum(y, 0.0)


# ----------------------------------------------------------------------------
# Kernel 2: LUconv = Conv2d 3x3 (pad=1) + folded BatchNorm(eval) + PReLU.
# Row-tiled: each grid step handles TH output rows of one image. The 1-row halo
# above/below arrives as two extra 8-row blocks (clamped index_map) and is
# masked to zero at the image boundary. The kw (+/-1 column) shift is done with
# pltpu.roll on the flattened (TH*W, C) view + column masking, so no strided
# slices cross (8,128) tile boundaries. Optionally fuses the residual add +
# final PReLU of the block (last layer).
# ----------------------------------------------------------------------------
def _make_luconv_kernel(TH, W, C, fuse_residual):
    NR = TH * W

    def conv_bn_prelu(x_ref, top_ref, bot_ref, w_ref, sc_ref, sh_ref, al_ref):
        i = pl.program_id(1)
        nrb = pl.num_programs(1)
        top_on = jnp.where(i > 0, 1.0, 0.0).astype(jnp.float32)
        bot_on = jnp.where(i < nrb - 1, 1.0, 0.0).astype(jnp.float32)
        top = top_ref[0, 7:8] * top_on                 # (1, W, C) row r0-1 (or 0)
        bot = bot_ref[0, 0:1] * bot_on                 # (1, W, C) row r0+TH (or 0)
        xwin = jnp.concatenate([top, x_ref[0], bot], axis=0)   # (TH+2, W, C)

        # column masks for the +/-1 width shift (implicit zero padding on W)
        ridx = lax.broadcasted_iota(jnp.int32, (NR, C), 0)
        colw = ridx % W
        not_first = colw > 0
        not_last = colw < (W - 1)

        acc = jnp.zeros((NR, C), jnp.float32)
        for kh in range(3):
            xr = xwin[kh:kh + TH].reshape(NR, C)       # contiguous row slice
            # kw = 0 : x[., w-1]  (roll down by 1, zero column 0)
            t0 = jnp.where(not_first, pltpu.roll(xr, 1, axis=0), 0.0)
            # kw = 2 : x[., w+1]  (roll up by 1, zero column W-1)
            t2 = jnp.where(not_last, pltpu.roll(xr, NR - 1, axis=0), 0.0)
            for kw, t in ((0, t0), (1, xr), (2, t2)):
                acc = acc + jnp.dot(t.astype(jnp.bfloat16), w_ref[kh * 3 + kw],
                                    preferred_element_type=jnp.float32)
        y = acc * sc_ref[...] + sh_ref[...]
        y = jnp.where(y >= 0.0, y, al_ref[...] * y)
        return y

    if fuse_residual:
        def kernel(x_ref, top_ref, bot_ref, xcat_ref, w_ref, sc_ref, sh_ref,
                   al_ref, fal_ref, o_ref):
            y = conv_bn_prelu(x_ref, top_ref, bot_ref, w_ref, sc_ref, sh_ref, al_ref)
            y = y + xcat_ref[0].reshape(NR, C)
            y = jnp.where(y >= 0.0, y, fal_ref[...] * y)
            o_ref[...] = y.reshape(1, TH, W, C)
        return kernel
    else:
        def kernel(x_ref, top_ref, bot_ref, w_ref, sc_ref, sh_ref, al_ref, o_ref):
            y = conv_bn_prelu(x_ref, top_ref, bot_ref, w_ref, sc_ref, sh_ref, al_ref)
            o_ref[...] = y.reshape(1, TH, W, C)
        return kernel


def _pick_row_tile(Ho):
    """Largest multiple of 8 that divides Ho, <= 64 and <= Ho//2 (when possible)."""
    if Ho % 8 != 0:
        return Ho
    cap = min(64, max(8, (Ho // 2) // 8 * 8)) if Ho >= 16 else Ho
    best = 8
    for th in range(8, cap + 1, 8):
        if Ho % th == 0:
            best = th
    return best


# ----------------------------------------------------------------------------
# One-time parameter preparation: BN folding, weight relayout, bf16 casts.
# (Hoisted off the forward path per the performance review.)
# ----------------------------------------------------------------------------
def fold_params(params):
    up_w = params["up_w"]                      # (Cin, Co2, 2, 2)
    Cin, Co2 = up_w.shape[0], up_w.shape[1]
    g, b, rm, rv = params["up_bn"]
    scale = g / jnp.sqrt(rv + EPS)
    shift = (params["up_b"] - rm) * scale + b
    folded = {
        "up_w": jnp.transpose(up_w, (0, 2, 3, 1)).reshape(Cin, 4 * Co2)
                  .astype(jnp.bfloat16),
        "up_scale4": jnp.tile(scale, 4)[None, :].astype(jnp.float32),
        "up_shift4": jnp.tile(shift, 4)[None, :].astype(jnp.float32),
        "final_alpha": params["final_alpha"][None, :].astype(jnp.float32),
    }
    lus = []
    for (cw, cb, bg, bb, brm, brv, alpha) in params["luconvs"]:
        C = cw.shape[0]
        # PyTorch conv weight (Co, Ci, kh, kw) -> (kh*3+kw, Ci, Co), bf16
        w9 = jnp.transpose(cw, (2, 3, 1, 0)).reshape(9, C, C).astype(jnp.bfloat16)
        sc = bg / jnp.sqrt(brv + EPS)
        sh = (cb - brm) * sc + bb
        lus.append((w9, sc[None, :].astype(jnp.float32),
                    sh[None, :].astype(jnp.float32),
                    alpha[None, :].astype(jnp.float32)))
    folded["luconvs"] = lus
    return folded


# ----------------------------------------------------------------------------
# Forward pass (takes folded params).
# ----------------------------------------------------------------------------
def up_conv_block_forward(x_nchw, skip_nchw, folded):
    x = jnp.transpose(x_nchw, (0, 2, 3, 1)).astype(jnp.float32)      # NHWC
    skip = jnp.transpose(skip_nchw, (0, 2, 3, 1)).astype(jnp.float32)
    N, H, W, Cin = x.shape
    w_up = folded["up_w"]
    Co2 = w_up.shape[1] // 4

    # ---- up path: ConvTranspose2d + BN + ReLU (Dropout2d eval = identity) ----
    M = N * H * W
    TM = M if M <= 1024 else 1024                       # row tile (multiple of 8)
    xf = x.reshape(M, Cin)
    yf = pl.pallas_call(
        _upconv_kernel,
        out_shape=jax.ShapeDtypeStruct((M, 4 * Co2), jnp.float32),
        grid=(pl.cdiv(M, TM),),
        in_specs=[
            pl.BlockSpec((TM, Cin), lambda i: (i, 0)),
            pl.BlockSpec((Cin, 4 * Co2), lambda i: (0, 0)),
            pl.BlockSpec((1, 4 * Co2), lambda i: (0, 0)),
            pl.BlockSpec((1, 4 * Co2), lambda i: (0, 0)),
        ],
        out_specs=pl.BlockSpec((TM, 4 * Co2), lambda i: (i, 0)),
        compiler_params=pltpu.CompilerParams(dimension_semantics=("parallel",)),
        cost_estimate=pl.CostEstimate(
            flops=2 * M * Cin * 4 * Co2, transcendentals=0,
            bytes_accessed=M * Cin * 4 + M * 4 * Co2 * 4 + Cin * 4 * Co2 * 2),
    )(xf, w_up, folded["up_scale4"], folded["up_shift4"])

    # TODO(synk): interleave + channel-concat kept as one XLA pass; writing the
    # interleaved/concatenated layout directly from the up-conv kernel needs
    # offset/strided output stores not used here.
    out1 = (yf.reshape(N, H, W, 2, 2, Co2)
              .transpose(0, 1, 3, 2, 4, 5)
              .reshape(N, 2 * H, 2 * W, Co2))
    x_cat = jnp.concatenate([out1, skip], axis=-1)       # (N, 2H, 2W, ch_out)
    Ho, Wo, C = x_cat.shape[1], x_cat.shape[2], x_cat.shape[3]

    depth = len(folded["luconvs"])
    if depth == 0:
        # Degenerate config (no LUconv layers): plain JAX fallback.
        y = 2.0 * x_cat
        a = folded["final_alpha"].reshape(1, 1, 1, C)
        out = jnp.where(y >= 0.0, y, a * y)
        return jnp.transpose(out, (0, 3, 1, 2))

    TH = _pick_row_tile(Ho)
    nrb = Ho // TH
    rb8 = TH // 8 if TH % 8 == 0 else 1
    nblk8 = (Ho + 7) // 8

    h = x_cat
    for li, (w9, sc, sh, al) in enumerate(folded["luconvs"]):
        is_last = (li == depth - 1)
        kernel = _make_luconv_kernel(TH, Wo, C, fuse_residual=is_last)

        in_arrays = [h, h, h]
        in_specs = [
            pl.BlockSpec((1, TH, Wo, C), lambda n, i: (n, i, 0, 0)),
            pl.BlockSpec((1, 8, Wo, C),
                         lambda n, i: (n, jnp.maximum(i * rb8 - 1, 0), 0, 0)),
            pl.BlockSpec((1, 8, Wo, C),
                         lambda n, i: (n, jnp.minimum((i + 1) * rb8, nblk8 - 1), 0, 0)),
        ]
        if is_last:
            in_arrays.append(x_cat)
            in_specs.append(pl.BlockSpec((1, TH, Wo, C), lambda n, i: (n, i, 0, 0)))
        in_arrays += [w9, sc, sh, al]
        in_specs += [
            pl.BlockSpec((9, C, C), lambda n, i: (0, 0, 0)),
            pl.BlockSpec((1, C), lambda n, i: (0, 0)),
            pl.BlockSpec((1, C), lambda n, i: (0, 0)),
            pl.BlockSpec((1, C), lambda n, i: (0, 0)),
        ]
        if is_last:
            in_arrays.append(folded["final_alpha"])
            in_specs.append(pl.BlockSpec((1, C), lambda n, i: (0, 0)))

        act_bytes = N * Ho * Wo * C * 4
        bytes_acc = (act_bytes * (3 if is_last else 2)
                     + N * nrb * 2 * 8 * Wo * C * 4 + 9 * C * C * 2)
        h = pl.pallas_call(
            kernel,
            out_shape=jax.ShapeDtypeStruct((N, Ho, Wo, C), jnp.float32),
            grid=(N, nrb),
            in_specs=in_specs,
            out_specs=pl.BlockSpec((1, TH, Wo, C), lambda n, i: (n, i, 0, 0)),
            compiler_params=pltpu.CompilerParams(
                dimension_semantics=("parallel", "parallel"),
                vmem_limit_bytes=_LUCONV_VMEM_LIMIT),
            cost_estimate=pl.CostEstimate(
                flops=2 * N * Ho * Wo * 9 * C * C, transcendentals=0,
                bytes_accessed=bytes_acc),
        )(*in_arrays)

    return jnp.transpose(h, (0, 3, 1, 2))                # back to NCHW


# ----------------------------------------------------------------------------
# Deterministic parameter init (shapes follow the PyTorch __init__).
# ----------------------------------------------------------------------------
def init_params(key, ch_in, ch_out, depth):
    co2 = ch_out // 2
    ks = iter(jax.random.split(key, 16 + depth * 8))

    def nrm(shape, s=0.1):
        return s * jax.random.normal(next(ks), shape, jnp.float32)

    params = {
        "up_w": nrm((ch_in, co2, 2, 2)),
        "up_b": nrm((co2,)),
        "up_bn": (1.0 + nrm((co2,)), nrm((co2,)),
                  nrm((co2,)), 1.0 + jnp.abs(nrm((co2,)))),
        "final_alpha": jnp.full((ch_out,), 0.25, jnp.float32),  # PReLU default
    }
    lus = []
    for _ in range(depth):
        lus.append((nrm((ch_out, ch_out, 3, 3)), nrm((ch_out,)),
                    1.0 + nrm((ch_out,)), nrm((ch_out,)),
                    nrm((ch_out,)), 1.0 + jnp.abs(nrm((ch_out,))),
                    jnp.full((ch_out,), 0.25, jnp.float32)))
    params["luconvs"] = lus
    return params


# ----------------------------------------------------------------------------
# Pure-JAX (XLA) reference in NCHW for correctness checking (f32 everywhere).
# ----------------------------------------------------------------------------
def ref_forward(x, skip, params):
    w_t = params["up_w"]                                   # (Cin, Co2, 2, 2)
    w_conv = jnp.flip(jnp.transpose(w_t, (1, 0, 2, 3)), axis=(2, 3))
    o = lax.conv_general_dilated(x, w_conv, (1, 1), ((1, 1), (1, 1)),
                                 lhs_dilation=(2, 2),
                                 dimension_numbers=("NCHW", "OIHW", "NCHW"))
    o = o + params["up_b"][None, :, None, None]
    g, b, rm, rv = params["up_bn"]
    o = (o - rm[None, :, None, None]) / jnp.sqrt(rv[None, :, None, None] + EPS)
    o = o * g[None, :, None, None] + b[None, :, None, None]
    o = jnp.maximum(o, 0.0)
    x_cat = jnp.concatenate([o, skip], axis=1)
    h = x_cat
    for (cw, cb, bg, bb, brm, brv, alpha) in params["luconvs"]:
        h = lax.conv_general_dilated(h, cw, (1, 1), ((1, 1), (1, 1)),
                                     dimension_numbers=("NCHW", "OIHW", "NCHW"))
        h = h + cb[None, :, None, None]
        h = (h - brm[None, :, None, None]) / jnp.sqrt(brv[None, :, None, None] + EPS)
        h = h * bg[None, :, None, None] + bb[None, :, None, None]
        h = jnp.where(h >= 0, h, alpha[None, :, None, None] * h)
    y = h + x_cat
    a = params["final_alpha"][None, :, None, None]
    return jnp.where(y >= 0, y, a * y)


if __name__ == "__main__":
    key = jax.random.PRNGKey(0)
    k_p, k_x, k_s = jax.random.split(key, 3)

    N, ch_in, ch_out, depth = 2, 16, 16, 2
    H = W = 8
    params = init_params(k_p, ch_in, ch_out, depth)
    folded = fold_params(params)                    # one-time prep (hoisted)

    x = jax.random.normal(k_x, (N, ch_in, H, W), jnp.float32)
    skipx = jax.random.normal(k_s, (N, ch_out // 2, 2 * H, 2 * W), jnp.float32)

    forward = jax.jit(up_conv_block_forward)
    out = jax.block_until_ready(forward(x, skipx, folded))
    assert out.shape == (N, ch_out, 2 * H, 2 * W)

    ref = jax.block_until_ready(ref_forward(x, skipx, params))
    # bf16 MXU operands with f32 accumulation -> ~1e-2 relative agreement expected.
    np.testing.assert_allclose(np.asarray(out), np.asarray(ref),
                               rtol=2e-2, atol=2e-2)
    print("KERNEL_OK")
</pallas_src>

<mosaic_0001>
module attributes {stable_mosaic.version = 11 : i64} {
  func.func @_upconv_kernel(%arg0: i32, %arg1: memref<128x16xf32, #tpu.memory_space<vmem>>, %arg2: memref<16x32xbf16, #tpu.memory_space<vmem>>, %arg3: memref<1x32xf32, #tpu.memory_space<vmem>>, %arg4: memref<1x32xf32, #tpu.memory_space<vmem>>, %arg5: memref<128x32xf32, #tpu.memory_space<vmem>>) attributes {dimension_semantics = [#tpu.dimension_semantics<parallel>], iteration_bounds = array<i64: 1>, scalar_prefetch = 0 : i64, scratch_operands = 0 : i64, tpu.core_type = #tpu.core_type<tc>, window_params = [{transform_indices = @transform_0, window_bounds = array<i64: 128, 16>}, {pipeline_mode = #tpu.pipeline_mode<synchronous>, transform_indices = @transform_1, window_bounds = array<i64: 16, 32>}, {pipeline_mode = #tpu.pipeline_mode<synchronous>, transform_indices = @transform_2, window_bounds = array<i64: 1, 32>}, {pipeline_mode = #tpu.pipeline_mode<synchronous>, transform_indices = @transform_3, window_bounds = array<i64: 1, 32>}, {transform_indices = @transform_4, window_bounds = array<i64: 128, 32>}]} {
    %c0 = arith.constant 0 : index
    %c0_0 = arith.constant 0 : index
    %0 = vector.load %arg1[%c0, %c0_0] : memref<128x16xf32, #tpu.memory_space<vmem>>, vector<128x16xf32>
    %1 = arith.truncf %0 : vector<128x16xf32> to vector<128x16xbf16>
    %c0_1 = arith.constant 0 : index
    %c0_2 = arith.constant 0 : index
    %2 = vector.load %arg2[%c0_1, %c0_2] : memref<16x32xbf16, #tpu.memory_space<vmem>>, vector<16x32xbf16>
    %cst = arith.constant dense<0.000000e+00> : vector<128x32xf32>
    %3 = tpu.matmul %1, %2, %cst {dimension_numbers = #tpu.dot_dimension_numbers<[1], [0], [0], [1], [0, 0, 1, 1], [], []>} : vector<128x16xbf16>, vector<16x32xbf16>, vector<128x32xf32> -> vector<128x32xf32>
    %c0_3 = arith.constant 0 : index
    %c0_4 = arith.constant 0 : index
    %4 = vector.load %arg3[%c0_3, %c0_4] : memref<1x32xf32, #tpu.memory_space<vmem>>, vector<1x32xf32>
    %5 = vector.broadcast %4 : vector<1x32xf32> to vector<128x32xf32>
    %6 = arith.mulf %3, %5 : vector<128x32xf32>
    %c0_5 = arith.constant 0 : index
    %c0_6 = arith.constant 0 : index
    %7 = vector.load %arg4[%c0_5, %c0_6] : memref<1x32xf32, #tpu.memory_space<vmem>>, vector<1x32xf32>
    %8 = vector.broadcast %7 : vector<1x32xf32> to vector<128x32xf32>
    %9 = arith.addf %6, %8 : vector<128x32xf32>
    %cst_7 = arith.constant 0.000000e+00 : f32
    %10 = vector.broadcast %cst_7 : f32 to vector<128x32xf32>
    %11 = arith.maximumf %9, %10 : vector<128x32xf32>
    %c0_8 = arith.constant 0 : index
    %c0_9 = arith.constant 0 : index
    %12 = vector.load %arg5[%c0_8, %c0_9] : memref<128x32xf32, #tpu.memory_space<vmem>>, vector<128x32xf32>
    tpu.vector_store %arg5[%c0_8, %c0_9], %11 {strides = array<i32>} : memref<128x32xf32, #tpu.memory_space<vmem>>, vector<128x32xf32>,
    return
  }
  func.func @transform_0(%arg0: i32) -> (i32, i32) {
    %c0_i32 = arith.constant 0 : i32
    %c0_i32_0 = arith.constant 0 : i32
    return %arg0, %c0_i32 : i32, i32
  }
  func.func @transform_1(%arg0: i32) -> (i32, i32) {
    %c0_i32 = arith.constant 0 : i32
    %c0_i32_0 = arith.constant 0 : i32
    %c0_i32_1 = arith.constant 0 : i32
    return %c0_i32, %c0_i32_0 : i32, i32
  }
  func.func @transform_2(%arg0: i32) -> (i32, i32) {
    %c0_i32 = arith.constant 0 : i32
    %c0_i32_0 = arith.constant 0 : i32
    %c0_i32_1 = arith.constant 0 : i32
    return %c0_i32, %c0_i32_0 : i32, i32
  }
  func.func @transform_3(%arg0: i32) -> (i32, i32) {
    %c0_i32 = arith.constant 0 : i32
    %c0_i32_0 = arith.constant 0 : i32
    %c0_i32_1 = arith.constant 0 : i32
    return %c0_i32, %c0_i32_0 : i32, i32
  }
  func.func @transform_4(%arg0: i32) -> (i32, i32) {
    %c0_i32 = arith.constant 0 : i32
    %c0_i32_0 = arith.constant 0 : i32
    return %arg0, %c0_i32 : i32, i32
  }
}

module attributes {stable_mosaic.version = 11 : i64} {
  func.func @kernel(%arg0: i32, %arg1: i32, %arg2: memref<1x8x16x16xf32, #tpu.memory_space<vmem>>, %arg3: memref<1x8x16x16xf32, #tpu.memory_space<vmem>>, %arg4: memref<1x8x16x16xf32, #tpu.memory_space<vmem>>, %arg5: memref<1x8x16x16xf32, #tpu.memory_space<vmem>>, %arg6: memref<9x16x16xbf16, #tpu.memory_space<vmem>>, %arg7: memref<1x16xf32, #tpu.memory_space<vmem>>, %arg8: memref<1x16xf32, #tpu.memory_space<vmem>>, %arg9: memref<1x16xf32, #tpu.memory_space<vmem>>, %arg10: memref<1x16xf32, #tpu.memory_space<vmem>>, %arg11: memref<1x8x16x16xf32, #tpu.memory_space<vmem>>) attributes {dimension_semantics = [#tpu.dimension_semantics<parallel>, #tpu.dimension_semantics<parallel>], iteration_bounds = array<i64: 2, 2>, scalar_prefetch = 0 : i64, scratch_operands = 0 : i64, tpu.core_type = #tpu.core_type<tc>, window_params = [{transform_indices = @transform_0, window_bounds = array<i64: 1, 8, 16, 16>}, {transform_indices = @transform_1, window_bounds = array<i64: 1, 8, 16, 16>}, {transform_indices = @transform_2, window_bounds = array<i64: 1, 8, 16, 16>}, {transform_indices = @transform_3, window_bounds = array<i64: 1, 8, 16, 16>}, {pipeline_mode = #tpu.pipeline_mode<synchronous>, transform_indices = @transform_4, window_bounds = array<i64: 9, 16, 16>}, {pipeline_mode = #tpu.pipeline_mode<synchronous>, transform_indices = @transform_5, window_bounds = array<i64: 1, 16>}, {pipeline_mode = #tpu.pipeline_mode<synchronous>, transform_indices = @transform_6, window_bounds = array<i64: 1, 16>}, {pipeline_mode = #tpu.pipeline_mode<synchronous>, transform_indices = @transform_7, window_bounds = array<i64: 1, 16>}, {pipeline_mode = #tpu.pipeline_mode<synchronous>, transform_indices = @transform_8, window_bounds = array<i64: 1, 16>}, {transform_indices = @transform_9, window_bounds = array<i64: 1, 8, 16, 16>}]} {
    %c0_i32 = arith.constant 0 : i32
    %0 = arith.cmpi sgt, %arg1, %c0_i32 : i32
    %cst = arith.constant 1.000000e+00 : f32
    %cst_0 = arith.constant 0.000000e+00 : f32
    %1 = arith.select %0, %cst, %cst_0 : f32
    %c1_i32 = arith.constant 1 : i32
    %2 = arith.cmpi slt, %arg1, %c1_i32 : i32
    %cst_1 = arith.constant 1.000000e+00 : f32
    %cst_2 = arith.constant 0.000000e+00 : f32
    %3 = arith.select %2, %cst_1, %cst_2 : f32
    %c0 = arith.constant 0 : index
    %c7 = arith.constant 7 : index
    %c0_3 = arith.constant 0 : index
    %c0_4 = arith.constant 0 : index
    %4 = vector.load %arg3[%c0, %c7, %c0_3, %c0_4] : memref<1x8x16x16xf32, #tpu.memory_space<vmem>>, vector<1x1x16x16xf32>
    %5 = vector.shape_cast %4 : vector<1x1x16x16xf32> to vector<1x16x16xf32>
    %6 = vector.broadcast %1 : f32 to vector<1x16x16xf32>
    %7 = arith.mulf %5, %6 : vector<1x16x16xf32>
    %c0_5 = arith.constant 0 : index
    %c0_6 = arith.constant 0 : index
    %c0_7 = arith.constant 0 : index
    %c0_8 = arith.constant 0 : index
    %8 = vector.load %arg4[%c0_5, %c0_6, %c0_7, %c0_8] : memref<1x8x16x16xf32, #tpu.memory_space<vmem>>, vector<1x1x16x16xf32>
    %9 = vector.shape_cast %8 : vector<1x1x16x16xf32> to vector<1x16x16xf32>
    %10 = vector.broadcast %3 : f32 to vector<1x16x16xf32>
    %11 = arith.mulf %9, %10 : vector<1x16x16xf32>
    %c0_9 = arith.constant 0 : index
    %c0_10 = arith.constant 0 : index
    %c0_11 = arith.constant 0 : index
    %c0_12 = arith.constant 0 : index
    %12 = vector.load %arg2[%c0_9, %c0_10, %c0_11, %c0_12] : memref<1x8x16x16xf32, #tpu.memory_space<vmem>>, vector<1x8x16x16xf32>
    %13 = vector.shape_cast %12 : vector<1x8x16x16xf32> to vector<8x16x16xf32>
    %14 = tpu.concatenate %7, %13, %11 in 0 : vector<1x16x16xf32>, vector<8x16x16xf32>, vector<1x16x16xf32> -> vector<10x16x16xf32>
    %15 = tpu.iota {dimensions = array<i32: 0>} : vector<128x16xi32>
    %c16_i32 = arith.constant 16 : i32
    %c0_i32_13 = arith.constant 0 : i32
    %16 = arith.cmpi eq, %c16_i32, %c0_i32_13 : i32
    %c1_i32_14 = arith.constant 1 : i32
    %17 = arith.select %16, %c1_i32_14, %c16_i32 : i32
    %18 = vector.broadcast %17 : i32 to vector<128x16xi32>
    %19 = arith.remsi %15, %18 : vector<128x16xi32>
    %c0_i32_15 = arith.constant 0 : i32
    %20 = vector.broadcast %c0_i32_15 : i32 to vector<128x16xi32>
    %21 = arith.cmpi ne, %19, %20 : vector<128x16xi32>
    %c0_i32_16 = arith.constant 0 : i32
    %22 = vector.broadcast %c0_i32_16 : i32 to vector<128x16xi32>
    %23 = arith.cmpi slt, %19, %22 : vector<128x16xi32>
    %c0_i32_17 = arith.constant 0 : i32
    %24 = arith.cmpi slt, %17, %c0_i32_17 : i32
    %25 = vector.broadcast %24 : i1 to vector<128x16xi1>
    %26 = vector.broadcast %25 : vector<128x16xi1> to vector<128x16xi1>
    %27 = arith.xori %23, %26 : vector<128x16xi1>
    %28 = arith.andi %27, %21 : vector<128x16xi1>
    %29 = vector.broadcast %17 : i32 to vector<128x16xi32>
    %30 = arith.addi %19, %29 : vector<128x16xi32>
    %31 = arith.select %28, %30, %19 : vector<128x16xi1>, vector<128x16xi32>
    %c0_i32_18 = arith.constant 0 : i32
    %32 = vector.broadcast %c0_i32_18 : i32 to vector<128x16xi32>
    %33 = arith.cmpi sgt, %31, %32 : vector<128x16xi32>
    %c15_i32 = arith.constant 15 : i32
    %34 = vector.broadcast %c15_i32 : i32 to vector<128x16xi32>
    %35 = arith.cmpi slt, %31, %34 : vector<128x16xi32>
    %cst_19 = arith.constant 0.000000e+00 : f32
    %36 = vector.broadcast %cst_19 : f32 to vector<128x16xf32>
    %37 = vector.extract_strided_slice %14 {offsets = [0, 0, 0], sizes = [8, 16, 16], strides = [1, 1, 1]} : vector<10x16x16xf32> to vector<8x16x16xf32>
    %38 = vector.shape_cast %37 : vector<8x16x16xf32> to vector<128x16xf32>
    %c1_i32_20 = arith.constant 1 : i32
    %39 = tpu.dynamic_rotate %38 by %c1_i32_20 dim 0 : vector<128x16xf32>, i32 -> vector<128x16xf32>
    %cst_21 = arith.constant 0.000000e+00 : f32
    %40 = vector.broadcast %cst_21 : f32 to vector<128x16xf32>
    %41 = arith.select %33, %39, %40 : vector<128x16xi1>, vector<128x16xf32>
    %c127_i32 = arith.constant 127 : i32
    %42 = tpu.dynamic_rotate %38 by %c127_i32 dim 0 : vector<128x16xf32>, i32 -> vector<128x16xf32>
    %cst_22 = arith.constant 0.000000e+00 : f32
    %43 = vector.broadcast %cst_22 : f32 to vector<128x16xf32>
    %44 = arith.select %35, %42, %43 : vector<128x16xi1>, vector<128x16xf32>
    %45 = arith.truncf %41 : vector<128x16xf32> to vector<128x16xbf16>
    %c0_23 = arith.constant 0 : index
    %c0_24 = arith.constant 0 : index
    %c0_25 = arith.constant 0 : index
    %46 = vector.load %arg6[%c0_23, %c0_24, %c0_25] : memref<9x16x16xbf16, #tpu.memory_space<vmem>>, vector<1x16x16xbf16>
    %47 = vector.shape_cast %46 : vector<1x16x16xbf16> to vector<16x16xbf16>
    %cst_26 = arith.constant dense<0.000000e+00> : vector<128x16xf32>
    %48 = tpu.matmul %45, %47, %cst_26 {dimension_numbers = #tpu.dot_dimension_numbers<[1], [0], [0], [1], [0, 0, 1, 1], [], []>} : vector<128x16xbf16>, vector<16x16xbf16>, vector<128x16xf32> -> vector<128x16xf32>
    %49 = arith.addf %36, %48 : vector<128x16xf32>
    %50 = arith.truncf %38 : vector<128x16xf32> to vector<128x16xbf16>
    %c1 = arith.constant 1 : index
    %c0_27 = arith.constant 0 : index
    %c0_28 = arith.constant 0 : index
    %51 = vector.load %arg6[%c1, %c0_27, %c0_28] : memref<9x16x16xbf16, #tpu.memory_space<vmem>>, vector<1x16x16xbf16>
    %52 = vector.shape_cast %51 : vector<1x16x16xbf16> to vector<16x16xbf16>
    %cst_29 = arith.constant dense<0.000000e+00> : vector<128x16xf32>
    %53 = tpu.matmul %50, %52, %cst_29 {dimension_numbers = #tpu.dot_dimension_numbers<[1], [0], [0], [1], [0, 0, 1, 1], [], []>} : vector<128x16xbf16>, vector<16x16xbf16>, vector<128x16xf32> -> vector<128x16xf32>
    %54 = arith.addf %49, %53 : vector<128x16xf32>
    %55 = arith.truncf %44 : vector<128x16xf32> to vector<128x16xbf16>
    %c2 = arith.constant 2 : index
    %c0_30 = arith.constant 0 : index
    %c0_31 = arith.constant 0 : index
    %56 = vector.load %arg6[%c2, %c0_30, %c0_31] : memref<9x16x16xbf16, #tpu.memory_space<vmem>>, vector<1x16x16xbf16>
    %57 = vector.shape_cast %56 : vector<1x16x16xbf16> to vector<16x16xbf16>
    %cst_32 = arith.constant dense<0.000000e+00> : vector<128x16xf32>
    %58 = tpu.matmul %55, %57, %cst_32 {dimension_numbers = #tpu.dot_dimension_numbers<[1], [0], [0], [1], [0, 0, 1, 1], [], []>} : vector<128x16xbf16>, vector<16x16xbf16>, vector<128x16xf32> -> vector<128x16xf32>
    %59 = arith.addf %54, %58 : vector<128x16xf32>
    %60 = vector.extract_strided_slice %14 {offsets = [1, 0, 0], sizes = [8, 16, 16], strides = [1, 1, 1]} : vector<10x16x16xf32> to vector<8x16x16xf32>
    %61 = vector.shape_cast %60 : vector<8x16x16xf32> to vector<128x16xf32>
    %c1_i32_33 = arith.constant 1 : i32
    %62 = tpu.dynamic_rotate %61 by %c1_i32_33 dim 0 : vector<128x16xf32>, i32 -> vector<128x16xf32>
    %cst_34 = arith.constant 0.000000e+00 : f32
    %63 = vector.broadcast %cst_34 : f32 to vector<128x16xf32>
    %64 = arith.select %33, %62, %63 : vector<128x16xi1>, vector<128x16xf32>
    %c127_i32_35 = arith.constant 127 : i32
    %65 = tpu.dynamic_rotate %61 by %c127_i32_35 dim 0 : vector<128x16xf32>, i32 -> vector<128x16xf32>
    %cst_36 = arith.constant 0.000000e+00 : f32
    %66 = vector.broadcast %cst_36 : f32 to vector<128x16xf32>
    %67 = arith.select %35, %65, %66 : vector<128x16xi1>, vector<128x16xf32>
    %68 = arith.truncf %64 : vector<128x16xf32> to vector<128x16xbf16>
    %c3 = arith.constant 3 : index
    %c0_37 = arith.constant 0 : index
    %c0_38 = arith.constant 0 : index
    %69 = vector.load %arg6[%c3, %c0_37, %c0_38] : memref<9x16x16xbf16, #tpu.memory_space<vmem>>, vector<1x16x16xbf16>
    %70 = vector.shape_cast %69 : vector<1x16x16xbf16> to vector<16x16xbf16>
    %cst_39 = arith.constant dense<0.000000e+00> : vector<128x16xf32>
    %71 = tpu.matmul %68, %70, %cst_39 {dimension_numbers = #tpu.dot_dimension_numbers<[1], [0], [0], [1], [0, 0, 1, 1], [], []>} : vector<128x16xbf16>, vector<16x16xbf16>, vector<128x16xf32> -> vector<128x16xf32>
    %72 = arith.addf %59, %71 : vector<128x16xf32>
    %73 = arith.truncf %61 : vector<128x16xf32> to vector<128x16xbf16>
    %c4 = arith.constant 4 : index
    %c0_40 = arith.constant 0 : index
    %c0_41 = arith.constant 0 : index
    %74 = vector.load %arg6[%c4, %c0_40, %c0_41] : memref<9x16x16xbf16, #tpu.memory_space<vmem>>, vector<1x16x16xbf16>
    %75 = vector.shape_cast %74 : vector<1x16x16xbf16> to vector<16x16xbf16>
    %cst_42 = arith.constant dense<0.000000e+00> : vector<128x16xf32>
    %76 = tpu.matmul %73, %75, %cst_42 {dimension_numbers = #tpu.dot_dimension_numbers<[1], [0], [0], [1], [0, 0, 1, 1], [], []>} : vector<128x16xbf16>, vector<16x16xbf16>, vector<128x16xf32> -> vector<128x16xf32>
    %77 = arith.addf %72, %76 : vector<128x16xf32>
    %78 = arith.truncf %67 : vector<128x16xf32> to vector<128x16xbf16>
    %c5 = arith.constant 5 : index
    %c0_43 = arith.constant 0 : index
    %c0_44 = arith.constant 0 : index
    %79 = vector.load %arg6[%c5, %c0_43, %c0_44] : memref<9x16x16xbf16, #tpu.memory_space<vmem>>, vector<1x16x16xbf16>
    %80 = vector.shape_cast %79 : vector<1x16x16xbf16> to vector<16x16xbf16>
    %cst_45 = arith.constant dense<0.000000e+00> : vector<128x16xf32>
    %81 = tpu.matmul %78, %80, %cst_45 {dimension_numbers = #tpu.dot_dimension_numbers<[1], [0], [0], [1], [0, 0, 1, 1], [], []>} : vector<128x16xbf16>, vector<16x16xbf16>, vector<128x16xf32> -> vector<128x16xf32>
    %82 = arith.addf %77, %81 : vector<128x16xf32>
    %83 = vector.extract_strided_slice %14 {offsets = [2, 0, 0], sizes = [8, 16, 16], strides = [1, 1, 1]} : vector<10x16x16xf32> to vector<8x16x16xf32>
    %84 = vector.shape_cast %83 : vector<8x16x16xf32> to vector<128x16xf32>
    %c1_i32_46 = arith.constant 1 : i32
    %85 = tpu.dynamic_rotate %84 by %c1_i32_46 dim 0 : vector<128x16xf32>, i32 -> vector<128x16xf32>
    %cst_47 = arith.constant 0.000000e+00 : f32
    %86 = vector.broadcast %cst_47 : f32 to vector<128x16xf32>
    %87 = arith.select %33, %85, %86 : vector<128x16xi1>, vector<128x16xf32>
    %c127_i32_48 = arith.constant 127 : i32
    %88 = tpu.dynamic_rotate %84 by %c127_i32_48 dim 0 : vector<128x16xf32>, i32 -> vector<128x16xf32>
    %cst_49 = arith.constant 0.000000e+00 : f32
    %89 = vector.broadcast %cst_49 : f32 to vector<128x16xf32>
    %90 = arith.select %35, %88, %89 : vector<128x16xi1>, vector<128x16xf32>
    %91 = arith.truncf %87 : vector<128x16xf32> to vector<128x16xbf16>
    %c6 = arith.constant 6 : index
    %c0_50 = arith.constant 0 : index
    %c0_51 = arith.constant 0 : index
    %92 = vector.load %arg6[%c6, %c0_50, %c0_51] : memref<9x16x16xbf16, #tpu.memory_space<vmem>>, vector<1x16x16xbf16>
    %93 = vector.shape_cast %92 : vector<1x16x16xbf16> to vector<16x16xbf16>
    %cst_52 = arith.constant dense<0.000000e+00> : vector<128x16xf32>
    %94 = tpu.matmul %91, %93, %cst_52 {dimension_numbers = #tpu.dot_dimension_numbers<[1], [0], [0], [1], [0, 0, 1, 1], [], []>} : vector<128x16xbf16>, vector<16x16xbf16>, vector<128x16xf32> -> vector<128x16xf32>
    %95 = arith.addf %82, %94 : vector<128x16xf32>
    %96 = arith.truncf %84 : vector<128x16xf32> to vector<128x16xbf16>
    %c7_53 = arith.constant 7 : index
    %c0_54 = arith.constant 0 : index
    %c0_55 = arith.constant 0 : index
    %97 = vector.load %arg6[%c7_53, %c0_54, %c0_55] : memref<9x16x16xbf16, #tpu.memory_space<vmem>>, vector<1x16x16xbf16>
    %98 = vector.shape_cast %97 : vector<1x16x16xbf16> to vector<16x16xbf16>
    %cst_56 = arith.constant dense<0.000000e+00> : vector<128x16xf32>
    %99 = tpu.matmul %96, %98, %cst_56 {dimension_numbers = #tpu.dot_dimension_numbers<[1], [0], [0], [1], [0, 0, 1, 1], [], []>} : vector<128x16xbf16>, vector<16x16xbf16>, vector<128x16xf32> -> vector<128x16xf32>
    %100 = arith.addf %95, %99 : vector<128x16xf32>
    %101 = arith.truncf %90 : vector<128x16xf32> to vector<128x16xbf16>
    %c8 = arith.constant 8 : index
    %c0_57 = arith.constant 0 : index
    %c0_58 = arith.constant 0 : index
    %102 = vector.load %arg6[%c8, %c0_57, %c0_58] : memref<9x16x16xbf16, #tpu.memory_space<vmem>>, vector<1x16x16xbf16>
    %103 = vector.shape_cast %102 : vector<1x16x16xbf16> to vector<16x16xbf16>
    %cst_59 = arith.constant dense<0.000000e+00> : vector<128x16xf32>
    %104 = tpu.matmul %101, %103, %cst_59 {dimension_numbers = #tpu.dot_dimension_numbers<[1], [0], [0], [1], [0, 0, 1, 1], [], []>} : vector<128x16xbf16>, vector<16x16xbf16>, vector<128x16xf32> -> vector<128x16xf32>
    %105 = arith.addf %100, %104 : vector<128x16xf32>
    %c0_60 = arith.constant 0 : index
    %c0_61 = arith.constant 0 : index
    %106 = vector.load %arg7[%c0_60, %c0_61] : memref<1x16xf32, #tpu.memory_space<vmem>>, vector<1x16xf32>
    %107 = vector.broadcast %106 : vector<1x16xf32> to vector<128x16xf32>
    %108 = arith.mulf %105, %107 : vector<128x16xf32>
    %c0_62 = arith.constant 0 : index
    %c0_63 = arith.constant 0 : index
    %109 = vector.load %arg8[%c0_62, %c0_63] : memref<1x16xf32, #tpu.memory_space<vmem>>, vector<1x16xf32>
    %110 = vector.broadcast %109 : vector<1x16xf32> to vector<128x16xf32>
    %111 = arith.addf %108, %110 : vector<128x16xf32>
    %cst_64 = arith.constant 0.000000e+00 : f32
    %112 = vector.broadcast %cst_64 : f32 to vector<128x16xf32>
    %113 = arith.cmpf oge, %111, %112 : vector<128x16xf32>
    %c0_65 = arith.constant 0 : index
    %c0_66 = arith.constant 0 : index
    %114 = vector.load %arg9[%c0_65, %c0_66] : memref<1x16xf32, #tpu.memory_space<vmem>>, vector<1x16xf32>
    %115 = vector.broadcast %114 : vector<1x16xf32> to vector<128x16xf32>
    %116 = arith.mulf %115, %111 : vector<128x16xf32>
    %117 = arith.select %113, %111, %116 : vector<128x16xi1>, vector<128x16xf32>
    %c0_67 = arith.constant 0 : index
    %c0_68 = arith.constant 0 : index
    %c0_69 = arith.constant 0 : index
    %c0_70 = arith.constant 0 : index
    %118 = vector.load %arg5[%c0_67, %c0_68, %c0_69, %c0_70] : memref<1x8x16x16xf32, #tpu.memory_space<vmem>>, vector<1x8x16x16xf32>
    %119 = vector.shape_cast %118 : vector<1x8x16x16xf32> to vector<8x16x16xf32>
    %120 = vector.shape_cast %119 : vector<8x16x16xf32> to vector<128x16xf32>
    %121 = arith.addf %117, %120 : vector<128x16xf32>
    %cst_71 = arith.constant 0.000000e+00 : f32
    %122 = vector.broadcast %cst_71 : f32 to vector<128x16xf32>
    %123 = arith.cmpf oge, %121, %122 : vector<128x16xf32>
    %c0_72 = arith.constant 0 : index
    %c0_73 = arith.constant 0 : index
    %124 = vector.load %arg10[%c0_72, %c0_73] : memref<1x16xf32, #tpu.memory_space<vmem>>, vector<1x16xf32>
    %125 = vector.broadcast %124 : vector<1x16xf32> to vector<128x16xf32>
    %126 = arith.mulf %125, %121 : vector<128x16xf32>
    %127 = arith.select %123, %121, %126 : vector<128x16xi1>, vector<128x16xf32>
    %128 = vector.shape_cast %127 : vector<128x16xf32> to vector<1x8x16x16xf32>
    %c0_74 = arith.constant 0 : index
    %c0_75 = arith.constant 0 : index
    %c0_76 = arith.constant 0 : index
    %c0_77 = arith.constant 0 : index
    %129 = vector.load %arg11[%c0_74, %c0_75, %c0_76, %c0_77] : memref<1x8x16x16xf32, #tpu.memory_space<vmem>>, vector<1x8x16x16xf32>
    tpu.vector_store %arg11[%c0_74, %c0_75, %c0_76, %c0_77], %128 {strides = array<i32>} : memref<1x8x16x16xf32, #tpu.memory_space<vmem>>, vector<1x8x16x16xf32>,
    return
  }
  func.func @transform_0(%arg0: i32, %arg1: i32) -> (i32, i32, i32, i32) {
    %c0_i32 = arith.constant 0 : i32
    %c0_i32_0 = arith.constant 0 : i32
    %c0_i32_1 = arith.constant 0 : i32
    return %arg0, %arg1, %c0_i32, %c0_i32_0 : i32, i32, i32, i32
  }
  func.func @transform_1(%arg0: i32, %arg1: i32) -> (i32, i32, i32, i32) {
    %c1_i32 = arith.constant 1 : i32
    %0 = arith.muli %arg1, %c1_i32 : i32
    %c1_i32_0 = arith.constant 1 : i32
    %1 = arith.subi %0, %c1_i32_0 : i32
    %c0_i32 = arith.constant 0 : i32
    %2 = arith.maxsi %1, %c0_i32 : i32
    %c0_i32_1 = arith.constant 0 : i32
    %c0_i32_2 = arith.constant 0 : i32
    %c0_i32_3 = arith.constant 0 : i32
    return %arg0, %2, %c0_i32_1, %c0_i32_2 : i32, i32, i32, i32
  }
  func.func @transform_2(%arg0: i32, %arg1: i32) -> (i32, i32, i32, i32) {
    %c1_i32 = arith.constant 1 : i32
    %0 = arith.addi %arg1, %c1_i32 : i32
    %c1_i32_0 = arith.constant 1 : i32
    %1 = arith.muli %0, %c1_i32_0 : i32
    %c1_i32_1 = arith.constant 1 : i32
    %2 = arith.minsi %1, %c1_i32_1 : i32
    %c0_i32 = arith.constant 0 : i32
    %c0_i32_2 = arith.constant 0 : i32
    %c0_i32_3 = arith.constant 0 : i32
    return %arg0, %2, %c0_i32, %c0_i32_2 : i32, i32, i32, i32
  }
  func.func @transform_3(%arg0: i32, %arg1: i32) -> (i32, i32, i32, i32) {
    %c0_i32 = arith.constant 0 : i32
    %c0_i32_0 = arith.constant 0 : i32
    %c0_i32_1 = arith.constant 0 : i32
    return %arg0, %arg1, %c0_i32, %c0_i32_0 : i32, i32, i32, i32
  }
  func.func @transform_4(%arg0: i32, %arg1: i32) -> (i32, i32, i32) {
    %c0_i32 = arith.constant 0 : i32
    %c0_i32_0 = arith.constant 0 : i32
    %c0_i32_1 = arith.constant 0 : i32
    %c0_i32_2 = arith.constant 0 : i32
    return %c0_i32, %c0_i32_0, %c0_i32_1 : i32, i32, i32
  }
  func.func @transform_5(%arg0: i32, %arg1: i32) -> (i32, i32) {
    %c0_i32 = arith.constant 0 : i32
    %c0_i32_0 = arith.constant 0 : i32
    %c0_i32_1 = arith.constant 0 : i32
    return %c0_i32, %c0_i32_0 : i32, i32
  }
  func.func @transform_6(%arg0: i32, %arg1: i32) -> (i32, i32) {
    %c0_i32 = arith.constant 0 : i32
    %c0_i32_0 = arith.constant 0 : i32
    %c0_i32_1 = arith.constant 0 : i32
    return %c0_i32, %c0_i32_0 : i32, i32
  }
  func.func @transform_7(%arg0: i32, %arg1: i32) -> (i32, i32) {
    %c0_i32 = arith.constant 0 : i32
    %c0_i32_0 = arith.constant 0 : i32
    %c0_i32_1 = arith.constant 0 : i32
    return %c0_i32, %c0_i32_0 : i32, i32
  }
  func.func @transform_8(%arg0: i32, %arg1: i32) -> (i32, i32) {
    %c0_i32 = arith.constant 0 : i32
    %c0_i32_0 = arith.constant 0 : i32
    %c0_i32_1 = arith.constant 0 : i32
    return %c0_i32, %c0_i32_0 : i32, i32
  }
  func.func @transform_9(%arg0: i32, %arg1: i32) -> (i32, i32, i32, i32) {
    %c0_i32 = arith.constant 0 : i32
    %c0_i32_0 = arith.constant 0 : i32
    %c0_i32_1 = arith.constant 0 : i32
    return %arg0, %arg1, %c0_i32, %c0_i32_0 : i32, i32, i32, i32
  }
}

module attributes {stable_mosaic.version = 11 : i64} {
  func.func @kernel(%arg0: i32, %arg1: i32, %arg2: memref<1x8x16x16xf32, #tpu.memory_space<vmem>>, %arg3: memref<1x8x16x16xf32, #tpu.memory_space<vmem>>, %arg4: memref<1x8x16x16xf32, #tpu.memory_space<vmem>>, %arg5: memref<9x16x16xbf16, #tpu.memory_space<vmem>>, %arg6: memref<1x16xf32, #tpu.memory_space<vmem>>, %arg7: memref<1x16xf32, #tpu.memory_space<vmem>>, %arg8: memref<1x16xf32, #tpu.memory_space<vmem>>, %arg9: memref<1x8x16x16xf32, #tpu.memory_space<vmem>>) attributes {dimension_semantics = [#tpu.dimension_semantics<parallel>, #tpu.dimension_semantics<parallel>], iteration_bounds = array<i64: 2, 2>, scalar_prefetch = 0 : i64, scratch_operands = 0 : i64, tpu.core_type = #tpu.core_type<tc>, window_params = [{transform_indices = @transform_0, window_bounds = array<i64: 1, 8, 16, 16>}, {transform_indices = @transform_1, window_bounds = array<i64: 1, 8, 16, 16>}, {transform_indices = @transform_2, window_bounds = array<i64: 1, 8, 16, 16>}, {pipeline_mode = #tpu.pipeline_mode<synchronous>, transform_indices = @transform_3, window_bounds = array<i64: 9, 16, 16>}, {pipeline_mode = #tpu.pipeline_mode<synchronous>, transform_indices = @transform_4, window_bounds = array<i64: 1, 16>}, {pipeline_mode = #tpu.pipeline_mode<synchronous>, transform_indices = @transform_5, window_bounds = array<i64: 1, 16>}, {pipeline_mode = #tpu.pipeline_mode<synchronous>, transform_indices = @transform_6, window_bounds = array<i64: 1, 16>}, {transform_indices = @transform_7, window_bounds = array<i64: 1, 8, 16, 16>}]} {
    %c0_i32 = arith.constant 0 : i32
    %0 = arith.cmpi sgt, %arg1, %c0_i32 : i32
    %cst = arith.constant 1.000000e+00 : f32
    %cst_0 = arith.constant 0.000000e+00 : f32
    %1 = arith.select %0, %cst, %cst_0 : f32
    %c1_i32 = arith.constant 1 : i32
    %2 = arith.cmpi slt, %arg1, %c1_i32 : i32
    %cst_1 = arith.constant 1.000000e+00 : f32
    %cst_2 = arith.constant 0.000000e+00 : f32
    %3 = arith.select %2, %cst_1, %cst_2 : f32
    %c0 = arith.constant 0 : index
    %c7 = arith.constant 7 : index
    %c0_3 = arith.constant 0 : index
    %c0_4 = arith.constant 0 : index
    %4 = vector.load %arg3[%c0, %c7, %c0_3, %c0_4] : memref<1x8x16x16xf32, #tpu.memory_space<vmem>>, vector<1x1x16x16xf32>
    %5 = vector.shape_cast %4 : vector<1x1x16x16xf32> to vector<1x16x16xf32>
    %6 = vector.broadcast %1 : f32 to vector<1x16x16xf32>
    %7 = arith.mulf %5, %6 : vector<1x16x16xf32>
    %c0_5 = arith.constant 0 : index
    %c0_6 = arith.constant 0 : index
    %c0_7 = arith.constant 0 : index
    %c0_8 = arith.constant 0 : index
    %8 = vector.load %arg4[%c0_5, %c0_6, %c0_7, %c0_8] : memref<1x8x16x16xf32, #tpu.memory_space<vmem>>, vector<1x1x16x16xf32>
    %9 = vector.shape_cast %8 : vector<1x1x16x16xf32> to vector<1x16x16xf32>
    %10 = vector.broadcast %3 : f32 to vector<1x16x16xf32>
    %11 = arith.mulf %9, %10 : vector<1x16x16xf32>
    %c0_9 = arith.constant 0 : index
    %c0_10 = arith.constant 0 : index
    %c0_11 = arith.constant 0 : index
    %c0_12 = arith.constant 0 : index
    %12 = vector.load %arg2[%c0_9, %c0_10, %c0_11, %c0_12] : memref<1x8x16x16xf32, #tpu.memory_space<vmem>>, vector<1x8x16x16xf32>
    %13 = vector.shape_cast %12 : vector<1x8x16x16xf32> to vector<8x16x16xf32>
    %14 = tpu.concatenate %7, %13, %11 in 0 : vector<1x16x16xf32>, vector<8x16x16xf32>, vector<1x16x16xf32> -> vector<10x16x16xf32>
    %15 = tpu.iota {dimensions = array<i32: 0>} : vector<128x16xi32>
    %c16_i32 = arith.constant 16 : i32
    %c0_i32_13 = arith.constant 0 : i32
    %16 = arith.cmpi eq, %c16_i32, %c0_i32_13 : i32
    %c1_i32_14 = arith.constant 1 : i32
    %17 = arith.select %16, %c1_i32_14, %c16_i32 : i32
    %18 = vector.broadcast %17 : i32 to vector<128x16xi32>
    %19 = arith.remsi %15, %18 : vector<128x16xi32>
    %c0_i32_15 = arith.constant 0 : i32
    %20 = vector.broadcast %c0_i32_15 : i32 to vector<128x16xi32>
    %21 = arith.cmpi ne, %19, %20 : vector<128x16xi32>
    %c0_i32_16 = arith.constant 0 : i32
    %22 = vector.broadcast %c0_i32_16 : i32 to vector<128x16xi32>
    %23 = arith.cmpi slt, %19, %22 : vector<128x16xi32>
    %c0_i32_17 = arith.constant 0 : i32
    %24 = arith.cmpi slt, %17, %c0_i32_17 : i32
    %25 = vector.broadcast %24 : i1 to vector<128x16xi1>
    %26 = vector.broadcast %25 : vector<128x16xi1> to vector<128x16xi1>
    %27 = arith.xori %23, %26 : vector<128x16xi1>
    %28 = arith.andi %27, %21 : vector<128x16xi1>
    %29 = vector.broadcast %17 : i32 to vector<128x16xi32>
    %30 = arith.addi %19, %29 : vector<128x16xi32>
    %31 = arith.select %28, %30, %19 : vector<128x16xi1>, vector<128x16xi32>
    %c0_i32_18 = arith.constant 0 : i32
    %32 = vector.broadcast %c0_i32_18 : i32 to vector<128x16xi32>
    %33 = arith.cmpi sgt, %31, %32 : vector<128x16xi32>
    %c15_i32 = arith.constant 15 : i32
    %34 = vector.broadcast %c15_i32 : i32 to vector<128x16xi32>
    %35 = arith.cmpi slt, %31, %34 : vector<128x16xi32>
    %cst_19 = arith.constant 0.000000e+00 : f32
    %36 = vector.broadcast %cst_19 : f32 to vector<128x16xf32>
    %37 = vector.extract_strided_slice %14 {offsets = [0, 0, 0], sizes = [8, 16, 16], strides = [1, 1, 1]} : vector<10x16x16xf32> to vector<8x16x16xf32>
    %38 = vector.shape_cast %37 : vector<8x16x16xf32> to vector<128x16xf32>
    %c1_i32_20 = arith.constant 1 : i32
    %39 = tpu.dynamic_rotate %38 by %c1_i32_20 dim 0 : vector<128x16xf32>, i32 -> vector<128x16xf32>
    %cst_21 = arith.constant 0.000000e+00 : f32
    %40 = vector.broadcast %cst_21 : f32 to vector<128x16xf32>
    %41 = arith.select %33, %39, %40 : vector<128x16xi1>, vector<128x16xf32>
    %c127_i32 = arith.constant 127 : i32
    %42 = tpu.dynamic_rotate %38 by %c127_i32 dim 0 : vector<128x16xf32>, i32 -> vector<128x16xf32>
    %cst_22 = arith.constant 0.000000e+00 : f32
    %43 = vector.broadcast %cst_22 : f32 to vector<128x16xf32>
    %44 = arith.select %35, %42, %43 : vector<128x16xi1>, vector<128x16xf32>
    %45 = arith.truncf %41 : vector<128x16xf32> to vector<128x16xbf16>
    %c0_23 = arith.constant 0 : index
    %c0_24 = arith.constant 0 : index
    %c0_25 = arith.constant 0 : index
    %46 = vector.load %arg5[%c0_23, %c0_24, %c0_25] : memref<9x16x16xbf16, #tpu.memory_space<vmem>>, vector<1x16x16xbf16>
    %47 = vector.shape_cast %46 : vector<1x16x16xbf16> to vector<16x16xbf16>
    %cst_26 = arith.constant dense<0.000000e+00> : vector<128x16xf32>
    %48 = tpu.matmul %45, %47, %cst_26 {dimension_numbers = #tpu.dot_dimension_numbers<[1], [0], [0], [1], [0, 0, 1, 1], [], []>} : vector<128x16xbf16>, vector<16x16xbf16>, vector<128x16xf32> -> vector<128x16xf32>
    %49 = arith.addf %36, %48 : vector<128x16xf32>
    %50 = arith.truncf %38 : vector<128x16xf32> to vector<128x16xbf16>
    %c1 = arith.constant 1 : index
    %c0_27 = arith.constant 0 : index
    %c0_28 = arith.constant 0 : index
    %51 = vector.load %arg5[%c1, %c0_27, %c0_28] : memref<9x16x16xbf16, #tpu.memory_space<vmem>>, vector<1x16x16xbf16>
    %52 = vector.shape_cast %51 : vector<1x16x16xbf16> to vector<16x16xbf16>
    %cst_29 = arith.constant dense<0.000000e+00> : vector<128x16xf32>
    %53 = tpu.matmul %50, %52, %cst_29 {dimension_numbers = #tpu.dot_dimension_numbers<[1], [0], [0], [1], [0, 0, 1, 1], [], []>} : vector<128x16xbf16>, vector<16x16xbf16>, vector<128x16xf32> -> vector<128x16xf32>
    %54 = arith.addf %49, %53 : vector<128x16xf32>
    %55 = arith.truncf %44 : vector<128x16xf32> to vector<128x16xbf16>
    %c2 = arith.constant 2 : index
    %c0_30 = arith.constant 0 : index
    %c0_31 = arith.constant 0 : index
    %56 = vector.load %arg5[%c2, %c0_30, %c0_31] : memref<9x16x16xbf16, #tpu.memory_space<vmem>>, vector<1x16x16xbf16>
    %57 = vector.shape_cast %56 : vector<1x16x16xbf16> to vector<16x16xbf16>
    %cst_32 = arith.constant dense<0.000000e+00> : vector<128x16xf32>
    %58 = tpu.matmul %55, %57, %cst_32 {dimension_numbers = #tpu.dot_dimension_numbers<[1], [0], [0], [1], [0, 0, 1, 1], [], []>} : vector<128x16xbf16>, vector<16x16xbf16>, vector<128x16xf32> -> vector<128x16xf32>
    %59 = arith.addf %54, %58 : vector<128x16xf32>
    %60 = vector.extract_strided_slice %14 {offsets = [1, 0, 0], sizes = [8, 16, 16], strides = [1, 1, 1]} : vector<10x16x16xf32> to vector<8x16x16xf32>
    %61 = vector.shape_cast %60 : vector<8x16x16xf32> to vector<128x16xf32>
    %c1_i32_33 = arith.constant 1 : i32
    %62 = tpu.dynamic_rotate %61 by %c1_i32_33 dim 0 : vector<128x16xf32>, i32 -> vector<128x16xf32>
    %cst_34 = arith.constant 0.000000e+00 : f32
    %63 = vector.broadcast %cst_34 : f32 to vector<128x16xf32>
    %64 = arith.select %33, %62, %63 : vector<128x16xi1>, vector<128x16xf32>
    %c127_i32_35 = arith.constant 127 : i32
    %65 = tpu.dynamic_rotate %61 by %c127_i32_35 dim 0 : vector<128x16xf32>, i32 -> vector<128x16xf32>
    %cst_36 = arith.constant 0.000000e+00 : f32
    %66 = vector.broadcast %cst_36 : f32 to vector<128x16xf32>
    %67 = arith.select %35, %65, %66 : vector<128x16xi1>, vector<128x16xf32>
    %68 = arith.truncf %64 : vector<128x16xf32> to vector<128x16xbf16>
    %c3 = arith.constant 3 : index
    %c0_37 = arith.constant 0 : index
    %c0_38 = arith.constant 0 : index
    %69 = vector.load %arg5[%c3, %c0_37, %c0_38] : memref<9x16x16xbf16, #tpu.memory_space<vmem>>, vector<1x16x16xbf16>
    %70 = vector.shape_cast %69 : vector<1x16x16xbf16> to vector<16x16xbf16>
    %cst_39 = arith.constant dense<0.000000e+00> : vector<128x16xf32>
    %71 = tpu.matmul %68, %70, %cst_39 {dimension_numbers = #tpu.dot_dimension_numbers<[1], [0], [0], [1], [0, 0, 1, 1], [], []>} : vector<128x16xbf16>, vector<16x16xbf16>, vector<128x16xf32> -> vector<128x16xf32>
    %72 = arith.addf %59, %71 : vector<128x16xf32>
    %73 = arith.truncf %61 : vector<128x16xf32> to vector<128x16xbf16>
    %c4 = arith.constant 4 : index
    %c0_40 = arith.constant 0 : index
    %c0_41 = arith.constant 0 : index
    %74 = vector.load %arg5[%c4, %c0_40, %c0_41] : memref<9x16x16xbf16, #tpu.memory_space<vmem>>, vector<1x16x16xbf16>
    %75 = vector.shape_cast %74 : vector<1x16x16xbf16> to vector<16x16xbf16>
    %cst_42 = arith.constant dense<0.000000e+00> : vector<128x16xf32>
    %76 = tpu.matmul %73, %75, %cst_42 {dimension_numbers = #tpu.dot_dimension_numbers<[1], [0], [0], [1], [0, 0, 1, 1], [], []>} : vector<128x16xbf16>, vector<16x16xbf16>, vector<128x16xf32> -> vector<128x16xf32>
    %77 = arith.addf %72, %76 : vector<128x16xf32>
    %78 = arith.truncf %67 : vector<128x16xf32> to vector<128x16xbf16>
    %c5 = arith.constant 5 : index
    %c0_43 = arith.constant 0 : index
    %c0_44 = arith.constant 0 : index
    %79 = vector.load %arg5[%c5, %c0_43, %c0_44] : memref<9x16x16xbf16, #tpu.memory_space<vmem>>, vector<1x16x16xbf16>
    %80 = vector.shape_cast %79 : vector<1x16x16xbf16> to vector<16x16xbf16>
    %cst_45 = arith.constant dense<0.000000e+00> : vector<128x16xf32>
    %81 = tpu.matmul %78, %80, %cst_45 {dimension_numbers = #tpu.dot_dimension_numbers<[1], [0], [0], [1], [0, 0, 1, 1], [], []>} : vector<128x16xbf16>, vector<16x16xbf16>, vector<128x16xf32> -> vector<128x16xf32>
    %82 = arith.addf %77, %81 : vector<128x16xf32>
    %83 = vector.extract_strided_slice %14 {offsets = [2, 0, 0], sizes = [8, 16, 16], strides = [1, 1, 1]} : vector<10x16x16xf32> to vector<8x16x16xf32>
    %84 = vector.shape_cast %83 : vector<8x16x16xf32> to vector<128x16xf32>
    %c1_i32_46 = arith.constant 1 : i32
    %85 = tpu.dynamic_rotate %84 by %c1_i32_46 dim 0 : vector<128x16xf32>, i32 -> vector<128x16xf32>
    %cst_47 = arith.constant 0.000000e+00 : f32
    %86 = vector.broadcast %cst_47 : f32 to vector<128x16xf32>
    %87 = arith.select %33, %85, %86 : vector<128x16xi1>, vector<128x16xf32>
    %c127_i32_48 = arith.constant 127 : i32
    %88 = tpu.dynamic_rotate %84 by %c127_i32_48 dim 0 : vector<128x16xf32>, i32 -> vector<128x16xf32>
    %cst_49 = arith.constant 0.000000e+00 : f32
    %89 = vector.broadcast %cst_49 : f32 to vector<128x16xf32>
    %90 = arith.select %35, %88, %89 : vector<128x16xi1>, vector<128x16xf32>
    %91 = arith.truncf %87 : vector<128x16xf32> to vector<128x16xbf16>
    %c6 = arith.constant 6 : index
    %c0_50 = arith.constant 0 : index
    %c0_51 = arith.constant 0 : index
    %92 = vector.load %arg5[%c6, %c0_50, %c0_51] : memref<9x16x16xbf16, #tpu.memory_space<vmem>>, vector<1x16x16xbf16>
    %93 = vector.shape_cast %92 : vector<1x16x16xbf16> to vector<16x16xbf16>
    %cst_52 = arith.constant dense<0.000000e+00> : vector<128x16xf32>
    %94 = tpu.matmul %91, %93, %cst_52 {dimension_numbers = #tpu.dot_dimension_numbers<[1], [0], [0], [1], [0, 0, 1, 1], [], []>} : vector<128x16xbf16>, vector<16x16xbf16>, vector<128x16xf32> -> vector<128x16xf32>
    %95 = arith.addf %82, %94 : vector<128x16xf32>
    %96 = arith.truncf %84 : vector<128x16xf32> to vector<128x16xbf16>
    %c7_53 = arith.constant 7 : index
    %c0_54 = arith.constant 0 : index
    %c0_55 = arith.constant 0 : index
    %97 = vector.load %arg5[%c7_53, %c0_54, %c0_55] : memref<9x16x16xbf16, #tpu.memory_space<vmem>>, vector<1x16x16xbf16>
    %98 = vector.shape_cast %97 : vector<1x16x16xbf16> to vector<16x16xbf16>
    %cst_56 = arith.constant dense<0.000000e+00> : vector<128x16xf32>
    %99 = tpu.matmul %96, %98, %cst_56 {dimension_numbers = #tpu.dot_dimension_numbers<[1], [0], [0], [1], [0, 0, 1, 1], [], []>} : vector<128x16xbf16>, vector<16x16xbf16>, vector<128x16xf32> -> vector<128x16xf32>
    %100 = arith.addf %95, %99 : vector<128x16xf32>
    %101 = arith.truncf %90 : vector<128x16xf32> to vector<128x16xbf16>
    %c8 = arith.constant 8 : index
    %c0_57 = arith.constant 0 : index
    %c0_58 = arith.constant 0 : index
    %102 = vector.load %arg5[%c8, %c0_57, %c0_58] : memref<9x16x16xbf16, #tpu.memory_space<vmem>>, vector<1x16x16xbf16>
    %103 = vector.shape_cast %102 : vector<1x16x16xbf16> to vector<16x16xbf16>
    %cst_59 = arith.constant dense<0.000000e+00> : vector<128x16xf32>
    %104 = tpu.matmul %101, %103, %cst_59 {dimension_numbers = #tpu.dot_dimension_numbers<[1], [0], [0], [1], [0, 0, 1, 1], [], []>} : vector<128x16xbf16>, vector<16x16xbf16>, vector<128x16xf32> -> vector<128x16xf32>
    %105 = arith.addf %100, %104 : vector<128x16xf32>
    %c0_60 = arith.constant 0 : index
    %c0_61 = arith.constant 0 : index
    %106 = vector.load %arg6[%c0_60, %c0_61] : memref<1x16xf32, #tpu.memory_space<vmem>>, vector<1x16xf32>
    %107 = vector.broadcast %106 : vector<1x16xf32> to vector<128x16xf32>
    %108 = arith.mulf %105, %107 : vector<128x16xf32>
    %c0_62 = arith.constant 0 : index
    %c0_63 = arith.constant 0 : index
    %109 = vector.load %arg7[%c0_62, %c0_63] : memref<1x16xf32, #tpu.memory_space<vmem>>, vector<1x16xf32>
    %110 = vector.broadcast %109 : vector<1x16xf32> to vector<128x16xf32>
    %111 = arith.addf %108, %110 : vector<128x16xf32>
    %cst_64 = arith.constant 0.000000e+00 : f32
    %112 = vector.broadcast %cst_64 : f32 to vector<128x16xf32>
    %113 = arith.cmpf oge, %111, %112 : vector<128x16xf32>
    %c0_65 = arith.constant 0 : index
    %c0_66 = arith.constant 0 : index
    %114 = vector.load %arg8[%c0_65, %c0_66] : memref<1x16xf32, #tpu.memory_space<vmem>>, vector<1x16xf32>
    %115 = vector.broadcast %114 : vector<1x16xf32> to vector<128x16xf32>
    %116 = arith.mulf %115, %111 : vector<128x16xf32>
    %117 = arith.select %113, %111, %116 : vector<128x16xi1>, vector<128x16xf32>
    %118 = vector.shape_cast %117 : vector<128x16xf32> to vector<1x8x16x16xf32>
    %c0_67 = arith.constant 0 : index
    %c0_68 = arith.constant 0 : index
    %c0_69 = arith.constant 0 : index
    %c0_70 = arith.constant 0 : index
    %119 = vector.load %arg9[%c0_67, %c0_68, %c0_69, %c0_70] : memref<1x8x16x16xf32, #tpu.memory_space<vmem>>, vector<1x8x16x16xf32>
    tpu.vector_store %arg9[%c0_67, %c0_68, %c0_69, %c0_70], %118 {strides = array<i32>} : memref<1x8x16x16xf32, #tpu.memory_space<vmem>>, vector<1x8x16x16xf32>,
    return
  }
  func.func @transform_0(%arg0: i32, %arg1: i32) -> (i32, i32, i32, i32) {
    %c0_i32 = arith.constant 0 : i32
    %c0_i32_0 = arith.constant 0 : i32
    %c0_i32_1 = arith.constant 0 : i32
    return %arg0, %arg1, %c0_i32, %c0_i32_0 : i32, i32, i32, i32
  }
  func.func @transform_1(%arg0: i32, %arg1: i32) -> (i32, i32, i32, i32) {
    %c1_i32 = arith.constant 1 : i32
    %0 = arith.muli %arg1, %c1_i32 : i32
    %c1_i32_0 = arith.constant 1 : i32
    %1 = arith.subi %0, %c1_i32_0 : i32
    %c0_i32 = arith.constant 0 : i32
    %2 = arith.maxsi %1, %c0_i32 : i32
    %c0_i32_1 = arith.constant 0 : i32
    %c0_i32_2 = arith.constant 0 : i32
    %c0_i32_3 = arith.constant 0 : i32
    return %arg0, %2, %c0_i32_1, %c0_i32_2 : i32, i32, i32, i32
  }
  func.func @transform_2(%arg0: i32, %arg1: i32) -> (i32, i32, i32, i32) {
    %c1_i32 = arith.constant 1 : i32
    %0 = arith.addi %arg1, %c1_i32 : i32
    %c1_i32_0 = arith.constant 1 : i32
    %1 = arith.muli %0, %c1_i32_0 : i32
    %c1_i32_1 = arith.constant 1 : i32
    %2 = arith.minsi %1, %c1_i32_1 : i32
    %c0_i32 = arith.constant 0 : i32
    %c0_i32_2 = arith.constant 0 : i32
    %c0_i32_3 = arith.constant 0 : i32
    return %arg0, %2, %c0_i32, %c0_i32_2 : i32, i32, i32, i32
  }
  func.func @transform_3(%arg0: i32, %arg1: i32) -> (i32, i32, i32) {
    %c0_i32 = arith.constant 0 : i32
    %c0_i32_0 = arith.constant 0 : i32
    %c0_i32_1 = arith.constant 0 : i32
    %c0_i32_2 = arith.constant 0 : i32
    return %c0_i32, %c0_i32_0, %c0_i32_1 : i32, i32, i32
  }
  func.func @transform_4(%arg0: i32, %arg1: i32) -> (i32, i32) {
    %c0_i32 = arith.constant 0 : i32
    %c0_i32_0 = arith.constant 0 : i32
    %c0_i32_1 = arith.constant 0 : i32
    return %c0_i32, %c0_i32_0 : i32, i32
  }
  func.func @transform_5(%arg0: i32, %arg1: i32) -> (i32, i32) {
    %c0_i32 = arith.constant 0 : i32
    %c0_i32_0 = arith.constant 0 : i32
    %c0_i32_1 = arith.constant 0 : i32
    return %c0_i32, %c0_i32_0 : i32, i32
  }
  func.func @transform_6(%arg0: i32, %arg1: i32) -> (i32, i32) {
    %c0_i32 = arith.constant 0 : i32
    %c0_i32_0 = arith.constant 0 : i32
    %c0_i32_1 = arith.constant 0 : i32
    return %c0_i32, %c0_i32_0 : i32, i32
  }
  func.func @transform_7(%arg0: i32, %arg1: i32) -> (i32, i32, i32, i32) {
    %c0_i32 = arith.constant 0 : i32
    %c0_i32_0 = arith.constant 0 : i32
    %c0_i32_1 = arith.constant 0 : i32
    return %arg0, %arg1, %c0_i32, %c0_i32_0 : i32, i32, i32, i32
  }
}

</mosaic_0001>

<llo_original>
// kernel: up_conv_block_forward.3
$region0: #{up_conv_block_forward.3}
  #allocation0 [shape = 'u32[]', space=smem, size = 0x4, offset = 0x4, fixed_abs, tag = 'smem constant byte address 0x4 - core index']
  #allocation1 [shape = 'u32[72,128]{1,0:T(1,128)}', space=vmem, size = 0x9000, scoped, tag = 'internal scratch']
  %s0 = inlined_call_operand.hbm [shape: f32[128,16], index: 0, kind: input, shape index: {}]
  %s1 = inlined_call_operand.vmem [shape: bf16[16,32], index: 1, kind: input, shape index: {}]
  %s2 = inlined_call_operand.vmem [shape: f32[1,32], index: 2, kind: input, shape index: {}]
  %s3 = inlined_call_operand.vmem [shape: f32[1,32], index: 3, kind: input, shape index: {}]
  %s4 = inlined_call_operand.vmem [shape: f32[128,32], index: 4, kind: output, shape index: {}]
  %s5 = sld [smem:[#allocation0]]
  $region30: #{up_conv_block_forward.3} parent=0
    _
  %s7 = ssub.s32 1, %s5
  %s8 = scalar_select 0, %s7, %s5
  $region1: #{up_conv_block_forward.3} parent=0
    #allocation2 [shape = 'u8[65536]{0}', space=vmem, size = 0x10000, scoped, tag = 'input window, operand 0, single buffered']
    #allocation3 [shape = 's32[1]{0}', space=sflag, size = 0x4, scoped, tag = 'scoped memory for up_conv_block_forward.3']
    %9 = vsyncpa [#allocation3], 0
    // Predicated region
    $region2: #{up_conv_block_forward.3} parent=1 // pred_check
      _
    $region3: #{up_conv_block_forward.3} parent=1 // pred_check_branch
      %11 = sbr.rel (0) target = $region5
    $region4: #{up_conv_block_forward.3} parent=1 // pred_region
      %13 = vsyncadd [#allocation3], 0
      %s14 = sshll.u32 %s0, 4
      %s15 = int_to_ptr.hbm [resolvable:$true] %s14
      %s16 = sshll.u32 [#allocation2], 4
      %s17 = int_to_ptr.vmem [resolvable:$true] %s16
      %22 = dma.hbm_to_vmem [thread:$0]  %s15, 2048, %s17, [#allocation3], 128, 128, 8
    $region5: #{up_conv_block_forward.3} parent=1 // pred_fallthru
      _
    // Predicated region
    $region6: #{up_conv_block_forward.3} parent=1 // pred_check
      _
    $region7: #{up_conv_block_forward.3} parent=1 // pred_check_branch
      %24 = sbr.rel (0) target = $region9
    $region8: #{up_conv_block_forward.3} parent=1 // pred_region
      _
    $region9: #{up_conv_block_forward.3} parent=1 // pred_fallthru
      _
    // Predicated region
    $region10: #{up_conv_block_forward.3} parent=1 // pred_check
      _
    $region11: #{up_conv_block_forward.3} parent=1 // pred_check_branch
      %26 = sbr.rel (0) target = $region13
    $region12: #{up_conv_block_forward.3} parent=1 // pred_region
      _
    $region13: #{up_conv_block_forward.3} parent=1 // pred_fallthru
      _
    // Predicated region
    $region14: #{up_conv_block_forward.3} parent=1 // pred_check
      _
    $region15: #{up_conv_block_forward.3} parent=1 // pred_check_branch
      %28 = sbr.rel (0) target = $region17
    $region16: #{up_conv_block_forward.3} parent=1 // pred_region
      _
    $region17: #{up_conv_block_forward.3} parent=1 // pred_fallthru
      _
    // Predicated region
    $region18: #{up_conv_block_forward.3} parent=1 // pred_check
      _
    $region19: #{up_conv_block_forward.3} parent=1 // pred_check_branch
      %30 = sbr.rel (0) target = $region21
    $region20: #{up_conv_block_forward.3} parent=1 // pred_region
      %32 = dma.done [#allocation3], 2048
    $region21: #{up_conv_block_forward.3} parent=1 // pred_fallthru
      _
    %v34 = vld [vmem:[#allocation2] sm:$0xff]
    %v35 = vld [vmem:[#allocation2 + $0x8] sm:$0xff]
    %v36 = vld [vmem:[#allocation2 + $0x10] sm:$0xff]
    %v37 = vld [vmem:[#allocation2 + $0x18] sm:$0xff]
    %v38 = vld [vmem:[#allocation2 + $0x20] sm:$0xff]
    %v39 = vld [vmem:[#allocation2 + $0x28] sm:$0xff]
    %v40 = vld [vmem:[#allocation2 + $0x30] sm:$0xff]
    %v41 = vld [vmem:[#allocation2 + $0x38] sm:$0xff]
    %v42 = vld [vmem:[#allocation2 + $0x40] sm:$0xff]
    %v43 = vld [vmem:[#allocation2 + $0x48] sm:$0xff]
    %v44 = vld [vmem:[#allocation2 + $0x50] sm:$0xff]
    %v45 = vld [vmem:[#allocation2 + $0x58] sm:$0xff]
    %v46 = vld [vmem:[#allocation2 + $0x60] sm:$0xff]
    %v47 = vld [vmem:[#allocation2 + $0x68] sm:$0xff]
    %v48 = vld [vmem:[#allocation2 + $0x70] sm:$0xff]
    %v49 = vld [vmem:[#allocation2 + $0x78] sm:$0xff]
    %v50 = vpack.c.bf16 %v35, %v34
    %v51 = vpack.c.bf16 %v37, %v36
    %v52 = vpack.c.bf16 %v39, %v38
    %v53 = vpack.c.bf16 %v41, %v40
    %v54 = vpack.c.bf16 %v43, %v42
    %v55 = vpack.c.bf16 %v45, %v44
    %v56 = vpack.c.bf16 %v47, %v46
    %v57 = vpack.c.bf16 %v49, %v48
    %v58 = vld [vmem:[%s1] sm:$0xf]
    %v59 = vld [vmem:[%s1 + $0x4] sm:$0xf]
    %v62 = vunpack.c.l.b16 %v58
    %v63 = vunpack.c.l.b16 %v59
    %v64 = vpack.c.b16 %v63, %v62
    %vm66 = vcmask 130048
    %v68 = vsel %vm66, %v50, 0
    %v71 = vsel %vm66, %v51, 0
    %v74 = vsel %vm66, %v52, 0
    %v77 = vsel %vm66, %v53, 0
    %v80 = vsel %vm66, %v54, 0
    %v83 = vsel %vm66, %v55, 0
    %v86 = vsel %vm66, %v56, 0
    %v89 = vsel %vm66, %v57, 0
    %91 = vmatpush.bf16.msra.mxu0 0
    %92 = vmatpush.bf16.msra.mxu0 0
    %93 = vmatpush.bf16.msra.mxu0 0
    %94 = vmatpush.bf16.msra.mxu0 0
    %95 = vmatpush.bf16.msra.mxu0 0
    %96 = vmatpush.bf16.msra.mxu0 0
    %97 = vmatpush.bf16.msra.mxu0 0
    %98 = vmatpush.bf16.msra.mxu0 %v64
    %99 = vmatmul.bf16.gmra.mxu0 %v68
    %v100 = vpop.f32.mrf.mxu0
    %v101 = vadd.f32 0.0, %v100
    %v102 = vpop.f32.mrf.mxu0
    %v103 = vadd.f32 0.0, %v102
    %104 = vmatmul.bf16.gmra.mxu0 %v71
    %v105 = vpop.f32.mrf.mxu0
    %v106 = vadd.f32 0.0, %v105
    %v107 = vpop.f32.mrf.mxu0
    %v108 = vadd.f32 0.0, %v107
    %109 = vmatmul.bf16.gmra.mxu0 %v74
    %v110 = vpop.f32.mrf.mxu0
    %v111 = vadd.f32 0.0, %v110
    %v112 = vpop.f32.mrf.mxu0
    %v113 = vadd.f32 0.0, %v112
    %114 = vmatmul.bf16.gmra.mxu0 %v77
    %v115 = vpop.f32.mrf.mxu0
    %v116 = vadd.f32 0.0, %v115
    %v117 = vpop.f32.mrf.mxu0
    %v118 = vadd.f32 0.0, %v117
    %119 = vmatmul.bf16.gmra.mxu0 %v80
    %v120 = vpop.f32.mrf.mxu0
    %v121 = vadd.f32 0.0, %v120
    %v122 = vpop.f32.mrf.mxu0
    %v123 = vadd.f32 0.0, %v122
    %124 = vmatmul.bf16.gmra.mxu0 %v83
    %v125 = vpop.f32.mrf.mxu0
    %v126 = vadd.f32 0.0, %v125
    %v127 = vpop.f32.mrf.mxu0
    %v128 = vadd.f32 0.0, %v127
    %129 = vmatmul.bf16.gmra.mxu0 %v86
    %v130 = vpop.f32.mrf.mxu0
    %v131 = vadd.f32 0.0, %v130
    %v132 = vpop.f32.mrf.mxu0
    %v133 = vadd.f32 0.0, %v132
    %134 = vmatmul.bf16.gmra.mxu0 %v89
    %v135 = vpop.f32.mrf.mxu0
    %v136 = vadd.f32 0.0, %v135
    %v137 = vpop.f32.mrf.mxu0
    %v138 = vadd.f32 0.0, %v137
    %139 = vdwg.mxu0
    %v140 = vld [vmem:[%s2] sm:$0x1]
    %v142 = vperm.slane %v140, 0
    %v144 = vmul.f32 %v101, %v142
    %v145 = vmul.f32 %v103, %v142
    %v146 = vmul.f32 %v106, %v142
    %v147 = vmul.f32 %v108, %v142
    %v148 = vmul.f32 %v111, %v142
    %v149 = vmul.f32 %v113, %v142
    %v150 = vmul.f32 %v116, %v142
    %v151 = vmul.f32 %v118, %v142
    %v152 = vmul.f32 %v121, %v142
    %v153 = vmul.f32 %v123, %v142
    %v154 = vmul.f32 %v126, %v142
    %v155 = vmul.f32 %v128, %v142
    %v156 = vmul.f32 %v131, %v142
    %v157 = vmul.f32 %v133, %v142
    %v158 = vmul.f32 %v136, %v142
    %v159 = vmul.f32 %v138, %v142
    %v160 = vld [vmem:[%s3] sm:$0x1]
    %v162 = vperm.slane %v160, 0
    %v164 = vadd.f32 %v144, %v162
    %v165 = vadd.f32 %v145, %v162
    %v166 = vadd.f32 %v146, %v162
    %v167 = vadd.f32 %v147, %v162
    %v168 = vadd.f32 %v148, %v162
    %v169 = vadd.f32 %v149, %v162
    %v170 = vadd.f32 %v150, %v162
    %v171 = vadd.f32 %v151, %v162
    %v172 = vadd.f32 %v152, %v162
    %v173 = vadd.f32 %v153, %v162
    %v174 = vadd.f32 %v154, %v162
    %v175 = vadd.f32 %v155, %v162
    %v176 = vadd.f32 %v156, %v162
    %v177 = vadd.f32 %v157, %v162
    %v178 = vadd.f32 %v158, %v162
    %v179 = vadd.f32 %v159, %v162
    %v180 = vmax.f32 %v164, 0.0
    %v181 = vmax.f32 %v165, 0.0
    %v182 = vmax.f32 %v166, 0.0
    %v183 = vmax.f32 %v167, 0.0
    %v184 = vmax.f32 %v168, 0.0
    %v185 = vmax.f32 %v169, 0.0
    %v186 = vmax.f32 %v170, 0.0
    %v187 = vmax.f32 %v171, 0.0
    %v188 = vmax.f32 %v172, 0.0
    %v189 = vmax.f32 %v173, 0.0
    %v190 = vmax.f32 %v174, 0.0
    %v191 = vmax.f32 %v175, 0.0
    %v192 = vmax.f32 %v176, 0.0
    %v193 = vmax.f32 %v177, 0.0
    %v194 = vmax.f32 %v178, 0.0
    %v195 = vmax.f32 %v179, 0.0
    %vm196 = vcmask 261120
    %197 = vst.msk [vmem:[%s4] sm:$0xff] %vm196, %v180
    %198 = vst.msk [vmem:[%s4 + $0x8] sm:$0xff] %vm196, %v181
    %199 = vst.msk [vmem:[%s4 + $0x10] sm:$0xff] %vm196, %v182
    %200 = vst.msk [vmem:[%s4 + $0x18] sm:$0xff] %vm196, %v183
    %201 = vst.msk [vmem:[%s4 + $0x20] sm:$0xff] %vm196, %v184
    %202 = vst.msk [vmem:[%s4 + $0x28] sm:$0xff] %vm196, %v185
    %203 = vst.msk [vmem:[%s4 + $0x30] sm:$0xff] %vm196, %v186
    %204 = vst.msk [vmem:[%s4 + $0x38] sm:$0xff] %vm196, %v187
    %205 = vst.msk [vmem:[%s4 + $0x40] sm:$0xff] %vm196, %v188
    %206 = vst.msk [vmem:[%s4 + $0x48] sm:$0xff] %vm196, %v189
    %207 = vst.msk [vmem:[%s4 + $0x50] sm:$0xff] %vm196, %v190
    %208 = vst.msk [vmem:[%s4 + $0x58] sm:$0xff] %vm196, %v191
    %209 = vst.msk [vmem:[%s4 + $0x60] sm:$0xff] %vm196, %v192
    %210 = vst.msk [vmem:[%s4 + $0x68] sm:$0xff] %vm196, %v193
    %211 = vst.msk [vmem:[%s4 + $0x70] sm:$0xff] %vm196, %v194
    %212 = vst.msk [vmem:[%s4 + $0x78] sm:$0xff] %vm196, %v195
    // Predicated region
    $region22: #{up_conv_block_forward.3} parent=1 // pred_check
      _
    $region23: #{up_conv_block_forward.3} parent=1 // pred_check_branch
      %214 = sbr.rel (0) target = $region25
    $region24: #{up_conv_block_forward.3} parent=1 // pred_region
      _
    $region25: #{up_conv_block_forward.3} parent=1 // pred_fallthru
      _
    // Predicated region
    $region26: #{up_conv_block_forward.3} parent=1 // pred_check
      _
    $region27: #{up_conv_block_forward.3} parent=1 // pred_check_branch
      %216 = sbr.rel (0) target = $region29
    $region28: #{up_conv_block_forward.3} parent=1 // pred_region
      _
    $region29: #{up_conv_block_forward.3} parent=1 // pred_fallthru
      _
    %217 = vsyncpa [#allocation3], 1

// kernel: up_conv_block_forward.4
$region0: #{up_conv_block_forward.4}
  #allocation0 [shape = 'u32[]', space=smem, size = 0x4, offset = 0x4, fixed_abs, tag = 'smem constant byte address 0x4 - core index']
  #allocation1 [shape = 'u32[72,128]{1,0:T(1,128)}', space=vmem, size = 0x9000, scoped, tag = 'internal scratch']
  %s0 = inlined_call_operand.vmem [shape: f32[2,16,16,16], index: 0, kind: input, shape index: {}, may-alias: {0,1,2}]
  %s1 = inlined_call_operand.vmem [shape: f32[2,16,16,16], index: 1, kind: input, shape index: {}, may-alias: {0,1,2}]
  %s2 = inlined_call_operand.vmem [shape: f32[2,16,16,16], index: 2, kind: input, shape index: {}, may-alias: {0,1,2}]
  %s3 = inlined_call_operand.vmem [shape: bf16[9,16,16], index: 3, kind: input, shape index: {}]
  %s4 = inlined_call_operand.vmem [shape: f32[1,16], index: 4, kind: input, shape index: {}]
  %s5 = inlined_call_operand.vmem [shape: f32[1,16], index: 5, kind: input, shape index: {}]
  %s6 = inlined_call_operand.vmem [shape: f32[1,16], index: 6, kind: input, shape index: {}]
  %s7 = inlined_call_operand.vmem [shape: f32[2,16,16,16], index: 7, kind: output, shape index: {}]
  %s8 = sld [smem:[#allocation0]]
  $region61: #{up_conv_block_forward.4} parent=0
    _
  %s10 = ssub.s32 1, %s8
  %s11 = scalar_select 0, %s10, %s8
  loop: start=0, step=1, limit=6
  $region2: #{up_conv_block_forward.4} parent=0 // loop_pre_header
    _
  $region3: #{up_conv_block_forward.4} parent=0 // loop_header
    %s13 = sphi 0, %s17
    %p14 = scmp.ge.s32.totalorder %s13, 6
    %s20 = sphi 0, %s32
    %s21 = sphi 0, %s28
    %s22 = sphi 0, %s20
    %s23 = sphi 0, %s21
    %s24 = sphi 0, %s22
    %s25 = sphi 0, %s23
    %s37 = sphi 0, %s39
    %s40 = sphi 0, %s37
    %s41 = sphi 0, %s40
    %s57 = sphi 0, %s41
    %s71 = sphi 0, %s73
    %s74 = sphi 0, %s71
    %s75 = sphi 0, %s74
    %s91 = sphi 0, %s75
    %s105 = sphi 0, %s107
    %s108 = sphi 0, %s105
    %s109 = sphi 0, %s108
    %s125 = sphi 0, %s109
    %s129 = sphi 0, %s129
    %s131 = sphi 0, %s129
    %s132 = sphi 0, %s131
    %s146 = sphi 0, %s132
    %s150 = sphi 0, %s150
    %s152 = sphi 0, %s150
    %s153 = sphi 0, %s152
    %s167 = sphi 0, %s153
    %s171 = sphi 0, %s171
    %s173 = sphi 0, %s171
    %s174 = sphi 0, %s173
    %s188 = sphi 0, %s174
    %s192 = sphi 0, %s192
    %s194 = sphi 0, %s192
    %s195 = sphi 0, %s194
    %s209 = sphi 0, %s195
    %s217 = sphi 0, %s219
    %s220 = sphi 0, %s217
    %s221 = sphi 0, %s220
    %s237 = sphi 0, %s221
  $region4: #{up_conv_block_forward.4} parent=0 // loop_header_branch
    %16 = sbr.rel (%p14) target = $region8
  $region5: #{up_conv_block_forward.4} parent=0 // loop_body
    %s18 = ssub.s32 %s13, 1
    %s19 = ssub.s32 %s13, 2
    %s26 = sadd.s32 1, %s21
    %p27 = scmp.ge.s32.totalorder %s26, 2
    %s28 = scalar_select %p27, 0, %s26
    %s29 = sadd.s32 1, %s20
    %s30 = scalar_select %p27, %s29, %s20
    %p31 = scmp.ge.s32.totalorder %s30, 2
    %s32 = scalar_select %p31, 0, %s30
    %s33 = ssub.s32 %s20, %s32
    %s34 = ssub.s32 %s21, %s28
    %s35 = sor.u32 %s33, %s34
    %p36 = scmp.eq.s32.totalorder %s35, 0
    %s38 = sadd.s32 %s37, 1
    %s39 = scalar_select %p36, %s37, %s38
    %p42 = pneg %p36
    %p43 = scmp.eq.s32.totalorder %s13, 3
    %p44 = por %p42, %p43
    %p45 = scmp.ne.s32.totalorder %s37, %s40
    %p46 = scmp.eq.s32.totalorder %s13, 0
    %p47 = por %p45, %p46
    %p48 = scmp.ne.s32.totalorder %s37, %s40
    %p49 = scmp.eq.s32.totalorder %s18, 3
    %p50 = por %p48, %p49
    %p51 = scmp.ne.s32.totalorder %s40, %s41
    %p52 = scmp.eq.s32.totalorder %s18, 0
    %p53 = por %p51, %p52
    %p54 = scmp.ne.s32.totalorder %s40, %s41
    %p55 = scmp.eq.s32.totalorder %s19, 3
    %p56 = por %p54, %p55
    %p58 = scmp.ne.s32.totalorder %s41, %s57
    %p59 = scmp.eq.s32.totalorder %s19, 0
    %p60 = por %p58, %p59
    %s61 = ssub.s32 %s21, 1
    %p62 = scmp.gt.s32.totalorder %s61, 0
    %s63 = scalar_select %p62, %s61, 0
    %s64 = ssub.s32 %s28, 1
    %p65 = scmp.gt.s32.totalorder %s64, 0
    %s66 = scalar_select %p65, %s64, 0
    %s67 = ssub.s32 %s20, %s32
    %s68 = ssub.s32 %s63, %s66
    %s69 = sor.u32 %s67, %s68
    %p70 = scmp.eq.s32.totalorder %s69, 0
    %s72 = sadd.s32 %s71, 1
    %s73 = scalar_select %p70, %s71, %s72
    %p76 = pneg %p70
    %p77 = scmp.eq.s32.totalorder %s13, 3
    %p78 = por %p76, %p77
    %p79 = scmp.ne.s32.totalorder %s71, %s74
    %p80 = scmp.eq.s32.totalorder %s13, 0
    %p81 = por %p79, %p80
    %p82 = scmp.ne.s32.totalorder %s71, %s74
    %p83 = scmp.eq.s32.totalorder %s18, 3
    %p84 = por %p82, %p83
    %p85 = scmp.ne.s32.totalorder %s74, %s75
    %p86 = scmp.eq.s32.totalorder %s18, 0
    %p87 = por %p85, %p86
    %p88 = scmp.ne.s32.totalorder %s74, %s75
    %p89 = scmp.eq.s32.totalorder %s19, 3
    %p90 = por %p88, %p89
    %p92 = scmp.ne.s32.totalorder %s75, %s91
    %p93 = scmp.eq.s32.totalorder %s19, 0
    %p94 = por %p92, %p93
    %s95 = sadd.s32 %s21, 1
    %p96 = scmp.lt.s32.totalorder %s95, 1
    %s97 = scalar_select %p96, %s95, 1
    %s98 = sadd.s32 %s28, 1
    %p99 = scmp.lt.s32.totalorder %s98, 1
    %s100 = scalar_select %p99, %s98, 1
    %s101 = ssub.s32 %s20, %s32
    %s102 = ssub.s32 %s97, %s100
    %s103 = sor.u32 %s101, %s102
    %p104 = scmp.eq.s32.totalorder %s103, 0
    %s106 = sadd.s32 %s105, 1
    %s107 = scalar_select %p104, %s105, %s106
    %p110 = pneg %p104
    %p111 = scmp.eq.s32.totalorder %s13, 3
    %p112 = por %p110, %p111
    %p113 = scmp.ne.s32.totalorder %s105, %s108
    %p114 = scmp.eq.s32.totalorder %s13, 0
    %p115 = por %p113, %p114
    %p116 = scmp.ne.s32.totalorder %s105, %s108
    %p117 = scmp.eq.s32.totalorder %s18, 3
    %p118 = por %p116, %p117
    %p119 = scmp.ne.s32.totalorder %s108, %s109
    %p120 = scmp.eq.s32.totalorder %s18, 0
    %p121 = por %p119, %p120
    %p122 = scmp.ne.s32.totalorder %s108, %s109
    %p123 = scmp.eq.s32.totalorder %s19, 3
    %p124 = por %p122, %p123
    %p126 = scmp.ne.s32.totalorder %s109, %s125
    %p127 = scmp.eq.s32.totalorder %s19, 0
    %p128 = por %p126, %p127
    %s130 = sadd.s32 %s129, 1
    %p133 = scmp.eq.s32.totalorder %s13, 3
    %p134 = scmp.ne.s32.totalorder %s129, %s131
    %p135 = scmp.eq.s32.totalorder %s13, 0
    %p136 = por %p134, %p135
    %p137 = scmp.ne.s32.totalorder %s129, %s131
    %p138 = scmp.eq.s32.totalorder %s18, 3
    %p139 = por %p137, %p138
    %p140 = scmp.ne.s32.totalorder %s131, %s132
    %p141 = scmp.eq.s32.totalorder %s18, 0
    %p142 = por %p140, %p141
    %p143 = scmp.ne.s32.totalorder %s131, %s132
    %p144 = scmp.eq.s32.totalorder %s19, 3
    %p145 = por %p143, %p144
    %p147 = scmp.ne.s32.totalorder %s132, %s146
    %p148 = scmp.eq.s32.totalorder %s19, 0
    %p149 = por %p147, %p148
    %s151 = sadd.s32 %s150, 1
    %p154 = scmp.eq.s32.totalorder %s13, 3
    %p155 = scmp.ne.s32.totalorder %s150, %s152
    %p156 = scmp.eq.s32.totalorder %s13, 0
    %p157 = por %p155, %p156
    %p158 = scmp.ne.s32.totalorder %s150, %s152
    %p159 = scmp.eq.s32.totalorder %s18, 3
    %p160 = por %p158, %p159
    %p161 = scmp.ne.s32.totalorder %s152, %s153
    %p162 = scmp.eq.s32.totalorder %s18, 0
    %p163 = por %p161, %p162
    %p164 = scmp.ne.s32.totalorder %s152, %s153
    %p165 = scmp.eq.s32.totalorder %s19, 3
    %p166 = por %p164, %p165
    %p168 = scmp.ne.s32.totalorder %s153, %s167
    %p169 = scmp.eq.s32.totalorder %s19, 0
    %p170 = por %p168, %p169
    %s172 = sadd.s32 %s171, 1
    %p175 = scmp.eq.s32.totalorder %s13, 3
    %p176 = scmp.ne.s32.totalorder %s171, %s173
    %p177 = scmp.eq.s32.totalorder %s13, 0
    %p178 = por %p176, %p177
    %p179 = scmp.ne.s32.totalorder %s171, %s173
    %p180 = scmp.eq.s32.totalorder %s18, 3
    %p181 = por %p179, %p180
    %p182 = scmp.ne.s32.totalorder %s173, %s174
    %p183 = scmp.eq.s32.totalorder %s18, 0
    %p184 = por %p182, %p183
    %p185 = scmp.ne.s32.totalorder %s173, %s174
    %p186 = scmp.eq.s32.totalorder %s19, 3
    %p187 = por %p185, %p186
    %p189 = scmp.ne.s32.totalorder %s174, %s188
    %p190 = scmp.eq.s32.totalorder %s19, 0
    %p191 = por %p189, %p190
    %s193 = sadd.s32 %s192, 1
    %p196 = scmp.eq.s32.totalorder %s13, 3
    %p197 = scmp.ne.s32.totalorder %s192, %s194
    %p198 = scmp.eq.s32.totalorder %s13, 0
    %p199 = por %p197, %p198
    %p200 = scmp.ne.s32.totalorder %s192, %s194
    %p201 = scmp.eq.s32.totalorder %s18, 3
    %p202 = por %p200, %p201
    %p203 = scmp.ne.s32.totalorder %s194, %s195
    %p204 = scmp.eq.s32.totalorder %s18, 0
    %p205 = por %p203, %p204
    %p206 = scmp.ne.s32.totalorder %s194, %s195
    %p207 = scmp.eq.s32.totalorder %s19, 3
    %p208 = por %p206, %p207
    %p210 = scmp.ne.s32.totalorder %s195, %s209
    %p211 = scmp.eq.s32.totalorder %s19, 0
    %p212 = por %p210, %p211
    %s213 = ssub.s32 %s20, %s32
    %s214 = ssub.s32 %s21, %s28
    %s215 = sor.u32 %s213, %s214
    %p216 = scmp.eq.s32.totalorder %s215, 0
    %s218 = sadd.s32 %s217, 1
    %s219 = scalar_select %p216, %s217, %s218
    %p222 = pneg %p216
    %p223 = scmp.eq.s32.totalorder %s13, 3
    %p224 = por %p222, %p223
    %p225 = scmp.ne.s32.totalorder %s217, %s220
    %p226 = scmp.eq.s32.totalorder %s13, 0
    %p227 = por %p225, %p226
    %p228 = scmp.ne.s32.totalorder %s217, %s220
    %p229 = scmp.eq.s32.totalorder %s18, 3
    %p230 = por %p228, %p229
    %p231 = scmp.ne.s32.totalorder %s220, %s221
    %p232 = scmp.eq.s32.totalorder %s18, 0
    %p233 = por %p231, %p232
    %p234 = scmp.ne.s32.totalorder %s220, %s221
    %p235 = scmp.eq.s32.totalorder %s19, 3
    %p236 = por %p234, %p235
    %p238 = scmp.ne.s32.totalorder %s221, %s237
    %p239 = scmp.eq.s32.totalorder %s19, 0
    %p240 = por %p238, %p239
    %p241 = scmp.le.s32.totalorder 1, %s13
    %p242 = scmp.lt.s32.totalorder %s13, 5
    %p243 = pnand %p241, %p242
    %p244 = pneg %p243
    // Predicated region
    $region9: #{up_conv_block_forward.4} parent=5 // pred_check
      _
    $region10: #{up_conv_block_forward.4} parent=5 // pred_check_branch
      %246 = sbr.rel (%p243) target = $region12
    $region11: #{up_conv_block_forward.4} parent=5 // pred_region
      %s247 = ssub.s32 %s13, 1
      // Predicated region
      $region13: #{up_conv_block_forward.4} parent=11 // pred_check
        %p248 = pneg %p142
      $region14: #{up_conv_block_forward.4} parent=11 // pred_check_branch
        %250 = sbr.rel (%p248) target = $region16
      $region15: #{up_conv_block_forward.4} parent=11 // pred_region
        _
      $region16: #{up_conv_block_forward.4} parent=11 // pred_fallthru
        _
      // Predicated region
      $region17: #{up_conv_block_forward.4} parent=11 // pred_check
        %p251 = pneg %p163
      $region18: #{up_conv_block_forward.4} parent=11 // pred_check_branch
        %253 = sbr.rel (%p251) target = $region20
      $region19: #{up_conv_block_forward.4} parent=11 // pred_region
        _
      $region20: #{up_conv_block_forward.4} parent=11 // pred_fallthru
        _
      // Predicated region
      $region21: #{up_conv_block_forward.4} parent=11 // pred_check
        %p254 = pneg %p184
      $region22: #{up_conv_block_forward.4} parent=11 // pred_check_branch
        %256 = sbr.rel (%p254) target = $region24
      $region23: #{up_conv_block_forward.4} parent=11 // pred_region
        _
      $region24: #{up_conv_block_forward.4} parent=11 // pred_fallthru
        _
      // Predicated region
      $region25: #{up_conv_block_forward.4} parent=11 // pred_check
        %p257 = pneg %p205
      $region26: #{up_conv_block_forward.4} parent=11 // pred_check_branch
        %259 = sbr.rel (%p257) target = $region28
      $region27: #{up_conv_block_forward.4} parent=11 // pred_region
        _
      $region28: #{up_conv_block_forward.4} parent=11 // pred_fallthru
        _
    $region12: #{up_conv_block_forward.4} parent=5 // pred_fallthru
      _
    %p260 = scmp.lt.s32.totalorder %s13, 4
    // Predicated region
    $region29: #{up_conv_block_forward.4} parent=5 // pred_check
      %p261 = pneg %p260
    $region30: #{up_conv_block_forward.4} parent=5 // pred_check_branch
      %263 = sbr.rel (%p261) target = $region32
    $region31: #{up_conv_block_forward.4} parent=5 // pred_region
      // Predicated region
      $region33: #{up_conv_block_forward.4} parent=31 // pred_check
        %p264 = pneg %p47
      $region34: #{up_conv_block_forward.4} parent=31 // pred_check_branch
        %266 = sbr.rel (%p264) target = $region36
      $region35: #{up_conv_block_forward.4} parent=31 // pred_region
        %s267 = smul.u32 8, %s21
        %p268 = scmp.lt.s32.totalorder %s20, 1
        %s269 = scalar_select %p268, %s20, 1
        %p270 = scmp.lt.s32.totalorder %s267, 15
        %s271 = scalar_select %p270, %s267, 15
        %s272 = smul.addr %s271, 2
        %s273 = smul.addr %s269, 32
        %s274 = sadd.s32 %s272, %s273
        %s275 = smul.addr %s274, 8
        %s276 = scalar_lea.vmem %s0, %s275
        %s277 = smul.u32 8, %s21
      $region36: #{up_conv_block_forward.4} parent=31 // pred_fallthru
        _
      // Predicated region
      $region37: #{up_conv_block_forward.4} parent=31 // pred_check
        %p278 = pneg %p81
      $region38: #{up_conv_block_forward.4} parent=31 // pred_check_branch
        %280 = sbr.rel (%p278) target = $region40
      $region39: #{up_conv_block_forward.4} parent=31 // pred_region
        %s281 = ssub.s32 %s21, 1
        %p282 = scmp.gt.s32.totalorder %s281, 0
        %s283 = scalar_select %p282, %s281, 0
        %s284 = smul.u32 8, %s283
        %p285 = scmp.lt.s32.totalorder %s20, 1
        %s286 = scalar_select %p285, %s20, 1
        %p287 = scmp.lt.s32.totalorder %s284, 15
        %s288 = scalar_select %p287, %s284, 15
        %s289 = smul.addr %s288, 2
        %s290 = smul.addr %s286, 32
        %s291 = sadd.s32 %s289, %s290
        %s292 = smul.addr %s291, 8
        %s293 = scalar_lea.vmem %s1, %s292
        %s294 = ssub.s32 %s21, 1
        %p295 = scmp.gt.s32.totalorder %s294, 0
        %s296 = scalar_select %p295, %s294, 0
        %s297 = smul.u32 8, %s296
      $region40: #{up_conv_block_forward.4} parent=31 // pred_fallthru
        _
      // Predicated region
      $region41: #{up_conv_block_forward.4} parent=31 // pred_check
        %p298 = pneg %p115
      $region42: #{up_conv_block_forward.4} parent=31 // pred_check_branch
        %300 = sbr.rel (%p298) target = $region44
      $region43: #{up_conv_block_forward.4} parent=31 // pred_region
        %s301 = sadd.s32 %s21, 1
        %p302 = scmp.lt.s32.totalorder %s301, 1
        %s303 = scalar_select %p302, %s301, 1
        %s304 = smul.u32 8, %s303
        %p305 = scmp.lt.s32.totalorder %s20, 1
        %s306 = scalar_select %p305, %s20, 1
        %p307 = scmp.lt.s32.totalorder %s304, 15
        %s308 = scalar_select %p307, %s304, 15
        %s309 = smul.addr %s308, 2
        %s310 = smul.addr %s306, 32
        %s311 = sadd.s32 %s309, %s310
        %s312 = smul.addr %s311, 8
        %s313 = scalar_lea.vmem %s2, %s312
        %s314 = sadd.s32 %s21, 1
        %p315 = scmp.lt.s32.totalorder %s314, 1
        %s316 = scalar_select %p315, %s314, 1
        %s317 = smul.u32 8, %s316
      $region44: #{up_conv_block_forward.4} parent=31 // pred_fallthru
        _
    $region32: #{up_conv_block_forward.4} parent=5 // pred_fallthru
      _
    %p318 = scmp.le.s32.totalorder 1, %s13
    %p319 = scmp.lt.s32.totalorder %s13, 5
    %p320 = pnand %p318, %p319
    %p321 = pneg %p320
    // Predicated region
    $region45: #{up_conv_block_forward.4} parent=5 // pred_check
      _
    $region46: #{up_conv_block_forward.4} parent=5 // pred_check_branch
      %323 = sbr.rel (%p320) target = $region48
    $region47: #{up_conv_block_forward.4} parent=5 // pred_region
      %s324 = ssub.s32 %s13, 1
      %s325 = smul.u32 8, %s23
      %p326 = scmp.lt.s32.totalorder %s22, 1
      %s327 = scalar_select %p326, %s22, 1
      %p328 = scmp.lt.s32.totalorder %s325, 15
      %s329 = scalar_select %p328, %s325, 15
      %s330 = smul.addr %s329, 2
      %s331 = smul.addr %s327, 32
      %s332 = sadd.s32 %s330, %s331
      %s333 = smul.addr %s332, 8
      %s334 = scalar_lea.vmem %s0, %s333
      %p335 = pneg %p53
      %p336 = pneg %p50
      %s337 = ssub.s32 %s23, 1
      %p338 = scmp.gt.s32.totalorder %s337, 0
      %s339 = scalar_select %p338, %s337, 0
      %s340 = smul.u32 8, %s339
      %p341 = scmp.lt.s32.totalorder %s22, 1
      %s342 = scalar_select %p341, %s22, 1
      %p343 = scmp.lt.s32.totalorder %s340, 15
      %s344 = scalar_select %p343, %s340, 15
      %s345 = smul.addr %s344, 2
      %s346 = smul.addr %s342, 32
      %s347 = sadd.s32 %s345, %s346
      %s348 = smul.addr %s347, 8
      %s349 = scalar_lea.vmem %s1, %s348
      %p350 = pneg %p87
      %p351 = pneg %p84
      %s352 = sadd.s32 %s23, 1
      %p353 = scmp.lt.s32.totalorder %s352, 1
      %s354 = scalar_select %p353, %s352, 1
      %s355 = smul.u32 8, %s354
      %p356 = scmp.lt.s32.totalorder %s22, 1
      %s357 = scalar_select %p356, %s22, 1
      %p358 = scmp.lt.s32.totalorder %s355, 15
      %s359 = scalar_select %p358, %s355, 15
      %s360 = smul.addr %s359, 2
      %s361 = smul.addr %s357, 32
      %s362 = sadd.s32 %s360, %s361
      %s363 = smul.addr %s362, 8
      %s364 = scalar_lea.vmem %s2, %s363
      %p365 = pneg %p121
      %p366 = pneg %p118
      %p367 = pneg %p142
      %p368 = pneg %p139
      %p369 = pneg %p163
      %p370 = pneg %p160
      %p371 = pneg %p184
      %p372 = pneg %p181
      %p373 = pneg %p205
      %p374 = pneg %p202
      %p375 = pneg %p233
      %p376 = pneg %p230
      %s377 = smul.u32 8, %s23
      %p378 = scmp.lt.s32.totalorder %s22, 1
      %s379 = scalar_select %p378, %s22, 1
      %p380 = scmp.lt.s32.totalorder %s377, 15
      %s381 = scalar_select %p380, %s377, 15
      %s382 = smul.addr %s381, 2
      %s383 = smul.addr %s379, 32
      %s384 = sadd.s32 %s382, %s383
      %s385 = smul.addr %s384, 8
      %s386 = scalar_lea.vmem %s7, %s385
      %s387 = smul.u32 8, %s23
      %p388 = scmp.lt.s32.totalorder %s22, 1
      %s389 = scalar_select %p388, %s22, 1
      %p390 = scmp.lt.s32.totalorder %s387, 15
      %s391 = scalar_select %p390, %s387, 15
      %s392 = smul.addr %s391, 2
      %s393 = smul.addr %s389, 32
      %s394 = sadd.s32 %s392, %s393
      %s395 = smul.addr %s394, 8
      %s396 = scalar_lea.vmem %s0, %s395
      %s397 = smul.u32 8, %s23
      %s398 = ssub.s32 %s23, 1
      %p399 = scmp.gt.s32.totalorder %s398, 0
      %s400 = scalar_select %p399, %s398, 0
      %s401 = smul.u32 8, %s400
      %p402 = scmp.lt.s32.totalorder %s22, 1
      %s403 = scalar_select %p402, %s22, 1
      %p404 = scmp.lt.s32.totalorder %s401, 15
      %s405 = scalar_select %p404, %s401, 15
      %s406 = smul.addr %s405, 2
      %s407 = smul.addr %s403, 32
      %s408 = sadd.s32 %s406, %s407
      %s409 = smul.addr %s408, 8
      %s410 = scalar_lea.vmem %s1, %s409
      %s411 = ssub.s32 %s23, 1
      %p412 = scmp.gt.s32.totalorder %s411, 0
      %s413 = scalar_select %p412, %s411, 0
      %s414 = smul.u32 8, %s413
      %s415 = sadd.s32 %s23, 1
      %p416 = scmp.lt.s32.totalorder %s415, 1
      %s417 = scalar_select %p416, %s415, 1
      %s418 = smul.u32 8, %s417
      %p419 = scmp.lt.s32.totalorder %s22, 1
      %s420 = scalar_select %p419, %s22, 1
      %p421 = scmp.lt.s32.totalorder %s418, 15
      %s422 = scalar_select %p421, %s418, 15
      %s423 = smul.addr %s422, 2
      %s424 = smul.addr %s420, 32
      %s425 = sadd.s32 %s423, %s424
      %s426 = smul.addr %s425, 8
      %s427 = scalar_lea.vmem %s2, %s426
      %s428 = sadd.s32 %s23, 1
      %p429 = scmp.lt.s32.totalorder %s428, 1
      %s430 = scalar_select %p429, %s428, 1
      %s431 = smul.u32 8, %s430
      %s432 = smul.u32 8, %s23
      %p433 = scmp.lt.s32.totalorder %s22, 1
      %s434 = scalar_select %p433, %s22, 1
      %p435 = scmp.lt.s32.totalorder %s432, 15
      %s436 = scalar_select %p435, %s432, 15
      %s437 = smul.addr %s436, 2
      %s438 = smul.addr %s434, 32
      %s439 = sadd.s32 %s437, %s438
      %s440 = smul.addr %s439, 8
      %s441 = scalar_lea.vmem %s7, %s440
      %s442 = smul.u32 8, %s23
      %p444 = scmp.gt.s32.totalorder %s23, 0
      %s445 = scalar_select %p444, 1.0, 0.0
      %p446 = scmp.lt.s32.totalorder %s23, 1
      %s447 = scalar_select %p446, 1.0, 0.0
      %s448 = scalar_lea.vmem %s410, 112
      %v449 = vld [vmem:[%s448] sm:$0xff]
      %v450 = vld [vmem:[%s448 + $0x8] sm:$0xff]
      %v451 = vstv %s445
      %v452 = vmul.f32 %v449, %v451
      %v453 = vmul.f32 %v450, %v451
      %v454 = vld [vmem:[%s427] sm:$0xff]
      %v455 = vld [vmem:[%s427 + $0x8] sm:$0xff]
      %v456 = vstv %s447
      %v457 = vmul.f32 %v454, %v456
      %v458 = vmul.f32 %v455, %v456
      %v459 = vld [vmem:[%s396] sm:$0xff]
      %v460 = vld [vmem:[%s396 + $0x8] sm:$0xff]
      %v461 = vld [vmem:[%s396 + $0x10] sm:$0xff]
      %v462 = vld [vmem:[%s396 + $0x18] sm:$0xff]
      %v463 = vld [vmem:[%s396 + $0x20] sm:$0xff]
      %v464 = vld [vmem:[%s396 + $0x28] sm:$0xff]
      %v465 = vld [vmem:[%s396 + $0x30] sm:$0xff]
      %v466 = vld [vmem:[%s396 + $0x38] sm:$0xff]
      %v467 = vld [vmem:[%s396 + $0x40] sm:$0xff]
      %v468 = vld [vmem:[%s396 + $0x48] sm:$0xff]
      %v469 = vld [vmem:[%s396 + $0x50] sm:$0xff]
      %v470 = vld [vmem:[%s396 + $0x58] sm:$0xff]
      %v471 = vld [vmem:[%s396 + $0x60] sm:$0xff]
      %v472 = vld [vmem:[%s396 + $0x68] sm:$0xff]
      %v473 = vld [vmem:[%s396 + $0x70] sm:$0xff]
      %v474 = vld [vmem:[%s396 + $0x78] sm:$0xff]
      %v475 = vlaneseq
      %v476 = vshrl.u32 %v475, 7
      %v477 = vadd.s32 %v476, 8
      %v478 = vadd.s32 %v476, 16
      %v479 = vadd.s32 %v476, 24
      %v480 = vadd.s32 %v476, 32
      %v481 = vadd.s32 %v476, 40
      %v482 = vadd.s32 %v476, 48
      %v483 = vadd.s32 %v476, 56
      %v484 = vadd.s32 %v476, 64
      %v485 = vadd.s32 %v476, 72
      %v486 = vadd.s32 %v476, 80
      %v487 = vadd.s32 %v476, 88
      %v488 = vadd.s32 %v476, 96
      %v489 = vadd.s32 %v476, 104
      %v490 = vadd.s32 %v476, 112
      %v491 = vadd.s32 %v476, 120
      %vm492 = vcmp.lt.s32.totalorder %v476, 0
      %v493 = vsub.s32 0, %v476
      %v494 = vsel %vm492, %v493, %v476
      %v495 = vshrl.u32 %v494, 4
      %v496 = vand.u32 %v494, 15
      %v497 = vsub.s32 0, %v496
      %v498 = vsel %vm492, %v497, %v496
      %vm499 = vcmp.lt.s32.totalorder %v477, 0
      %v500 = vsub.s32 0, %v477
      %v501 = vsel %vm499, %v500, %v477
      %v502 = vshrl.u32 %v501, 4
      %v503 = vand.u32 %v501, 15
      %v504 = vsub.s32 0, %v503
      %v505 = vsel %vm499, %v504, %v503
      %vm506 = vcmp.lt.s32.totalorder %v478, 0
      %v507 = vsub.s32 0, %v478
      %v508 = vsel %vm506, %v507, %v478
      %v509 = vshrl.u32 %v508, 4
      %v510 = vand.u32 %v508, 15
      %v511 = vsub.s32 0, %v510
      %v512 = vsel %vm506, %v511, %v510
      %vm513 = vcmp.lt.s32.totalorder %v479, 0
      %v514 = vsub.s32 0, %v479
      %v515 = vsel %vm513, %v514, %v479
      %v516 = vshrl.u32 %v515, 4
      %v517 = vand.u32 %v515, 15
      %v518 = vsub.s32 0, %v517
      %v519 = vsel %vm513, %v518, %v517
      %vm520 = vcmp.lt.s32.totalorder %v480, 0
      %v521 = vsub.s32 0, %v480
      %v522 = vsel %vm520, %v521, %v480
      %v523 = vshrl.u32 %v522, 4
      %v524 = vand.u32 %v522, 15
      %v525 = vsub.s32 0, %v524
      %v526 = vsel %vm520, %v525, %v524
      %vm527 = vcmp.lt.s32.totalorder %v481, 0
      %v528 = vsub.s32 0, %v481
      %v529 = vsel %vm527, %v528, %v481
      %v530 = vshrl.u32 %v529, 4
      %v531 = vand.u32 %v529, 15
      %v532 = vsub.s32 0, %v531
      %v533 = vsel %vm527, %v532, %v531
      %vm534 = vcmp.lt.s32.totalorder %v482, 0
      %v535 = vsub.s32 0, %v482
      %v536 = vsel %vm534, %v535, %v482
      %v537 = vshrl.u32 %v536, 4
      %v538 = vand.u32 %v536, 15
      %v539 = vsub.s32 0, %v538
      %v540 = vsel %vm534, %v539, %v538
      %vm541 = vcmp.lt.s32.totalorder %v483, 0
      %v542 = vsub.s32 0, %v483
      %v543 = vsel %vm541, %v542, %v483
      %v544 = vshrl.u32 %v543, 4
      %v545 = vand.u32 %v543, 15
      %v546 = vsub.s32 0, %v545
      %v547 = vsel %vm541, %v546, %v545
      %vm548 = vcmp.lt.s32.totalorder %v484, 0
      %v549 = vsub.s32 0, %v484
      %v550 = vsel %vm548, %v549, %v484
      %v551 = vshrl.u32 %v550, 4
      %v552 = vand.u32 %v550, 15
      %v553 = vsub.s32 0, %v552
      %v554 = vsel %vm548, %v553, %v552
      %vm555 = vcmp.lt.s32.totalorder %v485, 0
      %v556 = vsub.s32 0, %v485
      %v557 = vsel %vm555, %v556, %v485
      %v558 = vshrl.u32 %v557, 4
      %v559 = vand.u32 %v557, 15
      %v560 = vsub.s32 0, %v559
      %v561 = vsel %vm555, %v560, %v559
      %vm562 = vcmp.lt.s32.totalorder %v486, 0
      %v563 = vsub.s32 0, %v486
      %v564 = vsel %vm562, %v563, %v486
      %v565 = vshrl.u32 %v564, 4
      %v566 = vand.u32 %v564, 15
      %v567 = vsub.s32 0, %v566
      %v568 = vsel %vm562, %v567, %v566
      %vm569 = vcmp.lt.s32.totalorder %v487, 0
      %v570 = vsub.s32 0, %v487
      %v571 = vsel %vm569, %v570, %v487
      %v572 = vshrl.u32 %v571, 4
      %v573 = vand.u32 %v571, 15
      %v574 = vsub.s32 0, %v573
      %v575 = vsel %vm569, %v574, %v573
      %vm576 = vcmp.lt.s32.totalorder %v488, 0
      %v577 = vsub.s32 0, %v488
      %v578 = vsel %vm576, %v577, %v488
      %v579 = vshrl.u32 %v578, 4
      %v580 = vand.u32 %v578, 15
      %v581 = vsub.s32 0, %v580
      %v582 = vsel %vm576, %v581, %v580
      %vm583 = vcmp.lt.s32.totalorder %v489, 0
      %v584 = vsub.s32 0, %v489
      %v585 = vsel %vm583, %v584, %v489
      %v586 = vshrl.u32 %v585, 4
      %v587 = vand.u32 %v585, 15
      %v588 = vsub.s32 0, %v587
      %v589 = vsel %vm583, %v588, %v587
      %vm590 = vcmp.lt.s32.totalorder %v490, 0
      %v591 = vsub.s32 0, %v490
      %v592 = vsel %vm590, %v591, %v490
      %v593 = vshrl.u32 %v592, 4
      %v594 = vand.u32 %v592, 15
      %v595 = vsub.s32 0, %v594
      %v596 = vsel %vm590, %v595, %v594
      %vm597 = vcmp.lt.s32.totalorder %v491, 0
      %v598 = vsub.s32 0, %v491
      %v599 = vsel %vm597, %v598, %v491
      %v600 = vshrl.u32 %v599, 4
      %v601 = vand.u32 %v599, 15
      %v602 = vsub.s32 0, %v601
      %v603 = vsel %vm597, %v602, %v601
      %vm604 = vcmp.ne.s32.totalorder %v498, 0
      %vm605 = vcmp.ne.s32.totalorder %v505, 0
      %vm606 = vcmp.ne.s32.totalorder %v512, 0
      %vm607 = vcmp.ne.s32.totalorder %v519, 0
      %vm608 = vcmp.ne.s32.totalorder %v526, 0
      %vm609 = vcmp.ne.s32.totalorder %v533, 0
      %vm610 = vcmp.ne.s32.totalorder %v540, 0
      %vm611 = vcmp.ne.s32.totalorder %v547, 0
      %vm612 = vcmp.ne.s32.totalorder %v554, 0
      %vm613 = vcmp.ne.s32.totalorder %v561, 0
      %vm614 = vcmp.ne.s32.totalorder %v568, 0
      %vm615 = vcmp.ne.s32.totalorder %v575, 0
      %vm616 = vcmp.ne.s32.totalorder %v582, 0
      %vm617 = vcmp.ne.s32.totalorder %v589, 0
      %vm618 = vcmp.ne.s32.totalorder %v596, 0
      %vm619 = vcmp.ne.s32.totalorder %v603, 0
      %vm620 = vcmp.lt.s32.totalorder %v498, 0
      %vm621 = vcmp.lt.s32.totalorder %v505, 0
      %vm622 = vcmp.lt.s32.totalorder %v512, 0
      %vm623 = vcmp.lt.s32.totalorder %v519, 0
      %vm624 = vcmp.lt.s32.totalorder %v526, 0
      %vm625 = vcmp.lt.s32.totalorder %v533, 0
      %vm626 = vcmp.lt.s32.totalorder %v540, 0
      %vm627 = vcmp.lt.s32.totalorder %v547, 0
      %vm628 = vcmp.lt.s32.totalorder %v554, 0
      %vm629 = vcmp.lt.s32.totalorder %v561, 0
      %vm630 = vcmp.lt.s32.totalorder %v568, 0
      %vm631 = vcmp.lt.s32.totalorder %v575, 0
      %vm632 = vcmp.lt.s32.totalorder %v582, 0
      %vm633 = vcmp.lt.s32.totalorder %v589, 0
      %vm634 = vcmp.lt.s32.totalorder %v596, 0
      %vm635 = vcmp.lt.s32.totalorder %v603, 0
      %vm636 = vmand %vm620, %vm604
      %vm637 = vmand %vm621, %vm605
      %vm638 = vmand %vm622, %vm606
      %vm639 = vmand %vm623, %vm607
      %vm640 = vmand %vm624, %vm608
      %vm641 = vmand %vm625, %vm609
      %vm642 = vmand %vm626, %vm610
      %vm643 = vmand %vm627, %vm611
      %vm644 = vmand %vm628, %vm612
      %vm645 = vmand %vm629, %vm613
      %vm646 = vmand %vm630, %vm614
      %vm647 = vmand %vm631, %vm615
      %vm648 = vmand %vm632, %vm616
      %vm649 = vmand %vm633, %vm617
      %vm650 = vmand %vm634, %vm618
      %vm651 = vmand %vm635, %vm619
      %v652 = vadd.s32 %v498, 16
      %v653 = vadd.s32 %v505, 16
      %v654 = vadd.s32 %v512, 16
      %v655 = vadd.s32 %v519, 16
      %v656 = vadd.s32 %v526, 16
      %v657 = vadd.s32 %v533, 16
      %v658 = vadd.s32 %v540, 16
      %v659 = vadd.s32 %v547, 16
      %v660 = vadd.s32 %v554, 16
      %v661 = vadd.s32 %v561, 16
      %v662 = vadd.s32 %v568, 16
      %v663 = vadd.s32 %v575, 16
      %v664 = vadd.s32 %v582, 16
      %v665 = vadd.s32 %v589, 16
      %v666 = vadd.s32 %v596, 16
      %v667 = vadd.s32 %v603, 16
      %v668 = vsel %vm636, %v652, %v498
      %v669 = vsel %vm637, %v653, %v505
      %v670 = vsel %vm638, %v654, %v512
      %v671 = vsel %vm639, %v655, %v519
      %v672 = vsel %vm640, %v656, %v526
      %v673 = vsel %vm641, %v657, %v533
      %v674 = vsel %vm642, %v658, %v540
      %v675 = vsel %vm643, %v659, %v547
      %v676 = vsel %vm644, %v660, %v554
      %v677 = vsel %vm645, %v661, %v561
      %v678 = vsel %vm646, %v662, %v568
      %v679 = vsel %vm647, %v663, %v575
      %v680 = vsel %vm648, %v664, %v582
      %v681 = vsel %vm649, %v665, %v589
      %v682 = vsel %vm650, %v666, %v596
      %v683 = vsel %vm651, %v667, %v603
      %vm684 = vcmp.gt.s32.totalorder %v668, 0
      %vm685 = vcmp.gt.s32.totalorder %v669, 0
      %vm686 = vcmp.gt.s32.totalorder %v670, 0
      %vm687 = vcmp.gt.s32.totalorder %v671, 0
      %vm688 = vcmp.gt.s32.totalorder %v672, 0
      %vm689 = vcmp.gt.s32.totalorder %v673, 0
      %vm690 = vcmp.gt.s32.totalorder %v674, 0
      %vm691 = vcmp.gt.s32.totalorder %v675, 0
      %vm692 = vcmp.gt.s32.totalorder %v676, 0
      %vm693 = vcmp.gt.s32.totalorder %v677, 0
      %vm694 = vcmp.gt.s32.totalorder %v678, 0
      %vm695 = vcmp.gt.s32.totalorder %v679, 0
      %vm696 = vcmp.gt.s32.totalorder %v680, 0
      %vm697 = vcmp.gt.s32.totalorder %v681, 0
      %vm698 = vcmp.gt.s32.totalorder %v682, 0
      %vm699 = vcmp.gt.s32.totalorder %v683, 0
      %vm700 = vcmp.lt.s32.totalorder %v668, 15
      %vm701 = vcmp.lt.s32.totalorder %v669, 15
      %vm702 = vcmp.lt.s32.totalorder %v670, 15
      %vm703 = vcmp.lt.s32.totalorder %v671, 15
      %vm704 = vcmp.lt.s32.totalorder %v672, 15
      %vm705 = vcmp.lt.s32.totalorder %v673, 15
      %vm706 = vcmp.lt.s32.totalorder %v674, 15
      %vm707 = vcmp.lt.s32.totalorder %v675, 15
      %vm708 = vcmp.lt.s32.totalorder %v676, 15
      %vm709 = vcmp.lt.s32.totalorder %v677, 15
      %vm710 = vcmp.lt.s32.totalorder %v678, 15
      %vm711 = vcmp.lt.s32.totalorder %v679, 15
      %vm712 = vcmp.lt.s32.totalorder %v680, 15
      %vm713 = vcmp.lt.s32.totalorder %v681, 15
      %vm714 = vcmp.lt.s32.totalorder %v682, 15
      %vm715 = vcmp.lt.s32.totalorder %v683, 15
      %v716 = vrot.slane %v452, 7
      %v717 = vrot.slane %v453, 7
      %v718 = vrot.slane %v459, 7
      %v719 = vrot.slane %v460, 7
      %v720 = vrot.slane %v461, 7
      %v721 = vrot.slane %v462, 7
      %v722 = vrot.slane %v463, 7
      %v723 = vrot.slane %v464, 7
      %v724 = vrot.slane %v465, 7
      %v725 = vrot.slane %v466, 7
      %v726 = vrot.slane %v467, 7
      %v727 = vrot.slane %v468, 7
      %v728 = vrot.slane %v469, 7
      %v729 = vrot.slane %v470, 7
      %v730 = vrot.slane %v471, 7
      %v731 = vrot.slane %v472, 7
      %vm732 = vcmp.lt.s32.totalorder %v476, 1
      %v733 = vsel %vm732, %v730, %v731
      %v734 = vsel %vm732, %v729, %v730
      %v735 = vsel %vm732, %v728, %v729
      %v736 = vsel %vm732, %v727, %v728
      %v737 = vsel %vm732, %v726, %v727
      %v738 = vsel %vm732, %v725, %v726
      %v739 = vsel %vm732, %v724, %v725
      %v740 = vsel %vm732, %v723, %v724
      %v741 = vsel %vm732, %v722, %v723
      %v742 = vsel %vm732, %v721, %v722
      %v743 = vsel %vm732, %v720, %v721
      %v744 = vsel %vm732, %v719, %v720
      %v745 = vsel %vm732, %v718, %v719
      %v746 = vsel %vm732, %v717, %v718
      %v747 = vsel %vm732, %v716, %v717
      %v748 = vsel %vm732, %v731, %v716
      %v749 = vsel %vm684, %v748, 0.0
      %v750 = vsel %vm685, %v747, 0.0
      %v751 = vsel %vm686, %v746, 0.0
      %v752 = vsel %vm687, %v745, 0.0
      %v753 = vsel %vm688, %v744, 0.0
      %v754 = vsel %vm689, %v743, 0.0
      %v755 = vsel %vm690, %v742, 0.0
      %v756 = vsel %vm691, %v741, 0.0
      %v757 = vsel %vm692, %v740, 0.0
      %v758 = vsel %vm693, %v739, 0.0
      %v759 = vsel %vm694, %v738, 0.0
      %v760 = vsel %vm695, %v737, 0.0
      %v761 = vsel %vm696, %v736, 0.0
      %v762 = vsel %vm697, %v735, 0.0
      %v763 = vsel %vm698, %v734, 0.0
      %v764 = vsel %vm699, %v733, 0.0
      %v765 = vrot.slane %v452, 1
      %v766 = vrot.slane %v453, 1
      %v767 = vrot.slane %v459, 1
      %v768 = vrot.slane %v460, 1
      %v769 = vrot.slane %v461, 1
      %v770 = vrot.slane %v462, 1
      %v771 = vrot.slane %v463, 1
      %v772 = vrot.slane %v464, 1
      %v773 = vrot.slane %v465, 1
      %v774 = vrot.slane %v466, 1
      %v775 = vrot.slane %v467, 1
      %v776 = vrot.slane %v468, 1
      %v777 = vrot.slane %v469, 1
      %v778 = vrot.slane %v470, 1
      %v779 = vrot.slane %v471, 1
      %v780 = vrot.slane %v472, 1
      %vm781 = vcmp.lt.s32.totalorder %v476, 7
      %v782 = vsel %vm781, %v779, %v780
      %v783 = vsel %vm781, %v778, %v779
      %v784 = vsel %vm781, %v777, %v778
      %v785 = vsel %vm781, %v776, %v777
      %v786 = vsel %vm781, %v775, %v776
      %v787 = vsel %vm781, %v774, %v775
      %v788 = vsel %vm781, %v773, %v774
      %v789 = vsel %vm781, %v772, %v773
      %v790 = vsel %vm781, %v771, %v772
      %v791 = vsel %vm781, %v770, %v771
      %v792 = vsel %vm781, %v769, %v770
      %v793 = vsel %vm781, %v768, %v769
      %v794 = vsel %vm781, %v767, %v768
      %v795 = vsel %vm781, %v766, %v767
      %v796 = vsel %vm781, %v765, %v766
      %v797 = vsel %vm781, %v780, %v765
      %v798 = vsel %vm700, %v796, 0.0
      %v799 = vsel %vm701, %v795, 0.0
      %v800 = vsel %vm702, %v794, 0.0
      %v801 = vsel %vm703, %v793, 0.0
      %v802 = vsel %vm704, %v792, 0.0
      %v803 = vsel %vm705, %v791, 0.0
      %v804 = vsel %vm706, %v790, 0.0
      %v805 = vsel %vm707, %v789, 0.0
      %v806 = vsel %vm708, %v788, 0.0
      %v807 = vsel %vm709, %v787, 0.0
      %v808 = vsel %vm710, %v786, 0.0
      %v809 = vsel %vm711, %v785, 0.0
      %v810 = vsel %vm712, %v784, 0.0
      %v811 = vsel %vm713, %v783, 0.0
      %v812 = vsel %vm714, %v782, 0.0
      %v813 = vsel %vm715, %v797, 0.0
      %v814 = vpack.c.bf16 %v750, %v749
      %v815 = vpack.c.bf16 %v752, %v751
      %v816 = vpack.c.bf16 %v754, %v753
      %v817 = vpack.c.bf16 %v756, %v755
      %v818 = vpack.c.bf16 %v758, %v757
      %v819 = vpack.c.bf16 %v760, %v759
      %v820 = vpack.c.bf16 %v762, %v761
      %v821 = vpack.c.bf16 %v764, %v763
      %v822 = vld [vmem:[%s3] sm:$0xf]
      %v823 = vld [vmem:[%s3 + $0x4] sm:$0xf]
      %v824 = vpack.c.bf16 %v453, %v452
      %v825 = vpack.c.bf16 %v460, %v459
      %v826 = vpack.c.bf16 %v462, %v461
      %v827 = vpack.c.bf16 %v464, %v463
      %v828 = vpack.c.bf16 %v466, %v465
      %v829 = vpack.c.bf16 %v468, %v467
      %v830 = vpack.c.bf16 %v470, %v469
      %v831 = vpack.c.bf16 %v472, %v471
      %s832 = scalar_lea.vmem %s3, 8
      %v833 = vld [vmem:[%s832] sm:$0xf]
      %v834 = vld [vmem:[%s832 + $0x4] sm:$0xf]
      %v837 = vunpack.c.l.b16 %v833
      %v838 = vunpack.c.l.b16 %v834
      %v839 = vpack.c.b16 %v838, %v837
      %vm841 = vcmask 130048
      %v843 = vsel %vm841, %v824, 0
      %v846 = vsel %vm841, %v825, 0
      %v849 = vsel %vm841, %v826, 0
      %v852 = vsel %vm841, %v827, 0
      %v855 = vsel %vm841, %v828, 0
      %v858 = vsel %vm841, %v829, 0
      %v861 = vsel %vm841, %v830, 0
      %v864 = vsel %vm841, %v831, 0
      %866 = vmatpush.bf16.msra.mxu0 0
      %867 = vmatpush.bf16.msra.mxu0 0
      %868 = vmatpush.bf16.msra.mxu0 0
      %869 = vmatpush.bf16.msra.mxu0 0
      %870 = vmatpush.bf16.msra.mxu0 0
      %871 = vmatpush.bf16.msra.mxu0 0
      %872 = vmatpush.bf16.msra.mxu0 0
      %873 = vmatpush.bf16.msra.mxu0 %v839
      %874 = vmatmul.bf16.gmra.mxu0 %v843
      %v875 = vpop.f32.mrf.mxu0
      %v876 = vadd.f32 0.0, %v875
      %v877 = vpop.f32.mrf.mxu0
      %v878 = vadd.f32 0.0, %v877
      %879 = vmatmul.bf16.gmra.mxu0 %v846
      %v880 = vpop.f32.mrf.mxu0
      %v881 = vadd.f32 0.0, %v880
      %v882 = vpop.f32.mrf.mxu0
      %v883 = vadd.f32 0.0, %v882
      %884 = vmatmul.bf16.gmra.mxu0 %v849
      %v885 = vpop.f32.mrf.mxu0
      %v886 = vadd.f32 0.0, %v885
      %v887 = vpop.f32.mrf.mxu0
      %v888 = vadd.f32 0.0, %v887
      %889 = vmatmul.bf16.gmra.mxu0 %v852
      %v890 = vpop.f32.mrf.mxu0
      %v891 = vadd.f32 0.0, %v890
      %v892 = vpop.f32.mrf.mxu0
      %v893 = vadd.f32 0.0, %v892
      %894 = vmatmul.bf16.gmra.mxu0 %v855
      %v895 = vpop.f32.mrf.mxu0
      %v896 = vadd.f32 0.0, %v895
      %v897 = vpop.f32.mrf.mxu0
      %v898 = vadd.f32 0.0, %v897
      %899 = vmatmul.bf16.gmra.mxu0 %v858
      %v900 = vpop.f32.mrf.mxu0
      %v901 = vadd.f32 0.0, %v900
      %v902 = vpop.f32.mrf.mxu0
      %v903 = vadd.f32 0.0, %v902
      %904 = vmatmul.bf16.gmra.mxu0 %v861
      %v905 = vpop.f32.mrf.mxu0
      %v906 = vadd.f32 0.0, %v905
      %v907 = vpop.f32.mrf.mxu0
      %v908 = vadd.f32 0.0, %v907
      %909 = vmatmul.bf16.gmra.mxu0 %v864
      %v910 = vpop.f32.mrf.mxu0
      %v911 = vadd.f32 0.0, %v910
      %v912 = vpop.f32.mrf.mxu0
      %v913 = vadd.f32 0.0, %v912
      %914 = vdwg.mxu0
      %v917 = vunpack.c.l.b16 %v822
      %v918 = vunpack.c.l.b16 %v823
      %v919 = vpack.c.b16 %v918, %v917
      %v922 = vsel %vm841, %v814, 0
      %v925 = vsel %vm841, %v815, 0
      %v928 = vsel %vm841, %v816, 0
      %v931 = vsel %vm841, %v817, 0
      %v934 = vsel %vm841, %v818, 0
      %v937 = vsel %vm841, %v819, 0
      %v940 = vsel %vm841, %v820, 0
      %v943 = vsel %vm841, %v821, 0
      %945 = vmatpush.bf16.msra.mxu0 0
      %946 = vmatpush.bf16.msra.mxu0 0
      %947 = vmatpush.bf16.msra.mxu0 0
      %948 = vmatpush.bf16.msra.mxu0 0
      %949 = vmatpush.bf16.msra.mxu0 0
      %950 = vmatpush.bf16.msra.mxu0 0
      %951 = vmatpush.bf16.msra.mxu0 0
      %952 = vmatpush.bf16.msra.mxu0 %v919
      %953 = vmatmul.bf16.gmra.mxu0 %v922
      %v954 = vpop.f32.mrf.mxu0
      %v955 = vadd.f32 %v876, %v954
      %v956 = vpop.f32.mrf.mxu0
      %v957 = vadd.f32 %v878, %v956
      %958 = vmatmul.bf16.gmra.mxu0 %v925
      %v959 = vpop.f32.mrf.mxu0
      %v960 = vadd.f32 %v881, %v959
      %v961 = vpop.f32.mrf.mxu0
      %v962 = vadd.f32 %v883, %v961
      %963 = vmatmul.bf16.gmra.mxu0 %v928
      %v964 = vpop.f32.mrf.mxu0
      %v965 = vadd.f32 %v886, %v964
      %v966 = vpop.f32.mrf.mxu0
      %v967 = vadd.f32 %v888, %v966
      %968 = vmatmul.bf16.gmra.mxu0 %v931
      %v969 = vpop.f32.mrf.mxu0
      %v970 = vadd.f32 %v891, %v969
      %v971 = vpop.f32.mrf.mxu0
      %v972 = vadd.f32 %v893, %v971
      %973 = vmatmul.bf16.gmra.mxu0 %v934
      %v974 = vpop.f32.mrf.mxu0
      %v975 = vadd.f32 %v896, %v974
      %v976 = vpop.f32.mrf.mxu0
      %v977 = vadd.f32 %v898, %v976
      %978 = vmatmul.bf16.gmra.mxu0 %v937
      %v979 = vpop.f32.mrf.mxu0
      %v980 = vadd.f32 %v901, %v979
      %v981 = vpop.f32.mrf.mxu0
      %v982 = vadd.f32 %v903, %v981
      %983 = vmatmul.bf16.gmra.mxu0 %v940
      %v984 = vpop.f32.mrf.mxu0
      %v985 = vadd.f32 %v906, %v984
      %v986 = vpop.f32.mrf.mxu0
      %v987 = vadd.f32 %v908, %v986
      %988 = vmatmul.bf16.gmra.mxu0 %v943
      %v989 = vpop.f32.mrf.mxu0
      %v990 = vadd.f32 %v911, %v989
      %v991 = vpop.f32.mrf.mxu0
      %v992 = vadd.f32 %v913, %v991
      %993 = vdwg.mxu0
      %v994 = vpack.c.bf16 %v799, %v798
      %v995 = vpack.c.bf16 %v801, %v800
      %v996 = vpack.c.bf16 %v803, %v802
      %v997 = vpack.c.bf16 %v805, %v804
      %v998 = vpack.c.bf16 %v807, %v806
      %v999 = vpack.c.bf16 %v809, %v808
      %v1000 = vpack.c.bf16 %v811, %v810
      %v1001 = vpack.c.bf16 %v813, %v812
      %s1002 = scalar_lea.vmem %s3, 16
      %v1003 = vld [vmem:[%s1002] sm:$0xf]
      %v1004 = vld [vmem:[%s1002 + $0x4] sm:$0xf]
      %v1007 = vunpack.c.l.b16 %v1003
      %v1008 = vunpack.c.l.b16 %v1004
      %v1009 = vpack.c.b16 %v1008, %v1007
      %v1012 = vsel %vm841, %v994, 0
      %v1015 = vsel %vm841, %v995, 0
      %v1018 = vsel %vm841, %v996, 0
      %v1021 = vsel %vm841, %v997, 0
      %v1024 = vsel %vm841, %v998, 0
      %v1027 = vsel %vm841, %v999, 0
      %v1030 = vsel %vm841, %v1000, 0
      %v1033 = vsel %vm841, %v1001, 0
      %1035 = vmatpush.bf16.msra.mxu0 0
      %1036 = vmatpush.bf16.msra.mxu0 0
      %1037 = vmatpush.bf16.msra.mxu0 0
      %1038 = vmatpush.bf16.msra.mxu0 0
      %1039 = vmatpush.bf16.msra.mxu0 0
      %1040 = vmatpush.bf16.msra.mxu0 0
      %1041 = vmatpush.bf16.msra.mxu0 0
      %1042 = vmatpush.bf16.msra.mxu0 %v1009
      %1043 = vmatmul.bf16.gmra.mxu0 %v1012
      %v1044 = vpop.f32.mrf.mxu0
      %v1045 = vadd.f32 0.0, %v1044
      %v1046 = vpop.f32.mrf.mxu0
      %v1047 = vadd.f32 0.0, %v1046
      %1048 = vmatmul.bf16.gmra.mxu0 %v1015
      %v1049 = vpop.f32.mrf.mxu0
      %v1050 = vadd.f32 0.0, %v1049
      %v1051 = vpop.f32.mrf.mxu0
      %v1052 = vadd.f32 0.0, %v1051
      %1053 = vmatmul.bf16.gmra.mxu0 %v1018
      %v1054 = vpop.f32.mrf.mxu0
      %v1055 = vadd.f32 0.0, %v1054
      %v1056 = vpop.f32.mrf.mxu0
      %v1057 = vadd.f32 0.0, %v1056
      %1058 = vmatmul.bf16.gmra.mxu0 %v1021
      %v1059 = vpop.f32.mrf.mxu0
      %v1060 = vadd.f32 0.0, %v1059
      %v1061 = vpop.f32.mrf.mxu0
      %v1062 = vadd.f32 0.0, %v1061
      %1063 = vmatmul.bf16.gmra.mxu0 %v1024
      %v1064 = vpop.f32.mrf.mxu0
      %v1065 = vadd.f32 0.0, %v1064
      %v1066 = vpop.f32.mrf.mxu0
      %v1067 = vadd.f32 0.0, %v1066
      %1068 = vmatmul.bf16.gmra.mxu0 %v1027
      %v1069 = vpop.f32.mrf.mxu0
      %v1070 = vadd.f32 0.0, %v1069
      %v1071 = vpop.f32.mrf.mxu0
      %v1072 = vadd.f32 0.0, %v1071
      %1073 = vmatmul.bf16.gmra.mxu0 %v1030
      %v1074 = vpop.f32.mrf.mxu0
      %v1075 = vadd.f32 0.0, %v1074
      %v1076 = vpop.f32.mrf.mxu0
      %v1077 = vadd.f32 0.0, %v1076
      %1078 = vmatmul.bf16.gmra.mxu0 %v1033
      %v1079 = vpop.f32.mrf.mxu0
      %v1080 = vadd.f32 0.0, %v1079
      %v1081 = vpop.f32.mrf.mxu0
      %v1082 = vadd.f32 0.0, %v1081
      %1083 = vdwg.mxu0
      %v1084 = vadd.f32 %v955, %v1045
      %v1085 = vadd.f32 %v957, %v1047
      %v1086 = vadd.f32 %v960, %v1050
      %v1087 = vadd.f32 %v962, %v1052
      %v1088 = vadd.f32 %v965, %v1055
      %v1089 = vadd.f32 %v967, %v1057
      %v1090 = vadd.f32 %v970, %v1060
      %v1091 = vadd.f32 %v972, %v1062
      %v1092 = vadd.f32 %v975, %v1065
      %v1093 = vadd.f32 %v977, %v1067
      %v1094 = vadd.f32 %v980, %v1070
      %v1095 = vadd.f32 %v982, %v1072
      %v1096 = vadd.f32 %v985, %v1075
      %v1097 = vadd.f32 %v987, %v1077
      %v1098 = vadd.f32 %v990, %v1080
      %v1099 = vadd.f32 %v992, %v1082
      %v1100 = vrot.slane %v473, 7
      %v1101 = vrot.slane %v474, 7
      %v1102 = vsel %vm732, %v1100, %v1101
      %v1103 = vsel %vm732, %v731, %v1100
      %v1104 = vsel %vm732, %v1101, %v718
      %v1105 = vsel %vm684, %v1104, 0.0
      %v1106 = vsel %vm685, %v745, 0.0
      %v1107 = vsel %vm686, %v744, 0.0
      %v1108 = vsel %vm687, %v743, 0.0
      %v1109 = vsel %vm688, %v742, 0.0
      %v1110 = vsel %vm689, %v741, 0.0
      %v1111 = vsel %vm690, %v740, 0.0
      %v1112 = vsel %vm691, %v739, 0.0
      %v1113 = vsel %vm692, %v738, 0.0
      %v1114 = vsel %vm693, %v737, 0.0
      %v1115 = vsel %vm694, %v736, 0.0
      %v1116 = vsel %vm695, %v735, 0.0
      %v1117 = vsel %vm696, %v734, 0.0
      %v1118 = vsel %vm697, %v733, 0.0
      %v1119 = vsel %vm698, %v1103, 0.0
      %v1120 = vsel %vm699, %v1102, 0.0
      %v1121 = vrot.slane %v473, 1
      %v1122 = vrot.slane %v474, 1
      %v1123 = vsel %vm781, %v1121, %v1122
      %v1124 = vsel %vm781, %v780, %v1121
      %v1125 = vsel %vm781, %v1122, %v767
      %v1126 = vsel %vm700, %v794, 0.0
      %v1127 = vsel %vm701, %v793, 0.0
      %v1128 = vsel %vm702, %v792, 0.0
      %v1129 = vsel %vm703, %v791, 0.0
      %v1130 = vsel %vm704, %v790, 0.0
      %v1131 = vsel %vm705, %v789, 0.0
      %v1132 = vsel %vm706, %v788, 0.0
      %v1133 = vsel %vm707, %v787, 0.0
      %v1134 = vsel %vm708, %v786, 0.0
      %v1135 = vsel %vm709, %v785, 0.0
      %v1136 = vsel %vm710, %v784, 0.0
      %v1137 = vsel %vm711, %v783, 0.0
      %v1138 = vsel %vm712, %v782, 0.0
      %v1139 = vsel %vm713, %v1124, 0.0
      %v1140 = vsel %vm714, %v1123, 0.0
      %v1141 = vsel %vm715, %v1125, 0.0
      %v1142 = vpack.c.bf16 %v1106, %v1105
      %v1143 = vpack.c.bf16 %v1108, %v1107
      %v1144 = vpack.c.bf16 %v1110, %v1109
      %v1145 = vpack.c.bf16 %v1112, %v1111
      %v1146 = vpack.c.bf16 %v1114, %v1113
      %v1147 = vpack.c.bf16 %v1116, %v1115
      %v1148 = vpack.c.bf16 %v1118, %v1117
      %v1149 = vpack.c.bf16 %v1120, %v1119
      %s1150 = scalar_lea.vmem %s3, 24
      %v1151 = vld [vmem:[%s1150] sm:$0xf]
      %v1152 = vld [vmem:[%s1150 + $0x4] sm:$0xf]
      %v1155 = vunpack.c.l.b16 %v1151
      %v1156 = vunpack.c.l.b16 %v1152
      %v1157 = vpack.c.b16 %v1156, %v1155
      %v1160 = vsel %vm841, %v1142, 0
      %v1163 = vsel %vm841, %v1143, 0
      %v1166 = vsel %vm841, %v1144, 0
      %v1169 = vsel %vm841, %v1145, 0
      %v1172 = vsel %vm841, %v1146, 0
      %v1175 = vsel %vm841, %v1147, 0
      %v1178 = vsel %vm841, %v1148, 0
      %v1181 = vsel %vm841, %v1149, 0
      %1183 = vmatpush.bf16.msra.mxu0 0
      %1184 = vmatpush.bf16.msra.mxu0 0
      %1185 = vmatpush.bf16.msra.mxu0 0
      %1186 = vmatpush.bf16.msra.mxu0 0
      %1187 = vmatpush.bf16.msra.mxu0 0
      %1188 = vmatpush.bf16.msra.mxu0 0
      %1189 = vmatpush.bf16.msra.mxu0 0
      %1190 = vmatpush.bf16.msra.mxu0 %v1157
      %1191 = vmatmul.bf16.gmra.mxu0 %v1160
      %v1192 = vpop.f32.mrf.mxu0
      %v1193 = vadd.f32 0.0, %v1192
      %v1194 = vpop.f32.mrf.mxu0
      %v1195 = vadd.f32 0.0, %v1194
      %1196 = vmatmul.bf16.gmra.mxu0 %v1163
      %v1197 = vpop.f32.mrf.mxu0
      %v1198 = vadd.f32 0.0, %v1197
      %v1199 = vpop.f32.mrf.mxu0
      %v1200 = vadd.f32 0.0, %v1199
      %1201 = vmatmul.bf16.gmra.mxu0 %v1166
      %v1202 = vpop.f32.mrf.mxu0
      %v1203 = vadd.f32 0.0, %v1202
      %v1204 = vpop.f32.mrf.mxu0
      %v1205 = vadd.f32 0.0, %v1204
      %1206 = vmatmul.bf16.gmra.mxu0 %v1169
      %v1207 = vpop.f32.mrf.mxu0
      %v1208 = vadd.f32 0.0, %v1207
      %v1209 = vpop.f32.mrf.mxu0
      %v1210 = vadd.f32 0.0, %v1209
      %1211 = vmatmul.bf16.gmra.mxu0 %v1172
      %v1212 = vpop.f32.mrf.mxu0
      %v1213 = vadd.f32 0.0, %v1212
      %v1214 = vpop.f32.mrf.mxu0
      %v1215 = vadd.f32 0.0, %v1214
      %1216 = vmatmul.bf16.gmra.mxu0 %v1175
      %v1217 = vpop.f32.mrf.mxu0
      %v1218 = vadd.f32 0.0, %v1217
      %v1219 = vpop.f32.mrf.mxu0
      %v1220 = vadd.f32 0.0, %v1219
      %1221 = vmatmul.bf16.gmra.mxu0 %v1178
      %v1222 = vpop.f32.mrf.mxu0
      %v1223 = vadd.f32 0.0, %v1222
      %v1224 = vpop.f32.mrf.mxu0
      %v1225 = vadd.f32 0.0, %v1224
      %1226 = vmatmul.bf16.gmra.mxu0 %v1181
      %v1227 = vpop.f32.mrf.mxu0
      %v1228 = vadd.f32 0.0, %v1227
      %v1229 = vpop.f32.mrf.mxu0
      %v1230 = vadd.f32 0.0, %v1229
      %1231 = vdwg.mxu0
      %v1232 = vadd.f32 %v1084, %v1193
      %v1233 = vadd.f32 %v1085, %v1195
      %v1234 = vadd.f32 %v1086, %v1198
      %v1235 = vadd.f32 %v1087, %v1200
      %v1236 = vadd.f32 %v1088, %v1203
      %v1237 = vadd.f32 %v1089, %v1205
      %v1238 = vadd.f32 %v1090, %v1208
      %v1239 = vadd.f32 %v1091, %v1210
      %v1240 = vadd.f32 %v1092, %v1213
      %v1241 = vadd.f32 %v1093, %v1215
      %v1242 = vadd.f32 %v1094, %v1218
      %v1243 = vadd.f32 %v1095, %v1220
      %v1244 = vadd.f32 %v1096, %v1223
      %v1245 = vadd.f32 %v1097, %v1225
      %v1246 = vadd.f32 %v1098, %v1228
      %v1247 = vadd.f32 %v1099, %v1230
      %v1248 = vpack.c.bf16 %v474, %v473
      %s1249 = scalar_lea.vmem %s3, 32
      %v1250 = vld [vmem:[%s1249] sm:$0xf]
      %v1251 = vld [vmem:[%s1249 + $0x4] sm:$0xf]
      %v1254 = vunpack.c.l.b16 %v1250
      %v1255 = vunpack.c.l.b16 %v1251
      %v1256 = vpack.c.b16 %v1255, %v1254
      %v1259 = vsel %vm841, %v1248, 0
      %1261 = vmatpush.bf16.msra.mxu0 0
      %1262 = vmatpush.bf16.msra.mxu0 0
      %1263 = vmatpush.bf16.msra.mxu0 0
      %1264 = vmatpush.bf16.msra.mxu0 0
      %1265 = vmatpush.bf16.msra.mxu0 0
      %1266 = vmatpush.bf16.msra.mxu0 0
      %1267 = vmatpush.bf16.msra.mxu0 0
      %1268 = vmatpush.bf16.msra.mxu0 %v1256
      %1269 = vmatmul.bf16.gmra.mxu0 %v846
      %v1270 = vpop.f32.mrf.mxu0
      %v1271 = vadd.f32 0.0, %v1270
      %v1272 = vpop.f32.mrf.mxu0
      %v1273 = vadd.f32 0.0, %v1272
      %1274 = vmatmul.bf16.gmra.mxu0 %v849
      %v1275 = vpop.f32.mrf.mxu0
      %v1276 = vadd.f32 0.0, %v1275
      %v1277 = vpop.f32.mrf.mxu0
      %v1278 = vadd.f32 0.0, %v1277
      %1279 = vmatmul.bf16.gmra.mxu0 %v852
      %v1280 = vpop.f32.mrf.mxu0
      %v1281 = vadd.f32 0.0, %v1280
      %v1282 = vpop.f32.mrf.mxu0
      %v1283 = vadd.f32 0.0, %v1282
      %1284 = vmatmul.bf16.gmra.mxu0 %v855
      %v1285 = vpop.f32.mrf.mxu0
      %v1286 = vadd.f32 0.0, %v1285
      %v1287 = vpop.f32.mrf.mxu0
      %v1288 = vadd.f32 0.0, %v1287
      %1289 = vmatmul.bf16.gmra.mxu0 %v858
      %v1290 = vpop.f32.mrf.mxu0
      %v1291 = vadd.f32 0.0, %v1290
      %v1292 = vpop.f32.mrf.mxu0
      %v1293 = vadd.f32 0.0, %v1292
      %1294 = vmatmul.bf16.gmra.mxu0 %v861
      %v1295 = vpop.f32.mrf.mxu0
      %v1296 = vadd.f32 0.0, %v1295
      %v1297 = vpop.f32.mrf.mxu0
      %v1298 = vadd.f32 0.0, %v1297
      %1299 = vmatmul.bf16.gmra.mxu0 %v864
      %v1300 = vpop.f32.mrf.mxu0
      %v1301 = vadd.f32 0.0, %v1300
      %v1302 = vpop.f32.mrf.mxu0
      %v1303 = vadd.f32 0.0, %v1302
      %1304 = vmatmul.bf16.gmra.mxu0 %v1259
      %v1305 = vpop.f32.mrf.mxu0
      %v1306 = vadd.f32 0.0, %v1305
      %v1307 = vpop.f32.mrf.mxu0
      %v1308 = vadd.f32 0.0, %v1307
      %1309 = vdwg.mxu0
      %v1310 = vadd.f32 %v1232, %v1271
      %v1311 = vadd.f32 %v1233, %v1273
      %v1312 = vadd.f32 %v1234, %v1276
      %v1313 = vadd.f32 %v1235, %v1278
      %v1314 = vadd.f32 %v1236, %v1281
      %v1315 = vadd.f32 %v1237, %v1283
      %v1316 = vadd.f32 %v1238, %v1286
      %v1317 = vadd.f32 %v1239, %v1288
      %v1318 = vadd.f32 %v1240, %v1291
      %v1319 = vadd.f32 %v1241, %v1293
      %v1320 = vadd.f32 %v1242, %v1296
      %v1321 = vadd.f32 %v1243, %v1298
      %v1322 = vadd.f32 %v1244, %v1301
      %v1323 = vadd.f32 %v1245, %v1303
      %v1324 = vadd.f32 %v1246, %v1306
      %v1325 = vadd.f32 %v1247, %v1308
      %v1326 = vpack.c.bf16 %v1127, %v1126
      %v1327 = vpack.c.bf16 %v1129, %v1128
      %v1328 = vpack.c.bf16 %v1131, %v1130
      %v1329 = vpack.c.bf16 %v1133, %v1132
      %v1330 = vpack.c.bf16 %v1135, %v1134
      %v1331 = vpack.c.bf16 %v1137, %v1136
      %v1332 = vpack.c.bf16 %v1139, %v1138
      %v1333 = vpack.c.bf16 %v1141, %v1140
      %s1334 = scalar_lea.vmem %s3, 40
      %v1335 = vld [vmem:[%s1334] sm:$0xf]
      %v1336 = vld [vmem:[%s1334 + $0x4] sm:$0xf]
      %v1339 = vunpack.c.l.b16 %v1335
      %v1340 = vunpack.c.l.b16 %v1336
      %v1341 = vpack.c.b16 %v1340, %v1339
      %v1344 = vsel %vm841, %v1326, 0
      %v1347 = vsel %vm841, %v1327, 0
      %v1350 = vsel %vm841, %v1328, 0
      %v1353 = vsel %vm841, %v1329, 0
      %v1356 = vsel %vm841, %v1330, 0
      %v1359 = vsel %vm841, %v1331, 0
      %v1362 = vsel %vm841, %v1332, 0
      %v1365 = vsel %vm841, %v1333, 0
      %1367 = vmatpush.bf16.msra.mxu0 0
      %1368 = vmatpush.bf16.msra.mxu0 0
      %1369 = vmatpush.bf16.msra.mxu0 0
      %1370 = vmatpush.bf16.msra.mxu0 0
      %1371 = vmatpush.bf16.msra.mxu0 0
      %1372 = vmatpush.bf16.msra.mxu0 0
      %1373 = vmatpush.bf16.msra.mxu0 0
      %1374 = vmatpush.bf16.msra.mxu0 %v1341
      %1375 = vmatmul.bf16.gmra.mxu0 %v1344
      %v1376 = vpop.f32.mrf.mxu0
      %v1377 = vadd.f32 0.0, %v1376
      %v1378 = vpop.f32.mrf.mxu0
      %v1379 = vadd.f32 0.0, %v1378
      %1380 = vmatmul.bf16.gmra.mxu0 %v1347
      %v1381 = vpop.f32.mrf.mxu0
      %v1382 = vadd.f32 0.0, %v1381
      %v1383 = vpop.f32.mrf.mxu0
      %v1384 = vadd.f32 0.0, %v1383
      %1385 = vmatmul.bf16.gmra.mxu0 %v1350
      %v1386 = vpop.f32.mrf.mxu0
      %v1387 = vadd.f32 0.0, %v1386
      %v1388 = vpop.f32.mrf.mxu0
      %v1389 = vadd.f32 0.0, %v1388
      %1390 = vmatmul.bf16.gmra.mxu0 %v1353
      %v1391 = vpop.f32.mrf.mxu0
      %v1392 = vadd.f32 0.0, %v1391
      %v1393 = vpop.f32.mrf.mxu0
      %v1394 = vadd.f32 0.0, %v1393
      %1395 = vmatmul.bf16.gmra.mxu0 %v1356
      %v1396 = vpop.f32.mrf.mxu0
      %v1397 = vadd.f32 0.0, %v1396
      %v1398 = vpop.f32.mrf.mxu0
      %v1399 = vadd.f32 0.0, %v1398
      %1400 = vmatmul.bf16.gmra.mxu0 %v1359
      %v1401 = vpop.f32.mrf.mxu0
      %v1402 = vadd.f32 0.0, %v1401
      %v1403 = vpop.f32.mrf.mxu0
      %v1404 = vadd.f32 0.0, %v1403
      %1405 = vmatmul.bf16.gmra.mxu0 %v1362
      %v1406 = vpop.f32.mrf.mxu0
      %v1407 = vadd.f32 0.0, %v1406
      %v1408 = vpop.f32.mrf.mxu0
      %v1409 = vadd.f32 0.0, %v1408
      %1410 = vmatmul.bf16.gmra.mxu0 %v1365
      %v1411 = vpop.f32.mrf.mxu0
      %v1412 = vadd.f32 0.0, %v1411
      %v1413 = vpop.f32.mrf.mxu0
      %v1414 = vadd.f32 0.0, %v1413
      %1415 = vdwg.mxu0
      %v1416 = vadd.f32 %v1310, %v1377
      %v1417 = vadd.f32 %v1311, %v1379
      %v1418 = vadd.f32 %v1312, %v1382
      %v1419 = vadd.f32 %v1313, %v1384
      %v1420 = vadd.f32 %v1314, %v1387
      %v1421 = vadd.f32 %v1315, %v1389
      %v1422 = vadd.f32 %v1316, %v1392
      %v1423 = vadd.f32 %v1317, %v1394
      %v1424 = vadd.f32 %v1318, %v1397
      %v1425 = vadd.f32 %v1319, %v1399
      %v1426 = vadd.f32 %v1320, %v1402
      %v1427 = vadd.f32 %v1321, %v1404
      %v1428 = vadd.f32 %v1322, %v1407
      %v1429 = vadd.f32 %v1323, %v1409
      %v1430 = vadd.f32 %v1324, %v1412
      %v1431 = vadd.f32 %v1325, %v1414
      %v1432 = vrot.slane %v457, 7
      %v1433 = vrot.slane %v458, 7
      %v1434 = vsel %vm732, %v1432, %v1433
      %v1435 = vsel %vm732, %v1101, %v1432
      %v1436 = vsel %vm732, %v1433, %v720
      %v1437 = vsel %vm684, %v1436, 0.0
      %v1438 = vsel %vm685, %v743, 0.0
      %v1439 = vsel %vm686, %v742, 0.0
      %v1440 = vsel %vm687, %v741, 0.0
      %v1441 = vsel %vm688, %v740, 0.0
      %v1442 = vsel %vm689, %v739, 0.0
      %v1443 = vsel %vm690, %v738, 0.0
      %v1444 = vsel %vm691, %v737, 0.0
      %v1445 = vsel %vm692, %v736, 0.0
      %v1446 = vsel %vm693, %v735, 0.0
      %v1447 = vsel %vm694, %v734, 0.0
      %v1448 = vsel %vm695, %v733, 0.0
      %v1449 = vsel %vm696, %v1103, 0.0
      %v1450 = vsel %vm697, %v1102, 0.0
      %v1451 = vsel %vm698, %v1435, 0.0
      %v1452 = vsel %vm699, %v1434, 0.0
      %v1453 = vrot.slane %v457, 1
      %v1454 = vrot.slane %v458, 1
      %v1455 = vsel %vm781, %v1453, %v1454
      %v1456 = vsel %vm781, %v1122, %v1453
      %v1457 = vsel %vm781, %v1454, %v769
      %v1458 = vsel %vm700, %v792, 0.0
      %v1459 = vsel %vm701, %v791, 0.0
      %v1460 = vsel %vm702, %v790, 0.0
      %v1461 = vsel %vm703, %v789, 0.0
      %v1462 = vsel %vm704, %v788, 0.0
      %v1463 = vsel %vm705, %v787, 0.0
      %v1464 = vsel %vm706, %v786, 0.0
      %v1465 = vsel %vm707, %v785, 0.0
      %v1466 = vsel %vm708, %v784, 0.0
      %v1467 = vsel %vm709, %v783, 0.0
      %v1468 = vsel %vm710, %v782, 0.0
      %v1469 = vsel %vm711, %v1124, 0.0
      %v1470 = vsel %vm712, %v1123, 0.0
      %v1471 = vsel %vm713, %v1456, 0.0
      %v1472 = vsel %vm714, %v1455, 0.0
      %v1473 = vsel %vm715, %v1457, 0.0
      %v1474 = vpack.c.bf16 %v1438, %v1437
      %v1475 = vpack.c.bf16 %v1440, %v1439
      %v1476 = vpack.c.bf16 %v1442, %v1441
      %v1477 = vpack.c.bf16 %v1444, %v1443
      %v1478 = vpack.c.bf16 %v1446, %v1445
      %v1479 = vpack.c.bf16 %v1448, %v1447
      %v1480 = vpack.c.bf16 %v1450, %v1449
      %v1481 = vpack.c.bf16 %v1452, %v1451
      %s1482 = scalar_lea.vmem %s3, 48
      %v1483 = vld [vmem:[%s1482] sm:$0xf]
      %v1484 = vld [vmem:[%s1482 + $0x4] sm:$0xf]
      %v1487 = vunpack.c.l.b16 %v1483
      %v1488 = vunpack.c.l.b16 %v1484
      %v1489 = vpack.c.b16 %v1488, %v1487
      %v1492 = vsel %vm841, %v1474, 0
      %v1495 = vsel %vm841, %v1475, 0
      %v1498 = vsel %vm841, %v1476, 0
      %v1501 = vsel %vm841, %v1477, 0
      %v1504 = vsel %vm841, %v1478, 0
      %v1507 = vsel %vm841, %v1479, 0
      %v1510 = vsel %vm841, %v1480, 0
      %v1513 = vsel %vm841, %v1481, 0
      %1515 = vmatpush.bf16.msra.mxu0 0
      %1516 = vmatpush.bf16.msra.mxu0 0
      %1517 = vmatpush.bf16.msra.mxu0 0
      %1518 = vmatpush.bf16.msra.mxu0 0
      %1519 = vmatpush.bf16.msra.mxu0 0
      %1520 = vmatpush.bf16.msra.mxu0 0
      %1521 = vmatpush.bf16.msra.mxu0 0
      %1522 = vmatpush.bf16.msra.mxu0 %v1489
      %1523 = vmatmul.bf16.gmra.mxu0 %v1492
      %v1524 = vpop.f32.mrf.mxu0
      %v1525 = vadd.f32 0.0, %v1524
      %v1526 = vpop.f32.mrf.mxu0
      %v1527 = vadd.f32 0.0, %v1526
      %1528 = vmatmul.bf16.gmra.mxu0 %v1495
      %v1529 = vpop.f32.mrf.mxu0
      %v1530 = vadd.f32 0.0, %v1529
      %v1531 = vpop.f32.mrf.mxu0
      %v1532 = vadd.f32 0.0, %v1531
      %1533 = vmatmul.bf16.gmra.mxu0 %v1498
      %v1534 = vpop.f32.mrf.mxu0
      %v1535 = vadd.f32 0.0, %v1534
      %v1536 = vpop.f32.mrf.mxu0
      %v1537 = vadd.f32 0.0, %v1536
      %1538 = vmatmul.bf16.gmra.mxu0 %v1501
      %v1539 = vpop.f32.mrf.mxu0
      %v1540 = vadd.f32 0.0, %v1539
      %v1541 = vpop.f32.mrf.mxu0
      %v1542 = vadd.f32 0.0, %v1541
      %1543 = vmatmul.bf16.gmra.mxu0 %v1504
      %v1544 = vpop.f32.mrf.mxu0
      %v1545 = vadd.f32 0.0, %v1544
      %v1546 = vpop.f32.mrf.mxu0
      %v1547 = vadd.f32 0.0, %v1546
      %1548 = vmatmul.bf16.gmra.mxu0 %v1507
      %v1549 = vpop.f32.mrf.mxu0
      %v1550 = vadd.f32 0.0, %v1549
      %v1551 = vpop.f32.mrf.mxu0
      %v1552 = vadd.f32 0.0, %v1551
      %1553 = vmatmul.bf16.gmra.mxu0 %v1510
      %v1554 = vpop.f32.mrf.mxu0
      %v1555 = vadd.f32 0.0, %v1554
      %v1556 = vpop.f32.mrf.mxu0
      %v1557 = vadd.f32 0.0, %v1556
      %1558 = vmatmul.bf16.gmra.mxu0 %v1513
      %v1559 = vpop.f32.mrf.mxu0
      %v1560 = vadd.f32 0.0, %v1559
      %v1561 = vpop.f32.mrf.mxu0
      %v1562 = vadd.f32 0.0, %v1561
      %1563 = vdwg.mxu0
      %v1564 = vadd.f32 %v1416, %v1525
      %v1565 = vadd.f32 %v1417, %v1527
      %v1566 = vadd.f32 %v1418, %v1530
      %v1567 = vadd.f32 %v1419, %v1532
      %v1568 = vadd.f32 %v1420, %v1535
      %v1569 = vadd.f32 %v1421, %v1537
      %v1570 = vadd.f32 %v1422, %v1540
      %v1571 = vadd.f32 %v1423, %v1542
      %v1572 = vadd.f32 %v1424, %v1545
      %v1573 = vadd.f32 %v1425, %v1547
      %v1574 = vadd.f32 %v1426, %v1550
      %v1575 = vadd.f32 %v1427, %v1552
      %v1576 = vadd.f32 %v1428, %v1555
      %v1577 = vadd.f32 %v1429, %v1557
      %v1578 = vadd.f32 %v1430, %v1560
      %v1579 = vadd.f32 %v1431, %v1562
      %v1580 = vpack.c.bf16 %v458, %v457
      %s1581 = scalar_lea.vmem %s3, 56
      %v1582 = vld [vmem:[%s1581] sm:$0xf]
      %v1583 = vld [vmem:[%s1581 + $0x4] sm:$0xf]
      %v1586 = vunpack.c.l.b16 %v1582
      %v1587 = vunpack.c.l.b16 %v1583
      %v1588 = vpack.c.b16 %v1587, %v1586
      %v1591 = vsel %vm841, %v1580, 0
      %1593 = vmatpush.bf16.msra.mxu0 0
      %1594 = vmatpush.bf16.msra.mxu0 0
      %1595 = vmatpush.bf16.msra.mxu0 0
      %1596 = vmatpush.bf16.msra.mxu0 0
      %1597 = vmatpush.bf16.msra.mxu0 0
      %1598 = vmatpush.bf16.msra.mxu0 0
      %1599 = vmatpush.bf16.msra.mxu0 0
      %1600 = vmatpush.bf16.msra.mxu0 %v1588
      %1601 = vmatmul.bf16.gmra.mxu0 %v849
      %v1602 = vpop.f32.mrf.mxu0
      %v1603 = vadd.f32 0.0, %v1602
      %v1604 = vpop.f32.mrf.mxu0
      %v1605 = vadd.f32 0.0, %v1604
      %1606 = vmatmul.bf16.gmra.mxu0 %v852
      %v1607 = vpop.f32.mrf.mxu0
      %v1608 = vadd.f32 0.0, %v1607
      %v1609 = vpop.f32.mrf.mxu0
      %v1610 = vadd.f32 0.0, %v1609
      %1611 = vmatmul.bf16.gmra.mxu0 %v855
      %v1612 = vpop.f32.mrf.mxu0
      %v1613 = vadd.f32 0.0, %v1612
      %v1614 = vpop.f32.mrf.mxu0
      %v1615 = vadd.f32 0.0, %v1614
      %1616 = vmatmul.bf16.gmra.mxu0 %v858
      %v1617 = vpop.f32.mrf.mxu0
      %v1618 = vadd.f32 0.0, %v1617
      %v1619 = vpop.f32.mrf.mxu0
      %v1620 = vadd.f32 0.0, %v1619
      %1621 = vmatmul.bf16.gmra.mxu0 %v861
      %v1622 = vpop.f32.mrf.mxu0
      %v1623 = vadd.f32 0.0, %v1622
      %v1624 = vpop.f32.mrf.mxu0
      %v1625 = vadd.f32 0.0, %v1624
      %1626 = vmatmul.bf16.gmra.mxu0 %v864
      %v1627 = vpop.f32.mrf.mxu0
      %v1628 = vadd.f32 0.0, %v1627
      %v1629 = vpop.f32.mrf.mxu0
      %v1630 = vadd.f32 0.0, %v1629
      %1631 = vmatmul.bf16.gmra.mxu0 %v1259
      %v1632 = vpop.f32.mrf.mxu0
      %v1633 = vadd.f32 0.0, %v1632
      %v1634 = vpop.f32.mrf.mxu0
      %v1635 = vadd.f32 0.0, %v1634
      %1636 = vmatmul.bf16.gmra.mxu0 %v1591
      %v1637 = vpop.f32.mrf.mxu0
      %v1638 = vadd.f32 0.0, %v1637
      %v1639 = vpop.f32.mrf.mxu0
      %v1640 = vadd.f32 0.0, %v1639
      %1641 = vdwg.mxu0
      %v1642 = vadd.f32 %v1564, %v1603
      %v1643 = vadd.f32 %v1565, %v1605
      %v1644 = vadd.f32 %v1566, %v1608
      %v1645 = vadd.f32 %v1567, %v1610
      %v1646 = vadd.f32 %v1568, %v1613
      %v1647 = vadd.f32 %v1569, %v1615
      %v1648 = vadd.f32 %v1570, %v1618
      %v1649 = vadd.f32 %v1571, %v1620
      %v1650 = vadd.f32 %v1572, %v1623
      %v1651 = vadd.f32 %v1573, %v1625
      %v1652 = vadd.f32 %v1574, %v1628
      %v1653 = vadd.f32 %v1575, %v1630
      %v1654 = vadd.f32 %v1576, %v1633
      %v1655 = vadd.f32 %v1577, %v1635
      %v1656 = vadd.f32 %v1578, %v1638
      %v1657 = vadd.f32 %v1579, %v1640
      %v1658 = vpack.c.bf16 %v1459, %v1458
      %v1659 = vpack.c.bf16 %v1461, %v1460
      %v1660 = vpack.c.bf16 %v1463, %v1462
      %v1661 = vpack.c.bf16 %v1465, %v1464
      %v1662 = vpack.c.bf16 %v1467, %v1466
      %v1663 = vpack.c.bf16 %v1469, %v1468
      %v1664 = vpack.c.bf16 %v1471, %v1470
      %v1665 = vpack.c.bf16 %v1473, %v1472
      %s1666 = scalar_lea.vmem %s3, 64
      %v1667 = vld [vmem:[%s1666] sm:$0xf]
      %v1668 = vld [vmem:[%s1666 + $0x4] sm:$0xf]
      %v1671 = vunpack.c.l.b16 %v1667
      %v1672 = vunpack.c.l.b16 %v1668
      %v1673 = vpack.c.b16 %v1672, %v1671
      %v1676 = vsel %vm841, %v1658, 0
      %v1679 = vsel %vm841, %v1659, 0
      %v1682 = vsel %vm841, %v1660, 0
      %v1685 = vsel %vm841, %v1661, 0
      %v1688 = vsel %vm841, %v1662, 0
      %v1691 = vsel %vm841, %v1663, 0
      %v1694 = vsel %vm841, %v1664, 0
      %v1697 = vsel %vm841, %v1665, 0
      %1699 = vmatpush.bf16.msra.mxu0 0
      %1700 = vmatpush.bf16.msra.mxu0 0
      %1701 = vmatpush.bf16.msra.mxu0 0
      %1702 = vmatpush.bf16.msra.mxu0 0
      %1703 = vmatpush.bf16.msra.mxu0 0
      %1704 = vmatpush.bf16.msra.mxu0 0
      %1705 = vmatpush.bf16.msra.mxu0 0
      %1706 = vmatpush.bf16.msra.mxu0 %v1673
      %1707 = vmatmul.bf16.gmra.mxu0 %v1676
      %v1708 = vpop.f32.mrf.mxu0
      %v1709 = vadd.f32 0.0, %v1708
      %v1710 = vpop.f32.mrf.mxu0
      %v1711 = vadd.f32 0.0, %v1710
      %1712 = vmatmul.bf16.gmra.mxu0 %v1679
      %v1713 = vpop.f32.mrf.mxu0
      %v1714 = vadd.f32 0.0, %v1713
      %v1715 = vpop.f32.mrf.mxu0
      %v1716 = vadd.f32 0.0, %v1715
      %1717 = vmatmul.bf16.gmra.mxu0 %v1682
      %v1718 = vpop.f32.mrf.mxu0
      %v1719 = vadd.f32 0.0, %v1718
      %v1720 = vpop.f32.mrf.mxu0
      %v1721 = vadd.f32 0.0, %v1720
      %1722 = vmatmul.bf16.gmra.mxu0 %v1685
      %v1723 = vpop.f32.mrf.mxu0
      %v1724 = vadd.f32 0.0, %v1723
      %v1725 = vpop.f32.mrf.mxu0
      %v1726 = vadd.f32 0.0, %v1725
      %1727 = vmatmul.bf16.gmra.mxu0 %v1688
      %v1728 = vpop.f32.mrf.mxu0
      %v1729 = vadd.f32 0.0, %v1728
      %v1730 = vpop.f32.mrf.mxu0
      %v1731 = vadd.f32 0.0, %v1730
      %1732 = vmatmul.bf16.gmra.mxu0 %v1691
      %v1733 = vpop.f32.mrf.mxu0
      %v1734 = vadd.f32 0.0, %v1733
      %v1735 = vpop.f32.mrf.mxu0
      %v1736 = vadd.f32 0.0, %v1735
      %1737 = vmatmul.bf16.gmra.mxu0 %v1694
      %v1738 = vpop.f32.mrf.mxu0
      %v1739 = vadd.f32 0.0, %v1738
      %v1740 = vpop.f32.mrf.mxu0
      %v1741 = vadd.f32 0.0, %v1740
      %1742 = vmatmul.bf16.gmra.mxu0 %v1697
      %v1743 = vpop.f32.mrf.mxu0
      %v1744 = vadd.f32 0.0, %v1743
      %v1745 = vpop.f32.mrf.mxu0
      %v1746 = vadd.f32 0.0, %v1745
      %1747 = vdwg.mxu0
      %v1748 = vadd.f32 %v1642, %v1709
      %v1749 = vadd.f32 %v1643, %v1711
      %v1750 = vadd.f32 %v1644, %v1714
      %v1751 = vadd.f32 %v1645, %v1716
      %v1752 = vadd.f32 %v1646, %v1719
      %v1753 = vadd.f32 %v1647, %v1721
      %v1754 = vadd.f32 %v1648, %v1724
      %v1755 = vadd.f32 %v1649, %v1726
      %v1756 = vadd.f32 %v1650, %v1729
      %v1757 = vadd.f32 %v1651, %v1731
      %v1758 = vadd.f32 %v1652, %v1734
      %v1759 = vadd.f32 %v1653, %v1736
      %v1760 = vadd.f32 %v1654, %v1739
      %v1761 = vadd.f32 %v1655, %v1741
      %v1762 = vadd.f32 %v1656, %v1744
      %v1763 = vadd.f32 %v1657, %v1746
      %v1764 = vld [vmem:[%s4] sm:$0x1]
      %v1766 = vperm.slane %v1764, 0
      %v1768 = vmul.f32 %v1748, %v1766
      %v1769 = vmul.f32 %v1749, %v1766
      %v1770 = vmul.f32 %v1750, %v1766
      %v1771 = vmul.f32 %v1751, %v1766
      %v1772 = vmul.f32 %v1752, %v1766
      %v1773 = vmul.f32 %v1753, %v1766
      %v1774 = vmul.f32 %v1754, %v1766
      %v1775 = vmul.f32 %v1755, %v1766
      %v1776 = vmul.f32 %v1756, %v1766
      %v1777 = vmul.f32 %v1757, %v1766
      %v1778 = vmul.f32 %v1758, %v1766
      %v1779 = vmul.f32 %v1759, %v1766
      %v1780 = vmul.f32 %v1760, %v1766
      %v1781 = vmul.f32 %v1761, %v1766
      %v1782 = vmul.f32 %v1762, %v1766
      %v1783 = vmul.f32 %v1763, %v1766
      %v1784 = vld [vmem:[%s5] sm:$0x1]
      %v1786 = vperm.slane %v1784, 0
      %v1788 = vadd.f32 %v1768, %v1786
      %v1789 = vadd.f32 %v1769, %v1786
      %v1790 = vadd.f32 %v1770, %v1786
      %v1791 = vadd.f32 %v1771, %v1786
      %v1792 = vadd.f32 %v1772, %v1786
      %v1793 = vadd.f32 %v1773, %v1786
      %v1794 = vadd.f32 %v1774, %v1786
      %v1795 = vadd.f32 %v1775, %v1786
      %v1796 = vadd.f32 %v1776, %v1786
      %v1797 = vadd.f32 %v1777, %v1786
      %v1798 = vadd.f32 %v1778, %v1786
      %v1799 = vadd.f32 %v1779, %v1786
      %v1800 = vadd.f32 %v1780, %v1786
      %v1801 = vadd.f32 %v1781, %v1786
      %v1802 = vadd.f32 %v1782, %v1786
      %v1803 = vadd.f32 %v1783, %v1786
      %vm1804 = vcmp.ge.f32.partialorder %v1788, 0.0
      %vm1805 = vcmp.ge.f32.partialorder %v1789, 0.0
      %vm1806 = vcmp.ge.f32.partialorder %v1790, 0.0
      %vm1807 = vcmp.ge.f32.partialorder %v1791, 0.0
      %vm1808 = vcmp.ge.f32.partialorder %v1792, 0.0
      %vm1809 = vcmp.ge.f32.partialorder %v1793, 0.0
      %vm1810 = vcmp.ge.f32.partialorder %v1794, 0.0
      %vm1811 = vcmp.ge.f32.partialorder %v1795, 0.0
      %vm1812 = vcmp.ge.f32.partialorder %v1796, 0.0
      %vm1813 = vcmp.ge.f32.partialorder %v1797, 0.0
      %vm1814 = vcmp.ge.f32.partialorder %v1798, 0.0
      %vm1815 = vcmp.ge.f32.partialorder %v1799, 0.0
      %vm1816 = vcmp.ge.f32.partialorder %v1800, 0.0
      %vm1817 = vcmp.ge.f32.partialorder %v1801, 0.0
      %vm1818 = vcmp.ge.f32.partialorder %v1802, 0.0
      %vm1819 = vcmp.ge.f32.partialorder %v1803, 0.0
      %v1820 = vld [vmem:[%s6] sm:$0x1]
      %v1822 = vperm.slane %v1820, 0
      %v1824 = vmul.f32 %v1822, %v1788
      %v1825 = vmul.f32 %v1822, %v1789
      %v1826 = vmul.f32 %v1822, %v1790
      %v1827 = vmul.f32 %v1822, %v1791
      %v1828 = vmul.f32 %v1822, %v1792
      %v1829 = vmul.f32 %v1822, %v1793
      %v1830 = vmul.f32 %v1822, %v1794
      %v1831 = vmul.f32 %v1822, %v1795
      %v1832 = vmul.f32 %v1822, %v1796
      %v1833 = vmul.f32 %v1822, %v1797
      %v1834 = vmul.f32 %v1822, %v1798
      %v1835 = vmul.f32 %v1822, %v1799
      %v1836 = vmul.f32 %v1822, %v1800
      %v1837 = vmul.f32 %v1822, %v1801
      %v1838 = vmul.f32 %v1822, %v1802
      %v1839 = vmul.f32 %v1822, %v1803
      %v1840 = vsel %vm1804, %v1788, %v1824
      %v1841 = vsel %vm1805, %v1789, %v1825
      %v1842 = vsel %vm1806, %v1790, %v1826
      %v1843 = vsel %vm1807, %v1791, %v1827
      %v1844 = vsel %vm1808, %v1792, %v1828
      %v1845 = vsel %vm1809, %v1793, %v1829
      %v1846 = vsel %vm1810, %v1794, %v1830
      %v1847 = vsel %vm1811, %v1795, %v1831
      %v1848 = vsel %vm1812, %v1796, %v1832
      %v1849 = vsel %vm1813, %v1797, %v1833
      %v1850 = vsel %vm1814, %v1798, %v1834
      %v1851 = vsel %vm1815, %v1799, %v1835
      %v1852 = vsel %vm1816, %v1800, %v1836
      %v1853 = vsel %vm1817, %v1801, %v1837
      %v1854 = vsel %vm1818, %v1802, %v1838
      %v1855 = vsel %vm1819, %v1803, %v1839
      %1856 = vst.msk [vmem:[%s441] sm:$0xff] %vm841, %v1840
      %1857 = vst.msk [vmem:[%s441 + $0x8] sm:$0xff] %vm841, %v1841
      %1858 = vst.msk [vmem:[%s441 + $0x10] sm:$0xff] %vm841, %v1842
      %1859 = vst.msk [vmem:[%s441 + $0x18] sm:$0xff] %vm841, %v1843
      %1860 = vst.msk [vmem:[%s441 + $0x20] sm:$0xff] %vm841, %v1844
      %1861 = vst.msk [vmem:[%s441 + $0x28] sm:$0xff] %vm841, %v1845
      %1862 = vst.msk [vmem:[%s441 + $0x30] sm:$0xff] %vm841, %v1846
      %1863 = vst.msk [vmem:[%s441 + $0x38] sm:$0xff] %vm841, %v1847
      %1864 = vst.msk [vmem:[%s441 + $0x40] sm:$0xff] %vm841, %v1848
      %1865 = vst.msk [vmem:[%s441 + $0x48] sm:$0xff] %vm841, %v1849
      %1866 = vst.msk [vmem:[%s441 + $0x50] sm:$0xff] %vm841, %v1850
      %1867 = vst.msk [vmem:[%s441 + $0x58] sm:$0xff] %vm841, %v1851
      %1868 = vst.msk [vmem:[%s441 + $0x60] sm:$0xff] %vm841, %v1852
      %1869 = vst.msk [vmem:[%s441 + $0x68] sm:$0xff] %vm841, %v1853
      %1870 = vst.msk [vmem:[%s441 + $0x70] sm:$0xff] %vm841, %v1854
      %1871 = vst.msk [vmem:[%s441 + $0x78] sm:$0xff] %vm841, %v1855
      %s1872 = smul.u32 8, %s23
      %p1873 = scmp.lt.s32.totalorder %s22, 1
      %s1874 = scalar_select %p1873, %s22, 1
      %p1875 = scmp.lt.s32.totalorder %s1872, 15
      %s1876 = scalar_select %p1875, %s1872, 15
      %s1877 = smul.addr %s1876, 2
      %s1878 = smul.addr %s1874, 32
      %s1879 = sadd.s32 %s1877, %s1878
      %s1880 = smul.addr %s1879, 8
      %s1881 = scalar_lea.vmem %s7, %s1880
      // Predicated region
      $region49: #{up_conv_block_forward.4} parent=47 // pred_check
        %p1882 = pneg %p230
      $region50: #{up_conv_block_forward.4} parent=47 // pred_check_branch
        %1884 = sbr.rel (%p1882) target = $region52
      $region51: #{up_conv_block_forward.4} parent=47 // pred_region
        %s1885 = smul.u32 8, %s23
      $region52: #{up_conv_block_forward.4} parent=47 // pred_fallthru
        _
    $region48: #{up_conv_block_forward.4} parent=5 // pred_fallthru
      _
    %p1886 = scmp.le.s32.totalorder 2, %s13
    // Predicated region
    $region53: #{up_conv_block_forward.4} parent=5 // pred_check
      %p1887 = pneg %p1886
    $region54: #{up_conv_block_forward.4} parent=5 // pred_check_branch
      %1889 = sbr.rel (%p1887) target = $region56
    $region55: #{up_conv_block_forward.4} parent=5 // pred_region
      %s1890 = ssub.s32 %s13, 2
      // Predicated region
      $region57: #{up_conv_block_forward.4} parent=55 // pred_check
        %p1891 = pneg %p236
      $region58: #{up_conv_block_forward.4} parent=55 // pred_check_branch
        %1893 = sbr.rel (%p1891) target = $region60
      $region59: #{up_conv_block_forward.4} parent=55 // pred_region
        %s1894 = smul.u32 8, %s25
        %p1895 = scmp.lt.s32.totalorder %s24, 1
        %s1896 = scalar_select %p1895, %s24, 1
        %p1897 = scmp.lt.s32.totalorder %s1894, 15
        %s1898 = scalar_select %p1897, %s1894, 15
        %s1899 = smul.addr %s1898, 2
        %s1900 = smul.addr %s1896, 32
        %s1901 = sadd.s32 %s1899, %s1900
        %s1902 = smul.addr %s1901, 8
        %s1903 = scalar_lea.vmem %s7, %s1902
      $region60: #{up_conv_block_forward.4} parent=55 // pred_fallthru
        _
    $region56: #{up_conv_block_forward.4} parent=5 // pred_fallthru
      _
  $region6: #{up_conv_block_forward.4} parent=0 // loop_footer
    %s17 = sadd.s32 1, %s13
  $region7: #{up_conv_block_forward.4} parent=0 // loop_footer_branch
    %12 = sbr.rel target = $region3
  $region8: #{up_conv_block_forward.4} parent=0 // loop_exit
    _

// kernel: up_conv_block_forward.5
$region0: #{up_conv_block_forward.5}
  #allocation0 [shape = 'u32[]', space=smem, size = 0x4, offset = 0x4, fixed_abs, tag = 'smem constant byte address 0x4 - core index']
  #allocation1 [shape = 'u32[72,128]{1,0:T(1,128)}', space=vmem, size = 0x9000, scoped, tag = 'internal scratch']
  %s0 = inlined_call_operand.vmem [shape: f32[2,16,16,16], index: 0, kind: input, shape index: {}, may-alias: {0,1,2}]
  %s1 = inlined_call_operand.vmem [shape: f32[2,16,16,16], index: 1, kind: input, shape index: {}, may-alias: {0,1,2}]
  %s2 = inlined_call_operand.vmem [shape: f32[2,16,16,16], index: 2, kind: input, shape index: {}, may-alias: {0,1,2}]
  %s3 = inlined_call_operand.vmem [shape: f32[2,16,16,16], index: 3, kind: input, shape index: {}]
  %s4 = inlined_call_operand.vmem [shape: bf16[9,16,16], index: 4, kind: input, shape index: {}]
  %s5 = inlined_call_operand.vmem [shape: f32[1,16], index: 5, kind: input, shape index: {}]
  %s6 = inlined_call_operand.vmem [shape: f32[1,16], index: 6, kind: input, shape index: {}]
  %s7 = inlined_call_operand.vmem [shape: f32[1,16], index: 7, kind: input, shape index: {}]
  %s8 = inlined_call_operand.vmem [shape: f32[1,16], index: 8, kind: input, shape index: {}]
  %s9 = inlined_call_operand.vmem [shape: f32[2,16,16,16], index: 9, kind: output, shape index: {}]
  %s10 = sld [smem:[#allocation0]]
  $region69: #{up_conv_block_forward.5} parent=0
    _
  %s12 = ssub.s32 1, %s10
  %s13 = scalar_select 0, %s12, %s10
  loop: start=0, step=1, limit=6
  $region2: #{up_conv_block_forward.5} parent=0 // loop_pre_header
    _
  $region3: #{up_conv_block_forward.5} parent=0 // loop_header
    %s15 = sphi 0, %s19
    %p16 = scmp.ge.s32.totalorder %s15, 6
    %s22 = sphi 0, %s34
    %s23 = sphi 0, %s30
    %s24 = sphi 0, %s22
    %s25 = sphi 0, %s23
    %s26 = sphi 0, %s24
    %s27 = sphi 0, %s25
    %s39 = sphi 0, %s41
    %s42 = sphi 0, %s39
    %s43 = sphi 0, %s42
    %s59 = sphi 0, %s43
    %s73 = sphi 0, %s75
    %s76 = sphi 0, %s73
    %s77 = sphi 0, %s76
    %s93 = sphi 0, %s77
    %s107 = sphi 0, %s109
    %s110 = sphi 0, %s107
    %s111 = sphi 0, %s110
    %s127 = sphi 0, %s111
    %s135 = sphi 0, %s137
    %s138 = sphi 0, %s135
    %s139 = sphi 0, %s138
    %s155 = sphi 0, %s139
    %s159 = sphi 0, %s159
    %s161 = sphi 0, %s159
    %s162 = sphi 0, %s161
    %s176 = sphi 0, %s162
    %s180 = sphi 0, %s180
    %s182 = sphi 0, %s180
    %s183 = sphi 0, %s182
    %s197 = sphi 0, %s183
    %s201 = sphi 0, %s201
    %s203 = sphi 0, %s201
    %s204 = sphi 0, %s203
    %s218 = sphi 0, %s204
    %s222 = sphi 0, %s222
    %s224 = sphi 0, %s222
    %s225 = sphi 0, %s224
    %s239 = sphi 0, %s225
    %s243 = sphi 0, %s243
    %s245 = sphi 0, %s243
    %s246 = sphi 0, %s245
    %s260 = sphi 0, %s246
    %s268 = sphi 0, %s270
    %s271 = sphi 0, %s268
    %s272 = sphi 0, %s271
    %s288 = sphi 0, %s272
  $region4: #{up_conv_block_forward.5} parent=0 // loop_header_branch
    %18 = sbr.rel (%p16) target = $region8
  $region5: #{up_conv_block_forward.5} parent=0 // loop_body
    %s20 = ssub.s32 %s15, 1
    %s21 = ssub.s32 %s15, 2
    %s28 = sadd.s32 1, %s23
    %p29 = scmp.ge.s32.totalorder %s28, 2
    %s30 = scalar_select %p29, 0, %s28
    %s31 = sadd.s32 1, %s22
    %s32 = scalar_select %p29, %s31, %s22
    %p33 = scmp.ge.s32.totalorder %s32, 2
    %s34 = scalar_select %p33, 0, %s32
    %s35 = ssub.s32 %s22, %s34
    %s36 = ssub.s32 %s23, %s30
    %s37 = sor.u32 %s35, %s36
    %p38 = scmp.eq.s32.totalorder %s37, 0
    %s40 = sadd.s32 %s39, 1
    %s41 = scalar_select %p38, %s39, %s40
    %p44 = pneg %p38
    %p45 = scmp.eq.s32.totalorder %s15, 3
    %p46 = por %p44, %p45
    %p47 = scmp.ne.s32.totalorder %s39, %s42
    %p48 = scmp.eq.s32.totalorder %s15, 0
    %p49 = por %p47, %p48
    %p50 = scmp.ne.s32.totalorder %s39, %s42
    %p51 = scmp.eq.s32.totalorder %s20, 3
    %p52 = por %p50, %p51
    %p53 = scmp.ne.s32.totalorder %s42, %s43
    %p54 = scmp.eq.s32.totalorder %s20, 0
    %p55 = por %p53, %p54
    %p56 = scmp.ne.s32.totalorder %s42, %s43
    %p57 = scmp.eq.s32.totalorder %s21, 3
    %p58 = por %p56, %p57
    %p60 = scmp.ne.s32.totalorder %s43, %s59
    %p61 = scmp.eq.s32.totalorder %s21, 0
    %p62 = por %p60, %p61
    %s63 = ssub.s32 %s23, 1
    %p64 = scmp.gt.s32.totalorder %s63, 0
    %s65 = scalar_select %p64, %s63, 0
    %s66 = ssub.s32 %s30, 1
    %p67 = scmp.gt.s32.totalorder %s66, 0
    %s68 = scalar_select %p67, %s66, 0
    %s69 = ssub.s32 %s22, %s34
    %s70 = ssub.s32 %s65, %s68
    %s71 = sor.u32 %s69, %s70
    %p72 = scmp.eq.s32.totalorder %s71, 0
    %s74 = sadd.s32 %s73, 1
    %s75 = scalar_select %p72, %s73, %s74
    %p78 = pneg %p72
    %p79 = scmp.eq.s32.totalorder %s15, 3
    %p80 = por %p78, %p79
    %p81 = scmp.ne.s32.totalorder %s73, %s76
    %p82 = scmp.eq.s32.totalorder %s15, 0
    %p83 = por %p81, %p82
    %p84 = scmp.ne.s32.totalorder %s73, %s76
    %p85 = scmp.eq.s32.totalorder %s20, 3
    %p86 = por %p84, %p85
    %p87 = scmp.ne.s32.totalorder %s76, %s77
    %p88 = scmp.eq.s32.totalorder %s20, 0
    %p89 = por %p87, %p88
    %p90 = scmp.ne.s32.totalorder %s76, %s77
    %p91 = scmp.eq.s32.totalorder %s21, 3
    %p92 = por %p90, %p91
    %p94 = scmp.ne.s32.totalorder %s77, %s93
    %p95 = scmp.eq.s32.totalorder %s21, 0
    %p96 = por %p94, %p95
    %s97 = sadd.s32 %s23, 1
    %p98 = scmp.lt.s32.totalorder %s97, 1
    %s99 = scalar_select %p98, %s97, 1
    %s100 = sadd.s32 %s30, 1
    %p101 = scmp.lt.s32.totalorder %s100, 1
    %s102 = scalar_select %p101, %s100, 1
    %s103 = ssub.s32 %s22, %s34
    %s104 = ssub.s32 %s99, %s102
    %s105 = sor.u32 %s103, %s104
    %p106 = scmp.eq.s32.totalorder %s105, 0
    %s108 = sadd.s32 %s107, 1
    %s109 = scalar_select %p106, %s107, %s108
    %p112 = pneg %p106
    %p113 = scmp.eq.s32.totalorder %s15, 3
    %p114 = por %p112, %p113
    %p115 = scmp.ne.s32.totalorder %s107, %s110
    %p116 = scmp.eq.s32.totalorder %s15, 0
    %p117 = por %p115, %p116
    %p118 = scmp.ne.s32.totalorder %s107, %s110
    %p119 = scmp.eq.s32.totalorder %s20, 3
    %p120 = por %p118, %p119
    %p121 = scmp.ne.s32.totalorder %s110, %s111
    %p122 = scmp.eq.s32.totalorder %s20, 0
    %p123 = por %p121, %p122
    %p124 = scmp.ne.s32.totalorder %s110, %s111
    %p125 = scmp.eq.s32.totalorder %s21, 3
    %p126 = por %p124, %p125
    %p128 = scmp.ne.s32.totalorder %s111, %s127
    %p129 = scmp.eq.s32.totalorder %s21, 0
    %p130 = por %p128, %p129
    %s131 = ssub.s32 %s22, %s34
    %s132 = ssub.s32 %s23, %s30
    %s133 = sor.u32 %s131, %s132
    %p134 = scmp.eq.s32.totalorder %s133, 0
    %s136 = sadd.s32 %s135, 1
    %s137 = scalar_select %p134, %s135, %s136
    %p140 = pneg %p134
    %p141 = scmp.eq.s32.totalorder %s15, 3
    %p142 = por %p140, %p141
    %p143 = scmp.ne.s32.totalorder %s135, %s138
    %p144 = scmp.eq.s32.totalorder %s15, 0
    %p145 = por %p143, %p144
    %p146 = scmp.ne.s32.totalorder %s135, %s138
    %p147 = scmp.eq.s32.totalorder %s20, 3
    %p148 = por %p146, %p147
    %p149 = scmp.ne.s32.totalorder %s138, %s139
    %p150 = scmp.eq.s32.totalorder %s20, 0
    %p151 = por %p149, %p150
    %p152 = scmp.ne.s32.totalorder %s138, %s139
    %p153 = scmp.eq.s32.totalorder %s21, 3
    %p154 = por %p152, %p153
    %p156 = scmp.ne.s32.totalorder %s139, %s155
    %p157 = scmp.eq.s32.totalorder %s21, 0
    %p158 = por %p156, %p157
    %s160 = sadd.s32 %s159, 1
    %p163 = scmp.eq.s32.totalorder %s15, 3
    %p164 = scmp.ne.s32.totalorder %s159, %s161
    %p165 = scmp.eq.s32.totalorder %s15, 0
    %p166 = por %p164, %p165
    %p167 = scmp.ne.s32.totalorder %s159, %s161
    %p168 = scmp.eq.s32.totalorder %s20, 3
    %p169 = por %p167, %p168
    %p170 = scmp.ne.s32.totalorder %s161, %s162
    %p171 = scmp.eq.s32.totalorder %s20, 0
    %p172 = por %p170, %p171
    %p173 = scmp.ne.s32.totalorder %s161, %s162
    %p174 = scmp.eq.s32.totalorder %s21, 3
    %p175 = por %p173, %p174
    %p177 = scmp.ne.s32.totalorder %s162, %s176
    %p178 = scmp.eq.s32.totalorder %s21, 0
    %p179 = por %p177, %p178
    %s181 = sadd.s32 %s180, 1
    %p184 = scmp.eq.s32.totalorder %s15, 3
    %p185 = scmp.ne.s32.totalorder %s180, %s182
    %p186 = scmp.eq.s32.totalorder %s15, 0
    %p187 = por %p185, %p186
    %p188 = scmp.ne.s32.totalorder %s180, %s182
    %p189 = scmp.eq.s32.totalorder %s20, 3
    %p190 = por %p188, %p189
    %p191 = scmp.ne.s32.totalorder %s182, %s183
    %p192 = scmp.eq.s32.totalorder %s20, 0
    %p193 = por %p191, %p192
    %p194 = scmp.ne.s32.totalorder %s182, %s183
    %p195 = scmp.eq.s32.totalorder %s21, 3
    %p196 = por %p194, %p195
    %p198 = scmp.ne.s32.totalorder %s183, %s197
    %p199 = scmp.eq.s32.totalorder %s21, 0
    %p200 = por %p198, %p199
    %s202 = sadd.s32 %s201, 1
    %p205 = scmp.eq.s32.totalorder %s15, 3
    %p206 = scmp.ne.s32.totalorder %s201, %s203
    %p207 = scmp.eq.s32.totalorder %s15, 0
    %p208 = por %p206, %p207
    %p209 = scmp.ne.s32.totalorder %s201, %s203
    %p210 = scmp.eq.s32.totalorder %s20, 3
    %p211 = por %p209, %p210
    %p212 = scmp.ne.s32.totalorder %s203, %s204
    %p213 = scmp.eq.s32.totalorder %s20, 0
    %p214 = por %p212, %p213
    %p215 = scmp.ne.s32.totalorder %s203, %s204
    %p216 = scmp.eq.s32.totalorder %s21, 3
    %p217 = por %p215, %p216
    %p219 = scmp.ne.s32.totalorder %s204, %s218
    %p220 = scmp.eq.s32.totalorder %s21, 0
    %p221 = por %p219, %p220
    %s223 = sadd.s32 %s222, 1
    %p226 = scmp.eq.s32.totalorder %s15, 3
    %p227 = scmp.ne.s32.totalorder %s222, %s224
    %p228 = scmp.eq.s32.totalorder %s15, 0
    %p229 = por %p227, %p228
    %p230 = scmp.ne.s32.totalorder %s222, %s224
    %p231 = scmp.eq.s32.totalorder %s20, 3
    %p232 = por %p230, %p231
    %p233 = scmp.ne.s32.totalorder %s224, %s225
    %p234 = scmp.eq.s32.totalorder %s20, 0
    %p235 = por %p233, %p234
    %p236 = scmp.ne.s32.totalorder %s224, %s225
    %p237 = scmp.eq.s32.totalorder %s21, 3
    %p238 = por %p236, %p237
    %p240 = scmp.ne.s32.totalorder %s225, %s239
    %p241 = scmp.eq.s32.totalorder %s21, 0
    %p242 = por %p240, %p241
    %s244 = sadd.s32 %s243, 1
    %p247 = scmp.eq.s32.totalorder %s15, 3
    %p248 = scmp.ne.s32.totalorder %s243, %s245
    %p249 = scmp.eq.s32.totalorder %s15, 0
    %p250 = por %p248, %p249
    %p251 = scmp.ne.s32.totalorder %s243, %s245
    %p252 = scmp.eq.s32.totalorder %s20, 3
    %p253 = por %p251, %p252
    %p254 = scmp.ne.s32.totalorder %s245, %s246
    %p255 = scmp.eq.s32.totalorder %s20, 0
    %p256 = por %p254, %p255
    %p257 = scmp.ne.s32.totalorder %s245, %s246
    %p258 = scmp.eq.s32.totalorder %s21, 3
    %p259 = por %p257, %p258
    %p261 = scmp.ne.s32.totalorder %s246, %s260
    %p262 = scmp.eq.s32.totalorder %s21, 0
    %p263 = por %p261, %p262
    %s264 = ssub.s32 %s22, %s34
    %s265 = ssub.s32 %s23, %s30
    %s266 = sor.u32 %s264, %s265
    %p267 = scmp.eq.s32.totalorder %s266, 0
    %s269 = sadd.s32 %s268, 1
    %s270 = scalar_select %p267, %s268, %s269
    %p273 = pneg %p267
    %p274 = scmp.eq.s32.totalorder %s15, 3
    %p275 = por %p273, %p274
    %p276 = scmp.ne.s32.totalorder %s268, %s271
    %p277 = scmp.eq.s32.totalorder %s15, 0
    %p278 = por %p276, %p277
    %p279 = scmp.ne.s32.totalorder %s268, %s271
    %p280 = scmp.eq.s32.totalorder %s20, 3
    %p281 = por %p279, %p280
    %p282 = scmp.ne.s32.totalorder %s271, %s272
    %p283 = scmp.eq.s32.totalorder %s20, 0
    %p284 = por %p282, %p283
    %p285 = scmp.ne.s32.totalorder %s271, %s272
    %p286 = scmp.eq.s32.totalorder %s21, 3
    %p287 = por %p285, %p286
    %p289 = scmp.ne.s32.totalorder %s272, %s288
    %p290 = scmp.eq.s32.totalorder %s21, 0
    %p291 = por %p289, %p290
    %p292 = scmp.le.s32.totalorder 1, %s15
    %p293 = scmp.lt.s32.totalorder %s15, 5
    %p294 = pnand %p292, %p293
    %p295 = pneg %p294
    // Predicated region
    $region9: #{up_conv_block_forward.5} parent=5 // pred_check
      _
    $region10: #{up_conv_block_forward.5} parent=5 // pred_check_branch
      %297 = sbr.rel (%p294) target = $region12
    $region11: #{up_conv_block_forward.5} parent=5 // pred_region
      %s298 = ssub.s32 %s15, 1
      // Predicated region
      $region13: #{up_conv_block_forward.5} parent=11 // pred_check
        %p299 = pneg %p172
      $region14: #{up_conv_block_forward.5} parent=11 // pred_check_branch
        %301 = sbr.rel (%p299) target = $region16
      $region15: #{up_conv_block_forward.5} parent=11 // pred_region
        _
      $region16: #{up_conv_block_forward.5} parent=11 // pred_fallthru
        _
      // Predicated region
      $region17: #{up_conv_block_forward.5} parent=11 // pred_check
        %p302 = pneg %p193
      $region18: #{up_conv_block_forward.5} parent=11 // pred_check_branch
        %304 = sbr.rel (%p302) target = $region20
      $region19: #{up_conv_block_forward.5} parent=11 // pred_region
        _
      $region20: #{up_conv_block_forward.5} parent=11 // pred_fallthru
        _
      // Predicated region
      $region21: #{up_conv_block_forward.5} parent=11 // pred_check
        %p305 = pneg %p214
      $region22: #{up_conv_block_forward.5} parent=11 // pred_check_branch
        %307 = sbr.rel (%p305) target = $region24
      $region23: #{up_conv_block_forward.5} parent=11 // pred_region
        _
      $region24: #{up_conv_block_forward.5} parent=11 // pred_fallthru
        _
      // Predicated region
      $region25: #{up_conv_block_forward.5} parent=11 // pred_check
        %p308 = pneg %p235
      $region26: #{up_conv_block_forward.5} parent=11 // pred_check_branch
        %310 = sbr.rel (%p308) target = $region28
      $region27: #{up_conv_block_forward.5} parent=11 // pred_region
        _
      $region28: #{up_conv_block_forward.5} parent=11 // pred_fallthru
        _
      // Predicated region
      $region29: #{up_conv_block_forward.5} parent=11 // pred_check
        %p311 = pneg %p256
      $region30: #{up_conv_block_forward.5} parent=11 // pred_check_branch
        %313 = sbr.rel (%p311) target = $region32
      $region31: #{up_conv_block_forward.5} parent=11 // pred_region
        _
      $region32: #{up_conv_block_forward.5} parent=11 // pred_fallthru
        _
    $region12: #{up_conv_block_forward.5} parent=5 // pred_fallthru
      _
    %p314 = scmp.lt.s32.totalorder %s15, 4
    // Predicated region
    $region33: #{up_conv_block_forward.5} parent=5 // pred_check
      %p315 = pneg %p314
    $region34: #{up_conv_block_forward.5} parent=5 // pred_check_branch
      %317 = sbr.rel (%p315) target = $region36
    $region35: #{up_conv_block_forward.5} parent=5 // pred_region
      // Predicated region
      $region37: #{up_conv_block_forward.5} parent=35 // pred_check
        %p318 = pneg %p49
      $region38: #{up_conv_block_forward.5} parent=35 // pred_check_branch
        %320 = sbr.rel (%p318) target = $region40
      $region39: #{up_conv_block_forward.5} parent=35 // pred_region
        %s321 = smul.u32 8, %s23
        %p322 = scmp.lt.s32.totalorder %s22, 1
        %s323 = scalar_select %p322, %s22, 1
        %p324 = scmp.lt.s32.totalorder %s321, 15
        %s325 = scalar_select %p324, %s321, 15
        %s326 = smul.addr %s325, 2
        %s327 = smul.addr %s323, 32
        %s328 = sadd.s32 %s326, %s327
        %s329 = smul.addr %s328, 8
        %s330 = scalar_lea.vmem %s0, %s329
        %s331 = smul.u32 8, %s23
      $region40: #{up_conv_block_forward.5} parent=35 // pred_fallthru
        _
      // Predicated region
      $region41: #{up_conv_block_forward.5} parent=35 // pred_check
        %p332 = pneg %p83
      $region42: #{up_conv_block_forward.5} parent=35 // pred_check_branch
        %334 = sbr.rel (%p332) target = $region44
      $region43: #{up_conv_block_forward.5} parent=35 // pred_region
        %s335 = ssub.s32 %s23, 1
        %p336 = scmp.gt.s32.totalorder %s335, 0
        %s337 = scalar_select %p336, %s335, 0
        %s338 = smul.u32 8, %s337
        %p339 = scmp.lt.s32.totalorder %s22, 1
        %s340 = scalar_select %p339, %s22, 1
        %p341 = scmp.lt.s32.totalorder %s338, 15
        %s342 = scalar_select %p341, %s338, 15
        %s343 = smul.addr %s342, 2
        %s344 = smul.addr %s340, 32
        %s345 = sadd.s32 %s343, %s344
        %s346 = smul.addr %s345, 8
        %s347 = scalar_lea.vmem %s1, %s346
        %s348 = ssub.s32 %s23, 1
        %p349 = scmp.gt.s32.totalorder %s348, 0
        %s350 = scalar_select %p349, %s348, 0
        %s351 = smul.u32 8, %s350
      $region44: #{up_conv_block_forward.5} parent=35 // pred_fallthru
        _
      // Predicated region
      $region45: #{up_conv_block_forward.5} parent=35 // pred_check
        %p352 = pneg %p117
      $region46: #{up_conv_block_forward.5} parent=35 // pred_check_branch
        %354 = sbr.rel (%p352) target = $region48
      $region47: #{up_conv_block_forward.5} parent=35 // pred_region
        %s355 = sadd.s32 %s23, 1
        %p356 = scmp.lt.s32.totalorder %s355, 1
        %s357 = scalar_select %p356, %s355, 1
        %s358 = smul.u32 8, %s357
        %p359 = scmp.lt.s32.totalorder %s22, 1
        %s360 = scalar_select %p359, %s22, 1
        %p361 = scmp.lt.s32.totalorder %s358, 15
        %s362 = scalar_select %p361, %s358, 15
        %s363 = smul.addr %s362, 2
        %s364 = smul.addr %s360, 32
        %s365 = sadd.s32 %s363, %s364
        %s366 = smul.addr %s365, 8
        %s367 = scalar_lea.vmem %s2, %s366
        %s368 = sadd.s32 %s23, 1
        %p369 = scmp.lt.s32.totalorder %s368, 1
        %s370 = scalar_select %p369, %s368, 1
        %s371 = smul.u32 8, %s370
      $region48: #{up_conv_block_forward.5} parent=35 // pred_fallthru
        _
      // Predicated region
      $region49: #{up_conv_block_forward.5} parent=35 // pred_check
        %p372 = pneg %p145
      $region50: #{up_conv_block_forward.5} parent=35 // pred_check_branch
        %374 = sbr.rel (%p372) target = $region52
      $region51: #{up_conv_block_forward.5} parent=35 // pred_region
        %s375 = smul.u32 8, %s23
        %p376 = scmp.lt.s32.totalorder %s22, 1
        %s377 = scalar_select %p376, %s22, 1
        %p378 = scmp.lt.s32.totalorder %s375, 15
        %s379 = scalar_select %p378, %s375, 15
        %s380 = smul.addr %s379, 2
        %s381 = smul.addr %s377, 32
        %s382 = sadd.s32 %s380, %s381
        %s383 = smul.addr %s382, 8
        %s384 = scalar_lea.vmem %s3, %s383
        %s385 = smul.u32 8, %s23
      $region52: #{up_conv_block_forward.5} parent=35 // pred_fallthru
        _
    $region36: #{up_conv_block_forward.5} parent=5 // pred_fallthru
      _
    %p386 = scmp.le.s32.totalorder 1, %s15
    %p387 = scmp.lt.s32.totalorder %s15, 5
    %p388 = pnand %p386, %p387
    %p389 = pneg %p388
    // Predicated region
    $region53: #{up_conv_block_forward.5} parent=5 // pred_check
      _
    $region54: #{up_conv_block_forward.5} parent=5 // pred_check_branch
      %391 = sbr.rel (%p388) target = $region56
    $region55: #{up_conv_block_forward.5} parent=5 // pred_region
      %s392 = ssub.s32 %s15, 1
      %s393 = smul.u32 8, %s25
      %p394 = scmp.lt.s32.totalorder %s24, 1
      %s395 = scalar_select %p394, %s24, 1
      %p396 = scmp.lt.s32.totalorder %s393, 15
      %s397 = scalar_select %p396, %s393, 15
      %s398 = smul.addr %s397, 2
      %s399 = smul.addr %s395, 32
      %s400 = sadd.s32 %s398, %s399
      %s401 = smul.addr %s400, 8
      %s402 = scalar_lea.vmem %s0, %s401
      %p403 = pneg %p55
      %p404 = pneg %p52
      %s405 = ssub.s32 %s25, 1
      %p406 = scmp.gt.s32.totalorder %s405, 0
      %s407 = scalar_select %p406, %s405, 0
      %s408 = smul.u32 8, %s407
      %p409 = scmp.lt.s32.totalorder %s24, 1
      %s410 = scalar_select %p409, %s24, 1
      %p411 = scmp.lt.s32.totalorder %s408, 15
      %s412 = scalar_select %p411, %s408, 15
      %s413 = smul.addr %s412, 2
      %s414 = smul.addr %s410, 32
      %s415 = sadd.s32 %s413, %s414
      %s416 = smul.addr %s415, 8
      %s417 = scalar_lea.vmem %s1, %s416
      %p418 = pneg %p89
      %p419 = pneg %p86
      %s420 = sadd.s32 %s25, 1
      %p421 = scmp.lt.s32.totalorder %s420, 1
      %s422 = scalar_select %p421, %s420, 1
      %s423 = smul.u32 8, %s422
      %p424 = scmp.lt.s32.totalorder %s24, 1
      %s425 = scalar_select %p424, %s24, 1
      %p426 = scmp.lt.s32.totalorder %s423, 15
      %s427 = scalar_select %p426, %s423, 15
      %s428 = smul.addr %s427, 2
      %s429 = smul.addr %s425, 32
      %s430 = sadd.s32 %s428, %s429
      %s431 = smul.addr %s430, 8
      %s432 = scalar_lea.vmem %s2, %s431
      %p433 = pneg %p123
      %p434 = pneg %p120
      %s435 = smul.u32 8, %s25
      %p436 = scmp.lt.s32.totalorder %s24, 1
      %s437 = scalar_select %p436, %s24, 1
      %p438 = scmp.lt.s32.totalorder %s435, 15
      %s439 = scalar_select %p438, %s435, 15
      %s440 = smul.addr %s439, 2
      %s441 = smul.addr %s437, 32
      %s442 = sadd.s32 %s440, %s441
      %s443 = smul.addr %s442, 8
      %s444 = scalar_lea.vmem %s3, %s443
      %p445 = pneg %p151
      %p446 = pneg %p148
      %p447 = pneg %p172
      %p448 = pneg %p169
      %p449 = pneg %p193
      %p450 = pneg %p190
      %p451 = pneg %p214
      %p452 = pneg %p211
      %p453 = pneg %p235
      %p454 = pneg %p232
      %p455 = pneg %p256
      %p456 = pneg %p253
      %p457 = pneg %p284
      %p458 = pneg %p281
      %s459 = smul.u32 8, %s25
      %p460 = scmp.lt.s32.totalorder %s24, 1
      %s461 = scalar_select %p460, %s24, 1
      %p462 = scmp.lt.s32.totalorder %s459, 15
      %s463 = scalar_select %p462, %s459, 15
      %s464 = smul.addr %s463, 2
      %s465 = smul.addr %s461, 32
      %s466 = sadd.s32 %s464, %s465
      %s467 = smul.addr %s466, 8
      %s468 = scalar_lea.vmem %s9, %s467
      %s469 = smul.u32 8, %s25
      %p470 = scmp.lt.s32.totalorder %s24, 1
      %s471 = scalar_select %p470, %s24, 1
      %p472 = scmp.lt.s32.totalorder %s469, 15
      %s473 = scalar_select %p472, %s469, 15
      %s474 = smul.addr %s473, 2
      %s475 = smul.addr %s471, 32
      %s476 = sadd.s32 %s474, %s475
      %s477 = smul.addr %s476, 8
      %s478 = scalar_lea.vmem %s0, %s477
      %s479 = smul.u32 8, %s25
      %s480 = ssub.s32 %s25, 1
      %p481 = scmp.gt.s32.totalorder %s480, 0
      %s482 = scalar_select %p481, %s480, 0
      %s483 = smul.u32 8, %s482
      %p484 = scmp.lt.s32.totalorder %s24, 1
      %s485 = scalar_select %p484, %s24, 1
      %p486 = scmp.lt.s32.totalorder %s483, 15
      %s487 = scalar_select %p486, %s483, 15
      %s488 = smul.addr %s487, 2
      %s489 = smul.addr %s485, 32
      %s490 = sadd.s32 %s488, %s489
      %s491 = smul.addr %s490, 8
      %s492 = scalar_lea.vmem %s1, %s491
      %s493 = ssub.s32 %s25, 1
      %p494 = scmp.gt.s32.totalorder %s493, 0
      %s495 = scalar_select %p494, %s493, 0
      %s496 = smul.u32 8, %s495
      %s497 = sadd.s32 %s25, 1
      %p498 = scmp.lt.s32.totalorder %s497, 1
      %s499 = scalar_select %p498, %s497, 1
      %s500 = smul.u32 8, %s499
      %p501 = scmp.lt.s32.totalorder %s24, 1
      %s502 = scalar_select %p501, %s24, 1
      %p503 = scmp.lt.s32.totalorder %s500, 15
      %s504 = scalar_select %p503, %s500, 15
      %s505 = smul.addr %s504, 2
      %s506 = smul.addr %s502, 32
      %s507 = sadd.s32 %s505, %s506
      %s508 = smul.addr %s507, 8
      %s509 = scalar_lea.vmem %s2, %s508
      %s510 = sadd.s32 %s25, 1
      %p511 = scmp.lt.s32.totalorder %s510, 1
      %s512 = scalar_select %p511, %s510, 1
      %s513 = smul.u32 8, %s512
      %s514 = smul.u32 8, %s25
      %p515 = scmp.lt.s32.totalorder %s24, 1
      %s516 = scalar_select %p515, %s24, 1
      %p517 = scmp.lt.s32.totalorder %s514, 15
      %s518 = scalar_select %p517, %s514, 15
      %s519 = smul.addr %s518, 2
      %s520 = smul.addr %s516, 32
      %s521 = sadd.s32 %s519, %s520
      %s522 = smul.addr %s521, 8
      %s523 = scalar_lea.vmem %s3, %s522
      %s524 = smul.u32 8, %s25
      %s525 = smul.u32 8, %s25
      %p526 = scmp.lt.s32.totalorder %s24, 1
      %s527 = scalar_select %p526, %s24, 1
      %p528 = scmp.lt.s32.totalorder %s525, 15
      %s529 = scalar_select %p528, %s525, 15
      %s530 = smul.addr %s529, 2
      %s531 = smul.addr %s527, 32
      %s532 = sadd.s32 %s530, %s531
      %s533 = smul.addr %s532, 8
      %s534 = scalar_lea.vmem %s9, %s533
      %s535 = smul.u32 8, %s25
      %p537 = scmp.gt.s32.totalorder %s25, 0
      %s538 = scalar_select %p537, 1.0, 0.0
      %p539 = scmp.lt.s32.totalorder %s25, 1
      %s540 = scalar_select %p539, 1.0, 0.0
      %s541 = scalar_lea.vmem %s492, 112
      %v542 = vld [vmem:[%s541] sm:$0xff]
      %v543 = vld [vmem:[%s541 + $0x8] sm:$0xff]
      %v544 = vstv %s538
      %v545 = vmul.f32 %v542, %v544
      %v546 = vmul.f32 %v543, %v544
      %v547 = vld [vmem:[%s509] sm:$0xff]
      %v548 = vld [vmem:[%s509 + $0x8] sm:$0xff]
      %v549 = vstv %s540
      %v550 = vmul.f32 %v547, %v549
      %v551 = vmul.f32 %v548, %v549
      %v552 = vld [vmem:[%s478] sm:$0xff]
      %v553 = vld [vmem:[%s478 + $0x8] sm:$0xff]
      %v554 = vld [vmem:[%s478 + $0x10] sm:$0xff]
      %v555 = vld [vmem:[%s478 + $0x18] sm:$0xff]
      %v556 = vld [vmem:[%s478 + $0x20] sm:$0xff]
      %v557 = vld [vmem:[%s478 + $0x28] sm:$0xff]
      %v558 = vld [vmem:[%s478 + $0x30] sm:$0xff]
      %v559 = vld [vmem:[%s478 + $0x38] sm:$0xff]
      %v560 = vld [vmem:[%s478 + $0x40] sm:$0xff]
      %v561 = vld [vmem:[%s478 + $0x48] sm:$0xff]
      %v562 = vld [vmem:[%s478 + $0x50] sm:$0xff]
      %v563 = vld [vmem:[%s478 + $0x58] sm:$0xff]
      %v564 = vld [vmem:[%s478 + $0x60] sm:$0xff]
      %v565 = vld [vmem:[%s478 + $0x68] sm:$0xff]
      %v566 = vld [vmem:[%s478 + $0x70] sm:$0xff]
      %v567 = vld [vmem:[%s478 + $0x78] sm:$0xff]
      %v568 = vlaneseq
      %v569 = vshrl.u32 %v568, 7
      %v570 = vadd.s32 %v569, 8
      %v571 = vadd.s32 %v569, 16
      %v572 = vadd.s32 %v569, 24
      %v573 = vadd.s32 %v569, 32
      %v574 = vadd.s32 %v569, 40
      %v575 = vadd.s32 %v569, 48
      %v576 = vadd.s32 %v569, 56
      %v577 = vadd.s32 %v569, 64
      %v578 = vadd.s32 %v569, 72
      %v579 = vadd.s32 %v569, 80
      %v580 = vadd.s32 %v569, 88
      %v581 = vadd.s32 %v569, 96
      %v582 = vadd.s32 %v569, 104
      %v583 = vadd.s32 %v569, 112
      %v584 = vadd.s32 %v569, 120
      %vm585 = vcmp.lt.s32.totalorder %v569, 0
      %v586 = vsub.s32 0, %v569
      %v587 = vsel %vm585, %v586, %v569
      %v588 = vshrl.u32 %v587, 4
      %v589 = vand.u32 %v587, 15
      %v590 = vsub.s32 0, %v589
      %v591 = vsel %vm585, %v590, %v589
      %vm592 = vcmp.lt.s32.totalorder %v570, 0
      %v593 = vsub.s32 0, %v570
      %v594 = vsel %vm592, %v593, %v570
      %v595 = vshrl.u32 %v594, 4
      %v596 = vand.u32 %v594, 15
      %v597 = vsub.s32 0, %v596
      %v598 = vsel %vm592, %v597, %v596
      %vm599 = vcmp.lt.s32.totalorder %v571, 0
      %v600 = vsub.s32 0, %v571
      %v601 = vsel %vm599, %v600, %v571
      %v602 = vshrl.u32 %v601, 4
      %v603 = vand.u32 %v601, 15
      %v604 = vsub.s32 0, %v603
      %v605 = vsel %vm599, %v604, %v603
      %vm606 = vcmp.lt.s32.totalorder %v572, 0
      %v607 = vsub.s32 0, %v572
      %v608 = vsel %vm606, %v607, %v572
      %v609 = vshrl.u32 %v608, 4
      %v610 = vand.u32 %v608, 15
      %v611 = vsub.s32 0, %v610
      %v612 = vsel %vm606, %v611, %v610
      %vm613 = vcmp.lt.s32.totalorder %v573, 0
      %v614 = vsub.s32 0, %v573
      %v615 = vsel %vm613, %v614, %v573
      %v616 = vshrl.u32 %v615, 4
      %v617 = vand.u32 %v615, 15
      %v618 = vsub.s32 0, %v617
      %v619 = vsel %vm613, %v618, %v617
      %vm620 = vcmp.lt.s32.totalorder %v574, 0
      %v621 = vsub.s32 0, %v574
      %v622 = vsel %vm620, %v621, %v574
      %v623 = vshrl.u32 %v622, 4
      %v624 = vand.u32 %v622, 15
      %v625 = vsub.s32 0, %v624
      %v626 = vsel %vm620, %v625, %v624
      %vm627 = vcmp.lt.s32.totalorder %v575, 0
      %v628 = vsub.s32 0, %v575
      %v629 = vsel %vm627, %v628, %v575
      %v630 = vshrl.u32 %v629, 4
      %v631 = vand.u32 %v629, 15
      %v632 = vsub.s32 0, %v631
      %v633 = vsel %vm627, %v632, %v631
      %vm634 = vcmp.lt.s32.totalorder %v576, 0
      %v635 = vsub.s32 0, %v576
      %v636 = vsel %vm634, %v635, %v576
      %v637 = vshrl.u32 %v636, 4
      %v638 = vand.u32 %v636, 15
      %v639 = vsub.s32 0, %v638
      %v640 = vsel %vm634, %v639, %v638
      %vm641 = vcmp.lt.s32.totalorder %v577, 0
      %v642 = vsub.s32 0, %v577
      %v643 = vsel %vm641, %v642, %v577
      %v644 = vshrl.u32 %v643, 4
      %v645 = vand.u32 %v643, 15
      %v646 = vsub.s32 0, %v645
      %v647 = vsel %vm641, %v646, %v645
      %vm648 = vcmp.lt.s32.totalorder %v578, 0
      %v649 = vsub.s32 0, %v578
      %v650 = vsel %vm648, %v649, %v578
      %v651 = vshrl.u32 %v650, 4
      %v652 = vand.u32 %v650, 15
      %v653 = vsub.s32 0, %v652
      %v654 = vsel %vm648, %v653, %v652
      %vm655 = vcmp.lt.s32.totalorder %v579, 0
      %v656 = vsub.s32 0, %v579
      %v657 = vsel %vm655, %v656, %v579
      %v658 = vshrl.u32 %v657, 4
      %v659 = vand.u32 %v657, 15
      %v660 = vsub.s32 0, %v659
      %v661 = vsel %vm655, %v660, %v659
      %vm662 = vcmp.lt.s32.totalorder %v580, 0
      %v663 = vsub.s32 0, %v580
      %v664 = vsel %vm662, %v663, %v580
      %v665 = vshrl.u32 %v664, 4
      %v666 = vand.u32 %v664, 15
      %v667 = vsub.s32 0, %v666
      %v668 = vsel %vm662, %v667, %v666
      %vm669 = vcmp.lt.s32.totalorder %v581, 0
      %v670 = vsub.s32 0, %v581
      %v671 = vsel %vm669, %v670, %v581
      %v672 = vshrl.u32 %v671, 4
      %v673 = vand.u32 %v671, 15
      %v674 = vsub.s32 0, %v673
      %v675 = vsel %vm669, %v674, %v673
      %vm676 = vcmp.lt.s32.totalorder %v582, 0
      %v677 = vsub.s32 0, %v582
      %v678 = vsel %vm676, %v677, %v582
      %v679 = vshrl.u32 %v678, 4
      %v680 = vand.u32 %v678, 15
      %v681 = vsub.s32 0, %v680
      %v682 = vsel %vm676, %v681, %v680
      %vm683 = vcmp.lt.s32.totalorder %v583, 0
      %v684 = vsub.s32 0, %v583
      %v685 = vsel %vm683, %v684, %v583
      %v686 = vshrl.u32 %v685, 4
      %v687 = vand.u32 %v685, 15
      %v688 = vsub.s32 0, %v687
      %v689 = vsel %vm683, %v688, %v687
      %vm690 = vcmp.lt.s32.totalorder %v584, 0
      %v691 = vsub.s32 0, %v584
      %v692 = vsel %vm690, %v691, %v584
      %v693 = vshrl.u32 %v692, 4
      %v694 = vand.u32 %v692, 15
      %v695 = vsub.s32 0, %v694
      %v696 = vsel %vm690, %v695, %v694
      %vm697 = vcmp.ne.s32.totalorder %v591, 0
      %vm698 = vcmp.ne.s32.totalorder %v598, 0
      %vm699 = vcmp.ne.s32.totalorder %v605, 0
      %vm700 = vcmp.ne.s32.totalorder %v612, 0
      %vm701 = vcmp.ne.s32.totalorder %v619, 0
      %vm702 = vcmp.ne.s32.totalorder %v626, 0
      %vm703 = vcmp.ne.s32.totalorder %v633, 0
      %vm704 = vcmp.ne.s32.totalorder %v640, 0
      %vm705 = vcmp.ne.s32.totalorder %v647, 0
      %vm706 = vcmp.ne.s32.totalorder %v654, 0
      %vm707 = vcmp.ne.s32.totalorder %v661, 0
      %vm708 = vcmp.ne.s32.totalorder %v668, 0
      %vm709 = vcmp.ne.s32.totalorder %v675, 0
      %vm710 = vcmp.ne.s32.totalorder %v682, 0
      %vm711 = vcmp.ne.s32.totalorder %v689, 0
      %vm712 = vcmp.ne.s32.totalorder %v696, 0
      %vm713 = vcmp.lt.s32.totalorder %v591, 0
      %vm714 = vcmp.lt.s32.totalorder %v598, 0
      %vm715 = vcmp.lt.s32.totalorder %v605, 0
      %vm716 = vcmp.lt.s32.totalorder %v612, 0
      %vm717 = vcmp.lt.s32.totalorder %v619, 0
      %vm718 = vcmp.lt.s32.totalorder %v626, 0
      %vm719 = vcmp.lt.s32.totalorder %v633, 0
      %vm720 = vcmp.lt.s32.totalorder %v640, 0
      %vm721 = vcmp.lt.s32.totalorder %v647, 0
      %vm722 = vcmp.lt.s32.totalorder %v654, 0
      %vm723 = vcmp.lt.s32.totalorder %v661, 0
      %vm724 = vcmp.lt.s32.totalorder %v668, 0
      %vm725 = vcmp.lt.s32.totalorder %v675, 0
      %vm726 = vcmp.lt.s32.totalorder %v682, 0
      %vm727 = vcmp.lt.s32.totalorder %v689, 0
      %vm728 = vcmp.lt.s32.totalorder %v696, 0
      %vm729 = vmand %vm713, %vm697
      %vm730 = vmand %vm714, %vm698
      %vm731 = vmand %vm715, %vm699
      %vm732 = vmand %vm716, %vm700
      %vm733 = vmand %vm717, %vm701
      %vm734 = vmand %vm718, %vm702
      %vm735 = vmand %vm719, %vm703
      %vm736 = vmand %vm720, %vm704
      %vm737 = vmand %vm721, %vm705
      %vm738 = vmand %vm722, %vm706
      %vm739 = vmand %vm723, %vm707
      %vm740 = vmand %vm724, %vm708
      %vm741 = vmand %vm725, %vm709
      %vm742 = vmand %vm726, %vm710
      %vm743 = vmand %vm727, %vm711
      %vm744 = vmand %vm728, %vm712
      %v745 = vadd.s32 %v591, 16
      %v746 = vadd.s32 %v598, 16
      %v747 = vadd.s32 %v605, 16
      %v748 = vadd.s32 %v612, 16
      %v749 = vadd.s32 %v619, 16
      %v750 = vadd.s32 %v626, 16
      %v751 = vadd.s32 %v633, 16
      %v752 = vadd.s32 %v640, 16
      %v753 = vadd.s32 %v647, 16
      %v754 = vadd.s32 %v654, 16
      %v755 = vadd.s32 %v661, 16
      %v756 = vadd.s32 %v668, 16
      %v757 = vadd.s32 %v675, 16
      %v758 = vadd.s32 %v682, 16
      %v759 = vadd.s32 %v689, 16
      %v760 = vadd.s32 %v696, 16
      %v761 = vsel %vm729, %v745, %v591
      %v762 = vsel %vm730, %v746, %v598
      %v763 = vsel %vm731, %v747, %v605
      %v764 = vsel %vm732, %v748, %v612
      %v765 = vsel %vm733, %v749, %v619
      %v766 = vsel %vm734, %v750, %v626
      %v767 = vsel %vm735, %v751, %v633
      %v768 = vsel %vm736, %v752, %v640
      %v769 = vsel %vm737, %v753, %v647
      %v770 = vsel %vm738, %v754, %v654
      %v771 = vsel %vm739, %v755, %v661
      %v772 = vsel %vm740, %v756, %v668
      %v773 = vsel %vm741, %v757, %v675
      %v774 = vsel %vm742, %v758, %v682
      %v775 = vsel %vm743, %v759, %v689
      %v776 = vsel %vm744, %v760, %v696
      %vm777 = vcmp.gt.s32.totalorder %v761, 0
      %vm778 = vcmp.gt.s32.totalorder %v762, 0
      %vm779 = vcmp.gt.s32.totalorder %v763, 0
      %vm780 = vcmp.gt.s32.totalorder %v764, 0
      %vm781 = vcmp.gt.s32.totalorder %v765, 0
      %vm782 = vcmp.gt.s32.totalorder %v766, 0
      %vm783 = vcmp.gt.s32.totalorder %v767, 0
      %vm784 = vcmp.gt.s32.totalorder %v768, 0
      %vm785 = vcmp.gt.s32.totalorder %v769, 0
      %vm786 = vcmp.gt.s32.totalorder %v770, 0
      %vm787 = vcmp.gt.s32.totalorder %v771, 0
      %vm788 = vcmp.gt.s32.totalorder %v772, 0
      %vm789 = vcmp.gt.s32.totalorder %v773, 0
      %vm790 = vcmp.gt.s32.totalorder %v774, 0
      %vm791 = vcmp.gt.s32.totalorder %v775, 0
      %vm792 = vcmp.gt.s32.totalorder %v776, 0
      %vm793 = vcmp.lt.s32.totalorder %v761, 15
      %vm794 = vcmp.lt.s32.totalorder %v762, 15
      %vm795 = vcmp.lt.s32.totalorder %v763, 15
      %vm796 = vcmp.lt.s32.totalorder %v764, 15
      %vm797 = vcmp.lt.s32.totalorder %v765, 15
      %vm798 = vcmp.lt.s32.totalorder %v766, 15
      %vm799 = vcmp.lt.s32.totalorder %v767, 15
      %vm800 = vcmp.lt.s32.totalorder %v768, 15
      %vm801 = vcmp.lt.s32.totalorder %v769, 15
      %vm802 = vcmp.lt.s32.totalorder %v770, 15
      %vm803 = vcmp.lt.s32.totalorder %v771, 15
      %vm804 = vcmp.lt.s32.totalorder %v772, 15
      %vm805 = vcmp.lt.s32.totalorder %v773, 15
      %vm806 = vcmp.lt.s32.totalorder %v774, 15
      %vm807 = vcmp.lt.s32.totalorder %v775, 15
      %vm808 = vcmp.lt.s32.totalorder %v776, 15
      %v809 = vrot.slane %v545, 7
      %v810 = vrot.slane %v546, 7
      %v811 = vrot.slane %v552, 7
      %v812 = vrot.slane %v553, 7
      %v813 = vrot.slane %v554, 7
      %v814 = vrot.slane %v555, 7
      %v815 = vrot.slane %v556, 7
      %v816 = vrot.slane %v557, 7
      %v817 = vrot.slane %v558, 7
      %v818 = vrot.slane %v559, 7
      %v819 = vrot.slane %v560, 7
      %v820 = vrot.slane %v561, 7
      %v821 = vrot.slane %v562, 7
      %v822 = vrot.slane %v563, 7
      %v823 = vrot.slane %v564, 7
      %v824 = vrot.slane %v565, 7
      %vm825 = vcmp.lt.s32.totalorder %v569, 1
      %v826 = vsel %vm825, %v823, %v824
      %v827 = vsel %vm825, %v822, %v823
      %v828 = vsel %vm825, %v821, %v822
      %v829 = vsel %vm825, %v820, %v821
      %v830 = vsel %vm825, %v819, %v820
      %v831 = vsel %vm825, %v818, %v819
      %v832 = vsel %vm825, %v817, %v818
      %v833 = vsel %vm825, %v816, %v817
      %v834 = vsel %vm825, %v815, %v816
      %v835 = vsel %vm825, %v814, %v815
      %v836 = vsel %vm825, %v813, %v814
      %v837 = vsel %vm825, %v812, %v813
      %v838 = vsel %vm825, %v811, %v812
      %v839 = vsel %vm825, %v810, %v811
      %v840 = vsel %vm825, %v809, %v810
      %v841 = vsel %vm825, %v824, %v809
      %v842 = vsel %vm777, %v841, 0.0
      %v843 = vsel %vm778, %v840, 0.0
      %v844 = vsel %vm779, %v839, 0.0
      %v845 = vsel %vm780, %v838, 0.0
      %v846 = vsel %vm781, %v837, 0.0
      %v847 = vsel %vm782, %v836, 0.0
      %v848 = vsel %vm783, %v835, 0.0
      %v849 = vsel %vm784, %v834, 0.0
      %v850 = vsel %vm785, %v833, 0.0
      %v851 = vsel %vm786, %v832, 0.0
      %v852 = vsel %vm787, %v831, 0.0
      %v853 = vsel %vm788, %v830, 0.0
      %v854 = vsel %vm789, %v829, 0.0
      %v855 = vsel %vm790, %v828, 0.0
      %v856 = vsel %vm791, %v827, 0.0
      %v857 = vsel %vm792, %v826, 0.0
      %v858 = vrot.slane %v545, 1
      %v859 = vrot.slane %v546, 1
      %v860 = vrot.slane %v552, 1
      %v861 = vrot.slane %v553, 1
      %v862 = vrot.slane %v554, 1
      %v863 = vrot.slane %v555, 1
      %v864 = vrot.slane %v556, 1
      %v865 = vrot.slane %v557, 1
      %v866 = vrot.slane %v558, 1
      %v867 = vrot.slane %v559, 1
      %v868 = vrot.slane %v560, 1
      %v869 = vrot.slane %v561, 1
      %v870 = vrot.slane %v562, 1
      %v871 = vrot.slane %v563, 1
      %v872 = vrot.slane %v564, 1
      %v873 = vrot.slane %v565, 1
      %vm874 = vcmp.lt.s32.totalorder %v569, 7
      %v875 = vsel %vm874, %v872, %v873
      %v876 = vsel %vm874, %v871, %v872
      %v877 = vsel %vm874, %v870, %v871
      %v878 = vsel %vm874, %v869, %v870
      %v879 = vsel %vm874, %v868, %v869
      %v880 = vsel %vm874, %v867, %v868
      %v881 = vsel %vm874, %v866, %v867
      %v882 = vsel %vm874, %v865, %v866
      %v883 = vsel %vm874, %v864, %v865
      %v884 = vsel %vm874, %v863, %v864
      %v885 = vsel %vm874, %v862, %v863
      %v886 = vsel %vm874, %v861, %v862
      %v887 = vsel %vm874, %v860, %v861
      %v888 = vsel %vm874, %v859, %v860
      %v889 = vsel %vm874, %v858, %v859
      %v890 = vsel %vm874, %v873, %v858
      %v891 = vsel %vm793, %v889, 0.0
      %v892 = vsel %vm794, %v888, 0.0
      %v893 = vsel %vm795, %v887, 0.0
      %v894 = vsel %vm796, %v886, 0.0
      %v895 = vsel %vm797, %v885, 0.0
      %v896 = vsel %vm798, %v884, 0.0
      %v897 = vsel %vm799, %v883, 0.0
      %v898 = vsel %vm800, %v882, 0.0
      %v899 = vsel %vm801, %v881, 0.0
      %v900 = vsel %vm802, %v880, 0.0
      %v901 = vsel %vm803, %v879, 0.0
      %v902 = vsel %vm804, %v878, 0.0
      %v903 = vsel %vm805, %v877, 0.0
      %v904 = vsel %vm806, %v876, 0.0
      %v905 = vsel %vm807, %v875, 0.0
      %v906 = vsel %vm808, %v890, 0.0
      %v907 = vpack.c.bf16 %v843, %v842
      %v908 = vpack.c.bf16 %v845, %v844
      %v909 = vpack.c.bf16 %v847, %v846
      %v910 = vpack.c.bf16 %v849, %v848
      %v911 = vpack.c.bf16 %v851, %v850
      %v912 = vpack.c.bf16 %v853, %v852
      %v913 = vpack.c.bf16 %v855, %v854
      %v914 = vpack.c.bf16 %v857, %v856
      %v915 = vld [vmem:[%s4] sm:$0xf]
      %v916 = vld [vmem:[%s4 + $0x4] sm:$0xf]
      %v917 = vpack.c.bf16 %v546, %v545
      %v918 = vpack.c.bf16 %v553, %v552
      %v919 = vpack.c.bf16 %v555, %v554
      %v920 = vpack.c.bf16 %v557, %v556
      %v921 = vpack.c.bf16 %v559, %v558
      %v922 = vpack.c.bf16 %v561, %v560
      %v923 = vpack.c.bf16 %v563, %v562
      %v924 = vpack.c.bf16 %v565, %v564
      %s925 = scalar_lea.vmem %s4, 8
      %v926 = vld [vmem:[%s925] sm:$0xf]
      %v927 = vld [vmem:[%s925 + $0x4] sm:$0xf]
      %v930 = vunpack.c.l.b16 %v926
      %v931 = vunpack.c.l.b16 %v927
      %v932 = vpack.c.b16 %v931, %v930
      %vm934 = vcmask 130048
      %v936 = vsel %vm934, %v917, 0
      %v939 = vsel %vm934, %v918, 0
      %v942 = vsel %vm934, %v919, 0
      %v945 = vsel %vm934, %v920, 0
      %v948 = vsel %vm934, %v921, 0
      %v951 = vsel %vm934, %v922, 0
      %v954 = vsel %vm934, %v923, 0
      %v957 = vsel %vm934, %v924, 0
      %959 = vmatpush.bf16.msra.mxu0 0
      %960 = vmatpush.bf16.msra.mxu0 0
      %961 = vmatpush.bf16.msra.mxu0 0
      %962 = vmatpush.bf16.msra.mxu0 0
      %963 = vmatpush.bf16.msra.mxu0 0
      %964 = vmatpush.bf16.msra.mxu0 0
      %965 = vmatpush.bf16.msra.mxu0 0
      %966 = vmatpush.bf16.msra.mxu0 %v932
      %967 = vmatmul.bf16.gmra.mxu0 %v936
      %v968 = vpop.f32.mrf.mxu0
      %v969 = vadd.f32 0.0, %v968
      %v970 = vpop.f32.mrf.mxu0
      %v971 = vadd.f32 0.0, %v970
      %972 = vmatmul.bf16.gmra.mxu0 %v939
      %v973 = vpop.f32.mrf.mxu0
      %v974 = vadd.f32 0.0, %v973
      %v975 = vpop.f32.mrf.mxu0
      %v976 = vadd.f32 0.0, %v975
      %977 = vmatmul.bf16.gmra.mxu0 %v942
      %v978 = vpop.f32.mrf.mxu0
      %v979 = vadd.f32 0.0, %v978
      %v980 = vpop.f32.mrf.mxu0
      %v981 = vadd.f32 0.0, %v980
      %982 = vmatmul.bf16.gmra.mxu0 %v945
      %v983 = vpop.f32.mrf.mxu0
      %v984 = vadd.f32 0.0, %v983
      %v985 = vpop.f32.mrf.mxu0
      %v986 = vadd.f32 0.0, %v985
      %987 = vmatmul.bf16.gmra.mxu0 %v948
      %v988 = vpop.f32.mrf.mxu0
      %v989 = vadd.f32 0.0, %v988
      %v990 = vpop.f32.mrf.mxu0
      %v991 = vadd.f32 0.0, %v990
      %992 = vmatmul.bf16.gmra.mxu0 %v951
      %v993 = vpop.f32.mrf.mxu0
      %v994 = vadd.f32 0.0, %v993
      %v995 = vpop.f32.mrf.mxu0
      %v996 = vadd.f32 0.0, %v995
      %997 = vmatmul.bf16.gmra.mxu0 %v954
      %v998 = vpop.f32.mrf.mxu0
      %v999 = vadd.f32 0.0, %v998
      %v1000 = vpop.f32.mrf.mxu0
      %v1001 = vadd.f32 0.0, %v1000
      %1002 = vmatmul.bf16.gmra.mxu0 %v957
      %v1003 = vpop.f32.mrf.mxu0
      %v1004 = vadd.f32 0.0, %v1003
      %v1005 = vpop.f32.mrf.mxu0
      %v1006 = vadd.f32 0.0, %v1005
      %1007 = vdwg.mxu0
      %v1010 = vunpack.c.l.b16 %v915
      %v1011 = vunpack.c.l.b16 %v916
      %v1012 = vpack.c.b16 %v1011, %v1010
      %v1015 = vsel %vm934, %v907, 0
      %v1018 = vsel %vm934, %v908, 0
      %v1021 = vsel %vm934, %v909, 0
      %v1024 = vsel %vm934, %v910, 0
      %v1027 = vsel %vm934, %v911, 0
      %v1030 = vsel %vm934, %v912, 0
      %v1033 = vsel %vm934, %v913, 0
      %v1036 = vsel %vm934, %v914, 0
      %1038 = vmatpush.bf16.msra.mxu0 0
      %1039 = vmatpush.bf16.msra.mxu0 0
      %1040 = vmatpush.bf16.msra.mxu0 0
      %1041 = vmatpush.bf16.msra.mxu0 0
      %1042 = vmatpush.bf16.msra.mxu0 0
      %1043 = vmatpush.bf16.msra.mxu0 0
      %1044 = vmatpush.bf16.msra.mxu0 0
      %1045 = vmatpush.bf16.msra.mxu0 %v1012
      %1046 = vmatmul.bf16.gmra.mxu0 %v1015
      %v1047 = vpop.f32.mrf.mxu0
      %v1048 = vadd.f32 %v969, %v1047
      %v1049 = vpop.f32.mrf.mxu0
      %v1050 = vadd.f32 %v971, %v1049
      %1051 = vmatmul.bf16.gmra.mxu0 %v1018
      %v1052 = vpop.f32.mrf.mxu0
      %v1053 = vadd.f32 %v974, %v1052
      %v1054 = vpop.f32.mrf.mxu0
      %v1055 = vadd.f32 %v976, %v1054
      %1056 = vmatmul.bf16.gmra.mxu0 %v1021
      %v1057 = vpop.f32.mrf.mxu0
      %v1058 = vadd.f32 %v979, %v1057
      %v1059 = vpop.f32.mrf.mxu0
      %v1060 = vadd.f32 %v981, %v1059
      %1061 = vmatmul.bf16.gmra.mxu0 %v1024
      %v1062 = vpop.f32.mrf.mxu0
      %v1063 = vadd.f32 %v984, %v1062
      %v1064 = vpop.f32.mrf.mxu0
      %v1065 = vadd.f32 %v986, %v1064
      %1066 = vmatmul.bf16.gmra.mxu0 %v1027
      %v1067 = vpop.f32.mrf.mxu0
      %v1068 = vadd.f32 %v989, %v1067
      %v1069 = vpop.f32.mrf.mxu0
      %v1070 = vadd.f32 %v991, %v1069
      %1071 = vmatmul.bf16.gmra.mxu0 %v1030
      %v1072 = vpop.f32.mrf.mxu0
      %v1073 = vadd.f32 %v994, %v1072
      %v1074 = vpop.f32.mrf.mxu0
      %v1075 = vadd.f32 %v996, %v1074
      %1076 = vmatmul.bf16.gmra.mxu0 %v1033
      %v1077 = vpop.f32.mrf.mxu0
      %v1078 = vadd.f32 %v999, %v1077
      %v1079 = vpop.f32.mrf.mxu0
      %v1080 = vadd.f32 %v1001, %v1079
      %1081 = vmatmul.bf16.gmra.mxu0 %v1036
      %v1082 = vpop.f32.mrf.mxu0
      %v1083 = vadd.f32 %v1004, %v1082
      %v1084 = vpop.f32.mrf.mxu0
      %v1085 = vadd.f32 %v1006, %v1084
      %1086 = vdwg.mxu0
      %v1087 = vpack.c.bf16 %v892, %v891
      %v1088 = vpack.c.bf16 %v894, %v893
      %v1089 = vpack.c.bf16 %v896, %v895
      %v1090 = vpack.c.bf16 %v898, %v897
      %v1091 = vpack.c.bf16 %v900, %v899
      %v1092 = vpack.c.bf16 %v902, %v901
      %v1093 = vpack.c.bf16 %v904, %v903
      %v1094 = vpack.c.bf16 %v906, %v905
      %s1095 = scalar_lea.vmem %s4, 16
      %v1096 = vld [vmem:[%s1095] sm:$0xf]
      %v1097 = vld [vmem:[%s1095 + $0x4] sm:$0xf]
      %v1100 = vunpack.c.l.b16 %v1096
      %v1101 = vunpack.c.l.b16 %v1097
      %v1102 = vpack.c.b16 %v1101, %v1100
      %v1105 = vsel %vm934, %v1087, 0
      %v1108 = vsel %vm934, %v1088, 0
      %v1111 = vsel %vm934, %v1089, 0
      %v1114 = vsel %vm934, %v1090, 0
      %v1117 = vsel %vm934, %v1091, 0
      %v1120 = vsel %vm934, %v1092, 0
      %v1123 = vsel %vm934, %v1093, 0
      %v1126 = vsel %vm934, %v1094, 0
      %1128 = vmatpush.bf16.msra.mxu0 0
      %1129 = vmatpush.bf16.msra.mxu0 0
      %1130 = vmatpush.bf16.msra.mxu0 0
      %1131 = vmatpush.bf16.msra.mxu0 0
      %1132 = vmatpush.bf16.msra.mxu0 0
      %1133 = vmatpush.bf16.msra.mxu0 0
      %1134 = vmatpush.bf16.msra.mxu0 0
      %1135 = vmatpush.bf16.msra.mxu0 %v1102
      %1136 = vmatmul.bf16.gmra.mxu0 %v1105
      %v1137 = vpop.f32.mrf.mxu0
      %v1138 = vadd.f32 0.0, %v1137
      %v1139 = vpop.f32.mrf.mxu0
      %v1140 = vadd.f32 0.0, %v1139
      %1141 = vmatmul.bf16.gmra.mxu0 %v1108
      %v1142 = vpop.f32.mrf.mxu0
      %v1143 = vadd.f32 0.0, %v1142
      %v1144 = vpop.f32.mrf.mxu0
      %v1145 = vadd.f32 0.0, %v1144
      %1146 = vmatmul.bf16.gmra.mxu0 %v1111
      %v1147 = vpop.f32.mrf.mxu0
      %v1148 = vadd.f32 0.0, %v1147
      %v1149 = vpop.f32.mrf.mxu0
      %v1150 = vadd.f32 0.0, %v1149
      %1151 = vmatmul.bf16.gmra.mxu0 %v1114
      %v1152 = vpop.f32.mrf.mxu0
      %v1153 = vadd.f32 0.0, %v1152
      %v1154 = vpop.f32.mrf.mxu0
      %v1155 = vadd.f32 0.0, %v1154
      %1156 = vmatmul.bf16.gmra.mxu0 %v1117
      %v1157 = vpop.f32.mrf.mxu0
      %v1158 = vadd.f32 0.0, %v1157
      %v1159 = vpop.f32.mrf.mxu0
      %v1160 = vadd.f32 0.0, %v1159
      %1161 = vmatmul.bf16.gmra.mxu0 %v1120
      %v1162 = vpop.f32.mrf.mxu0
      %v1163 = vadd.f32 0.0, %v1162
      %v1164 = vpop.f32.mrf.mxu0
      %v1165 = vadd.f32 0.0, %v1164
      %1166 = vmatmul.bf16.gmra.mxu0 %v1123
      %v1167 = vpop.f32.mrf.mxu0
      %v1168 = vadd.f32 0.0, %v1167
      %v1169 = vpop.f32.mrf.mxu0
      %v1170 = vadd.f32 0.0, %v1169
      %1171 = vmatmul.bf16.gmra.mxu0 %v1126
      %v1172 = vpop.f32.mrf.mxu0
      %v1173 = vadd.f32 0.0, %v1172
      %v1174 = vpop.f32.mrf.mxu0
      %v1175 = vadd.f32 0.0, %v1174
      %1176 = vdwg.mxu0
      %v1177 = vadd.f32 %v1048, %v1138
      %v1178 = vadd.f32 %v1050, %v1140
      %v1179 = vadd.f32 %v1053, %v1143
      %v1180 = vadd.f32 %v1055, %v1145
      %v1181 = vadd.f32 %v1058, %v1148
      %v1182 = vadd.f32 %v1060, %v1150
      %v1183 = vadd.f32 %v1063, %v1153
      %v1184 = vadd.f32 %v1065, %v1155
      %v1185 = vadd.f32 %v1068, %v1158
      %v1186 = vadd.f32 %v1070, %v1160
      %v1187 = vadd.f32 %v1073, %v1163
      %v1188 = vadd.f32 %v1075, %v1165
      %v1189 = vadd.f32 %v1078, %v1168
      %v1190 = vadd.f32 %v1080, %v1170
      %v1191 = vadd.f32 %v1083, %v1173
      %v1192 = vadd.f32 %v1085, %v1175
      %v1193 = vrot.slane %v566, 7
      %v1194 = vrot.slane %v567, 7
      %v1195 = vsel %vm825, %v1193, %v1194
      %v1196 = vsel %vm825, %v824, %v1193
      %v1197 = vsel %vm825, %v1194, %v811
      %v1198 = vsel %vm777, %v1197, 0.0
      %v1199 = vsel %vm778, %v838, 0.0
      %v1200 = vsel %vm779, %v837, 0.0
      %v1201 = vsel %vm780, %v836, 0.0
      %v1202 = vsel %vm781, %v835, 0.0
      %v1203 = vsel %vm782, %v834, 0.0
      %v1204 = vsel %vm783, %v833, 0.0
      %v1205 = vsel %vm784, %v832, 0.0
      %v1206 = vsel %vm785, %v831, 0.0
      %v1207 = vsel %vm786, %v830, 0.0
      %v1208 = vsel %vm787, %v829, 0.0
      %v1209 = vsel %vm788, %v828, 0.0
      %v1210 = vsel %vm789, %v827, 0.0
      %v1211 = vsel %vm790, %v826, 0.0
      %v1212 = vsel %vm791, %v1196, 0.0
      %v1213 = vsel %vm792, %v1195, 0.0
      %v1214 = vrot.slane %v566, 1
      %v1215 = vrot.slane %v567, 1
      %v1216 = vsel %vm874, %v1214, %v1215
      %v1217 = vsel %vm874, %v873, %v1214
      %v1218 = vsel %vm874, %v1215, %v860
      %v1219 = vsel %vm793, %v887, 0.0
      %v1220 = vsel %vm794, %v886, 0.0
      %v1221 = vsel %vm795, %v885, 0.0
      %v1222 = vsel %vm796, %v884, 0.0
      %v1223 = vsel %vm797, %v883, 0.0
      %v1224 = vsel %vm798, %v882, 0.0
      %v1225 = vsel %vm799, %v881, 0.0
      %v1226 = vsel %vm800, %v880, 0.0
      %v1227 = vsel %vm801, %v879, 0.0
      %v1228 = vsel %vm802, %v878, 0.0
      %v1229 = vsel %vm803, %v877, 0.0
      %v1230 = vsel %vm804, %v876, 0.0
      %v1231 = vsel %vm805, %v875, 0.0
      %v1232 = vsel %vm806, %v1217, 0.0
      %v1233 = vsel %vm807, %v1216, 0.0
      %v1234 = vsel %vm808, %v1218, 0.0
      %v1235 = vpack.c.bf16 %v1199, %v1198
      %v1236 = vpack.c.bf16 %v1201, %v1200
      %v1237 = vpack.c.bf16 %v1203, %v1202
      %v1238 = vpack.c.bf16 %v1205, %v1204
      %v1239 = vpack.c.bf16 %v1207, %v1206
      %v1240 = vpack.c.bf16 %v1209, %v1208
      %v1241 = vpack.c.bf16 %v1211, %v1210
      %v1242 = vpack.c.bf16 %v1213, %v1212
      %s1243 = scalar_lea.vmem %s4, 24
      %v1244 = vld [vmem:[%s1243] sm:$0xf]
      %v1245 = vld [vmem:[%s1243 + $0x4] sm:$0xf]
      %v1248 = vunpack.c.l.b16 %v1244
      %v1249 = vunpack.c.l.b16 %v1245
      %v1250 = vpack.c.b16 %v1249, %v1248
      %v1253 = vsel %vm934, %v1235, 0
      %v1256 = vsel %vm934, %v1236, 0
      %v1259 = vsel %vm934, %v1237, 0
      %v1262 = vsel %vm934, %v1238, 0
      %v1265 = vsel %vm934, %v1239, 0
      %v1268 = vsel %vm934, %v1240, 0
      %v1271 = vsel %vm934, %v1241, 0
      %v1274 = vsel %vm934, %v1242, 0
      %1276 = vmatpush.bf16.msra.mxu0 0
      %1277 = vmatpush.bf16.msra.mxu0 0
      %1278 = vmatpush.bf16.msra.mxu0 0
      %1279 = vmatpush.bf16.msra.mxu0 0
      %1280 = vmatpush.bf16.msra.mxu0 0
      %1281 = vmatpush.bf16.msra.mxu0 0
      %1282 = vmatpush.bf16.msra.mxu0 0
      %1283 = vmatpush.bf16.msra.mxu0 %v1250
      %1284 = vmatmul.bf16.gmra.mxu0 %v1253
      %v1285 = vpop.f32.mrf.mxu0
      %v1286 = vadd.f32 0.0, %v1285
      %v1287 = vpop.f32.mrf.mxu0
      %v1288 = vadd.f32 0.0, %v1287
      %1289 = vmatmul.bf16.gmra.mxu0 %v1256
      %v1290 = vpop.f32.mrf.mxu0
      %v1291 = vadd.f32 0.0, %v1290
      %v1292 = vpop.f32.mrf.mxu0
      %v1293 = vadd.f32 0.0, %v1292
      %1294 = vmatmul.bf16.gmra.mxu0 %v1259
      %v1295 = vpop.f32.mrf.mxu0
      %v1296 = vadd.f32 0.0, %v1295
      %v1297 = vpop.f32.mrf.mxu0
      %v1298 = vadd.f32 0.0, %v1297
      %1299 = vmatmul.bf16.gmra.mxu0 %v1262
      %v1300 = vpop.f32.mrf.mxu0
      %v1301 = vadd.f32 0.0, %v1300
      %v1302 = vpop.f32.mrf.mxu0
      %v1303 = vadd.f32 0.0, %v1302
      %1304 = vmatmul.bf16.gmra.mxu0 %v1265
      %v1305 = vpop.f32.mrf.mxu0
      %v1306 = vadd.f32 0.0, %v1305
      %v1307 = vpop.f32.mrf.mxu0
      %v1308 = vadd.f32 0.0, %v1307
      %1309 = vmatmul.bf16.gmra.mxu0 %v1268
      %v1310 = vpop.f32.mrf.mxu0
      %v1311 = vadd.f32 0.0, %v1310
      %v1312 = vpop.f32.mrf.mxu0
      %v1313 = vadd.f32 0.0, %v1312
      %1314 = vmatmul.bf16.gmra.mxu0 %v1271
      %v1315 = vpop.f32.mrf.mxu0
      %v1316 = vadd.f32 0.0, %v1315
      %v1317 = vpop.f32.mrf.mxu0
      %v1318 = vadd.f32 0.0, %v1317
      %1319 = vmatmul.bf16.gmra.mxu0 %v1274
      %v1320 = vpop.f32.mrf.mxu0
      %v1321 = vadd.f32 0.0, %v1320
      %v1322 = vpop.f32.mrf.mxu0
      %v1323 = vadd.f32 0.0, %v1322
      %1324 = vdwg.mxu0
      %v1325 = vadd.f32 %v1177, %v1286
      %v1326 = vadd.f32 %v1178, %v1288
      %v1327 = vadd.f32 %v1179, %v1291
      %v1328 = vadd.f32 %v1180, %v1293
      %v1329 = vadd.f32 %v1181, %v1296
      %v1330 = vadd.f32 %v1182, %v1298
      %v1331 = vadd.f32 %v1183, %v1301
      %v1332 = vadd.f32 %v1184, %v1303
      %v1333 = vadd.f32 %v1185, %v1306
      %v1334 = vadd.f32 %v1186, %v1308
      %v1335 = vadd.f32 %v1187, %v1311
      %v1336 = vadd.f32 %v1188, %v1313
      %v1337 = vadd.f32 %v1189, %v1316
      %v1338 = vadd.f32 %v1190, %v1318
      %v1339 = vadd.f32 %v1191, %v1321
      %v1340 = vadd.f32 %v1192, %v1323
      %v1341 = vpack.c.bf16 %v567, %v566
      %s1342 = scalar_lea.vmem %s4, 32
      %v1343 = vld [vmem:[%s1342] sm:$0xf]
      %v1344 = vld [vmem:[%s1342 + $0x4] sm:$0xf]
      %v1347 = vunpack.c.l.b16 %v1343
      %v1348 = vunpack.c.l.b16 %v1344
      %v1349 = vpack.c.b16 %v1348, %v1347
      %v1352 = vsel %vm934, %v1341, 0
      %1354 = vmatpush.bf16.msra.mxu0 0
      %1355 = vmatpush.bf16.msra.mxu0 0
      %1356 = vmatpush.bf16.msra.mxu0 0
      %1357 = vmatpush.bf16.msra.mxu0 0
      %1358 = vmatpush.bf16.msra.mxu0 0
      %1359 = vmatpush.bf16.msra.mxu0 0
      %1360 = vmatpush.bf16.msra.mxu0 0
      %1361 = vmatpush.bf16.msra.mxu0 %v1349
      %1362 = vmatmul.bf16.gmra.mxu0 %v939
      %v1363 = vpop.f32.mrf.mxu0
      %v1364 = vadd.f32 0.0, %v1363
      %v1365 = vpop.f32.mrf.mxu0
      %v1366 = vadd.f32 0.0, %v1365
      %1367 = vmatmul.bf16.gmra.mxu0 %v942
      %v1368 = vpop.f32.mrf.mxu0
      %v1369 = vadd.f32 0.0, %v1368
      %v1370 = vpop.f32.mrf.mxu0
      %v1371 = vadd.f32 0.0, %v1370
      %1372 = vmatmul.bf16.gmra.mxu0 %v945
      %v1373 = vpop.f32.mrf.mxu0
      %v1374 = vadd.f32 0.0, %v1373
      %v1375 = vpop.f32.mrf.mxu0
      %v1376 = vadd.f32 0.0, %v1375
      %1377 = vmatmul.bf16.gmra.mxu0 %v948
      %v1378 = vpop.f32.mrf.mxu0
      %v1379 = vadd.f32 0.0, %v1378
      %v1380 = vpop.f32.mrf.mxu0
      %v1381 = vadd.f32 0.0, %v1380
      %1382 = vmatmul.bf16.gmra.mxu0 %v951
      %v1383 = vpop.f32.mrf.mxu0
      %v1384 = vadd.f32 0.0, %v1383
      %v1385 = vpop.f32.mrf.mxu0
      %v1386 = vadd.f32 0.0, %v1385
      %1387 = vmatmul.bf16.gmra.mxu0 %v954
      %v1388 = vpop.f32.mrf.mxu0
      %v1389 = vadd.f32 0.0, %v1388
      %v1390 = vpop.f32.mrf.mxu0
      %v1391 = vadd.f32 0.0, %v1390
      %1392 = vmatmul.bf16.gmra.mxu0 %v957
      %v1393 = vpop.f32.mrf.mxu0
      %v1394 = vadd.f32 0.0, %v1393
      %v1395 = vpop.f32.mrf.mxu0
      %v1396 = vadd.f32 0.0, %v1395
      %1397 = vmatmul.bf16.gmra.mxu0 %v1352
      %v1398 = vpop.f32.mrf.mxu0
      %v1399 = vadd.f32 0.0, %v1398
      %v1400 = vpop.f32.mrf.mxu0
      %v1401 = vadd.f32 0.0, %v1400
      %1402 = vdwg.mxu0
      %v1403 = vadd.f32 %v1325, %v1364
      %v1404 = vadd.f32 %v1326, %v1366
      %v1405 = vadd.f32 %v1327, %v1369
      %v1406 = vadd.f32 %v1328, %v1371
      %v1407 = vadd.f32 %v1329, %v1374
      %v1408 = vadd.f32 %v1330, %v1376
      %v1409 = vadd.f32 %v1331, %v1379
      %v1410 = vadd.f32 %v1332, %v1381
      %v1411 = vadd.f32 %v1333, %v1384
      %v1412 = vadd.f32 %v1334, %v1386
      %v1413 = vadd.f32 %v1335, %v1389
      %v1414 = vadd.f32 %v1336, %v1391
      %v1415 = vadd.f32 %v1337, %v1394
      %v1416 = vadd.f32 %v1338, %v1396
      %v1417 = vadd.f32 %v1339, %v1399
      %v1418 = vadd.f32 %v1340, %v1401
      %v1419 = vpack.c.bf16 %v1220, %v1219
      %v1420 = vpack.c.bf16 %v1222, %v1221
      %v1421 = vpack.c.bf16 %v1224, %v1223
      %v1422 = vpack.c.bf16 %v1226, %v1225
      %v1423 = vpack.c.bf16 %v1228, %v1227
      %v1424 = vpack.c.bf16 %v1230, %v1229
      %v1425 = vpack.c.bf16 %v1232, %v1231
      %v1426 = vpack.c.bf16 %v1234, %v1233
      %s1427 = scalar_lea.vmem %s4, 40
      %v1428 = vld [vmem:[%s1427] sm:$0xf]
      %v1429 = vld [vmem:[%s1427 + $0x4] sm:$0xf]
      %v1432 = vunpack.c.l.b16 %v1428
      %v1433 = vunpack.c.l.b16 %v1429
      %v1434 = vpack.c.b16 %v1433, %v1432
      %v1437 = vsel %vm934, %v1419, 0
      %v1440 = vsel %vm934, %v1420, 0
      %v1443 = vsel %vm934, %v1421, 0
      %v1446 = vsel %vm934, %v1422, 0
      %v1449 = vsel %vm934, %v1423, 0
      %v1452 = vsel %vm934, %v1424, 0
      %v1455 = vsel %vm934, %v1425, 0
      %v1458 = vsel %vm934, %v1426, 0
      %1460 = vmatpush.bf16.msra.mxu0 0
      %1461 = vmatpush.bf16.msra.mxu0 0
      %1462 = vmatpush.bf16.msra.mxu0 0
      %1463 = vmatpush.bf16.msra.mxu0 0
      %1464 = vmatpush.bf16.msra.mxu0 0
      %1465 = vmatpush.bf16.msra.mxu0 0
      %1466 = vmatpush.bf16.msra.mxu0 0
      %1467 = vmatpush.bf16.msra.mxu0 %v1434
      %1468 = vmatmul.bf16.gmra.mxu0 %v1437
      %v1469 = vpop.f32.mrf.mxu0
      %v1470 = vadd.f32 0.0, %v1469
      %v1471 = vpop.f32.mrf.mxu0
      %v1472 = vadd.f32 0.0, %v1471
      %1473 = vmatmul.bf16.gmra.mxu0 %v1440
      %v1474 = vpop.f32.mrf.mxu0
      %v1475 = vadd.f32 0.0, %v1474
      %v1476 = vpop.f32.mrf.mxu0
      %v1477 = vadd.f32 0.0, %v1476
      %1478 = vmatmul.bf16.gmra.mxu0 %v1443
      %v1479 = vpop.f32.mrf.mxu0
      %v1480 = vadd.f32 0.0, %v1479
      %v1481 = vpop.f32.mrf.mxu0
      %v1482 = vadd.f32 0.0, %v1481
      %1483 = vmatmul.bf16.gmra.mxu0 %v1446
      %v1484 = vpop.f32.mrf.mxu0
      %v1485 = vadd.f32 0.0, %v1484
      %v1486 = vpop.f32.mrf.mxu0
      %v1487 = vadd.f32 0.0, %v1486
      %1488 = vmatmul.bf16.gmra.mxu0 %v1449
      %v1489 = vpop.f32.mrf.mxu0
      %v1490 = vadd.f32 0.0, %v1489
      %v1491 = vpop.f32.mrf.mxu0
      %v1492 = vadd.f32 0.0, %v1491
      %1493 = vmatmul.bf16.gmra.mxu0 %v1452
      %v1494 = vpop.f32.mrf.mxu0
      %v1495 = vadd.f32 0.0, %v1494
      %v1496 = vpop.f32.mrf.mxu0
      %v1497 = vadd.f32 0.0, %v1496
      %1498 = vmatmul.bf16.gmra.mxu0 %v1455
      %v1499 = vpop.f32.mrf.mxu0
      %v1500 = vadd.f32 0.0, %v1499
      %v1501 = vpop.f32.mrf.mxu0
      %v1502 = vadd.f32 0.0, %v1501
      %1503 = vmatmul.bf16.gmra.mxu0 %v1458
      %v1504 = vpop.f32.mrf.mxu0
      %v1505 = vadd.f32 0.0, %v1504
      %v1506 = vpop.f32.mrf.mxu0
      %v1507 = vadd.f32 0.0, %v1506
      %1508 = vdwg.mxu0
      %v1509 = vadd.f32 %v1403, %v1470
      %v1510 = vadd.f32 %v1404, %v1472
      %v1511 = vadd.f32 %v1405, %v1475
      %v1512 = vadd.f32 %v1406, %v1477
      %v1513 = vadd.f32 %v1407, %v1480
      %v1514 = vadd.f32 %v1408, %v1482
      %v1515 = vadd.f32 %v1409, %v1485
      %v1516 = vadd.f32 %v1410, %v1487
      %v1517 = vadd.f32 %v1411, %v1490
      %v1518 = vadd.f32 %v1412, %v1492
      %v1519 = vadd.f32 %v1413, %v1495
      %v1520 = vadd.f32 %v1414, %v1497
      %v1521 = vadd.f32 %v1415, %v1500
      %v1522 = vadd.f32 %v1416, %v1502
      %v1523 = vadd.f32 %v1417, %v1505
      %v1524 = vadd.f32 %v1418, %v1507
      %v1525 = vrot.slane %v550, 7
      %v1526 = vrot.slane %v551, 7
      %v1527 = vsel %vm825, %v1525, %v1526
      %v1528 = vsel %vm825, %v1194, %v1525
      %v1529 = vsel %vm825, %v1526, %v813
      %v1530 = vsel %vm777, %v1529, 0.0
      %v1531 = vsel %vm778, %v836, 0.0
      %v1532 = vsel %vm779, %v835, 0.0
      %v1533 = vsel %vm780, %v834, 0.0
      %v1534 = vsel %vm781, %v833, 0.0
      %v1535 = vsel %vm782, %v832, 0.0
      %v1536 = vsel %vm783, %v831, 0.0
      %v1537 = vsel %vm784, %v830, 0.0
      %v1538 = vsel %vm785, %v829, 0.0
      %v1539 = vsel %vm786, %v828, 0.0
      %v1540 = vsel %vm787, %v827, 0.0
      %v1541 = vsel %vm788, %v826, 0.0
      %v1542 = vsel %vm789, %v1196, 0.0
      %v1543 = vsel %vm790, %v1195, 0.0
      %v1544 = vsel %vm791, %v1528, 0.0
      %v1545 = vsel %vm792, %v1527, 0.0
      %v1546 = vrot.slane %v550, 1
      %v1547 = vrot.slane %v551, 1
      %v1548 = vsel %vm874, %v1546, %v1547
      %v1549 = vsel %vm874, %v1215, %v1546
      %v1550 = vsel %vm874, %v1547, %v862
      %v1551 = vsel %vm793, %v885, 0.0
      %v1552 = vsel %vm794, %v884, 0.0
      %v1553 = vsel %vm795, %v883, 0.0
      %v1554 = vsel %vm796, %v882, 0.0
      %v1555 = vsel %vm797, %v881, 0.0
      %v1556 = vsel %vm798, %v880, 0.0
      %v1557 = vsel %vm799, %v879, 0.0
      %v1558 = vsel %vm800, %v878, 0.0
      %v1559 = vsel %vm801, %v877, 0.0
      %v1560 = vsel %vm802, %v876, 0.0
      %v1561 = vsel %vm803, %v875, 0.0
      %v1562 = vsel %vm804, %v1217, 0.0
      %v1563 = vsel %vm805, %v1216, 0.0
      %v1564 = vsel %vm806, %v1549, 0.0
      %v1565 = vsel %vm807, %v1548, 0.0
      %v1566 = vsel %vm808, %v1550, 0.0
      %v1567 = vpack.c.bf16 %v1531, %v1530
      %v1568 = vpack.c.bf16 %v1533, %v1532
      %v1569 = vpack.c.bf16 %v1535, %v1534
      %v1570 = vpack.c.bf16 %v1537, %v1536
      %v1571 = vpack.c.bf16 %v1539, %v1538
      %v1572 = vpack.c.bf16 %v1541, %v1540
      %v1573 = vpack.c.bf16 %v1543, %v1542
      %v1574 = vpack.c.bf16 %v1545, %v1544
      %s1575 = scalar_lea.vmem %s4, 48
      %v1576 = vld [vmem:[%s1575] sm:$0xf]
      %v1577 = vld [vmem:[%s1575 + $0x4] sm:$0xf]
      %v1580 = vunpack.c.l.b16 %v1576
      %v1581 = vunpack.c.l.b16 %v1577
      %v1582 = vpack.c.b16 %v1581, %v1580
      %v1585 = vsel %vm934, %v1567, 0
      %v1588 = vsel %vm934, %v1568, 0
      %v1591 = vsel %vm934, %v1569, 0
      %v1594 = vsel %vm934, %v1570, 0
      %v1597 = vsel %vm934, %v1571, 0
      %v1600 = vsel %vm934, %v1572, 0
      %v1603 = vsel %vm934, %v1573, 0
      %v1606 = vsel %vm934, %v1574, 0
      %1608 = vmatpush.bf16.msra.mxu0 0
      %1609 = vmatpush.bf16.msra.mxu0 0
      %1610 = vmatpush.bf16.msra.mxu0 0
      %1611 = vmatpush.bf16.msra.mxu0 0
      %1612 = vmatpush.bf16.msra.mxu0 0
      %1613 = vmatpush.bf16.msra.mxu0 0
      %1614 = vmatpush.bf16.msra.mxu0 0
      %1615 = vmatpush.bf16.msra.mxu0 %v1582
      %1616 = vmatmul.bf16.gmra.mxu0 %v1585
      %v1617 = vpop.f32.mrf.mxu0
      %v1618 = vadd.f32 0.0, %v1617
      %v1619 = vpop.f32.mrf.mxu0
      %v1620 = vadd.f32 0.0, %v1619
      %1621 = vmatmul.bf16.gmra.mxu0 %v1588
      %v1622 = vpop.f32.mrf.mxu0
      %v1623 = vadd.f32 0.0, %v1622
      %v1624 = vpop.f32.mrf.mxu0
      %v1625 = vadd.f32 0.0, %v1624
      %1626 = vmatmul.bf16.gmra.mxu0 %v1591
      %v1627 = vpop.f32.mrf.mxu0
      %v1628 = vadd.f32 0.0, %v1627
      %v1629 = vpop.f32.mrf.mxu0
      %v1630 = vadd.f32 0.0, %v1629
      %1631 = vmatmul.bf16.gmra.mxu0 %v1594
      %v1632 = vpop.f32.mrf.mxu0
      %v1633 = vadd.f32 0.0, %v1632
      %v1634 = vpop.f32.mrf.mxu0
      %v1635 = vadd.f32 0.0, %v1634
      %1636 = vmatmul.bf16.gmra.mxu0 %v1597
      %v1637 = vpop.f32.mrf.mxu0
      %v1638 = vadd.f32 0.0, %v1637
      %v1639 = vpop.f32.mrf.mxu0
      %v1640 = vadd.f32 0.0, %v1639
      %1641 = vmatmul.bf16.gmra.mxu0 %v1600
      %v1642 = vpop.f32.mrf.mxu0
      %v1643 = vadd.f32 0.0, %v1642
      %v1644 = vpop.f32.mrf.mxu0
      %v1645 = vadd.f32 0.0, %v1644
      %1646 = vmatmul.bf16.gmra.mxu0 %v1603
      %v1647 = vpop.f32.mrf.mxu0
      %v1648 = vadd.f32 0.0, %v1647
      %v1649 = vpop.f32.mrf.mxu0
      %v1650 = vadd.f32 0.0, %v1649
      %1651 = vmatmul.bf16.gmra.mxu0 %v1606
      %v1652 = vpop.f32.mrf.mxu0
      %v1653 = vadd.f32 0.0, %v1652
      %v1654 = vpop.f32.mrf.mxu0
      %v1655 = vadd.f32 0.0, %v1654
      %1656 = vdwg.mxu0
      %v1657 = vadd.f32 %v1509, %v1618
      %v1658 = vadd.f32 %v1510, %v1620
      %v1659 = vadd.f32 %v1511, %v1623
      %v1660 = vadd.f32 %v1512, %v1625
      %v1661 = vadd.f32 %v1513, %v1628
      %v1662 = vadd.f32 %v1514, %v1630
      %v1663 = vadd.f32 %v1515, %v1633
      %v1664 = vadd.f32 %v1516, %v1635
      %v1665 = vadd.f32 %v1517, %v1638
      %v1666 = vadd.f32 %v1518, %v1640
      %v1667 = vadd.f32 %v1519, %v1643
      %v1668 = vadd.f32 %v1520, %v1645
      %v1669 = vadd.f32 %v1521, %v1648
      %v1670 = vadd.f32 %v1522, %v1650
      %v1671 = vadd.f32 %v1523, %v1653
      %v1672 = vadd.f32 %v1524, %v1655
      %v1673 = vpack.c.bf16 %v551, %v550
      %s1674 = scalar_lea.vmem %s4, 56
      %v1675 = vld [vmem:[%s1674] sm:$0xf]
      %v1676 = vld [vmem:[%s1674 + $0x4] sm:$0xf]
      %v1679 = vunpack.c.l.b16 %v1675
      %v1680 = vunpack.c.l.b16 %v1676
      %v1681 = vpack.c.b16 %v1680, %v1679
      %v1684 = vsel %vm934, %v1673, 0
      %1686 = vmatpush.bf16.msra.mxu0 0
      %1687 = vmatpush.bf16.msra.mxu0 0
      %1688 = vmatpush.bf16.msra.mxu0 0
      %1689 = vmatpush.bf16.msra.mxu0 0
      %1690 = vmatpush.bf16.msra.mxu0 0
      %1691 = vmatpush.bf16.msra.mxu0 0
      %1692 = vmatpush.bf16.msra.mxu0 0
      %1693 = vmatpush.bf16.msra.mxu0 %v1681
      %1694 = vmatmul.bf16.gmra.mxu0 %v942
      %v1695 = vpop.f32.mrf.mxu0
      %v1696 = vadd.f32 0.0, %v1695
      %v1697 = vpop.f32.mrf.mxu0
      %v1698 = vadd.f32 0.0, %v1697
      %1699 = vmatmul.bf16.gmra.mxu0 %v945
      %v1700 = vpop.f32.mrf.mxu0
      %v1701 = vadd.f32 0.0, %v1700
      %v1702 = vpop.f32.mrf.mxu0
      %v1703 = vadd.f32 0.0, %v1702
      %1704 = vmatmul.bf16.gmra.mxu0 %v948
      %v1705 = vpop.f32.mrf.mxu0
      %v1706 = vadd.f32 0.0, %v1705
      %v1707 = vpop.f32.mrf.mxu0
      %v1708 = vadd.f32 0.0, %v1707
      %1709 = vmatmul.bf16.gmra.mxu0 %v951
      %v1710 = vpop.f32.mrf.mxu0
      %v1711 = vadd.f32 0.0, %v1710
      %v1712 = vpop.f32.mrf.mxu0
      %v1713 = vadd.f32 0.0, %v1712
      %1714 = vmatmul.bf16.gmra.mxu0 %v954
      %v1715 = vpop.f32.mrf.mxu0
      %v1716 = vadd.f32 0.0, %v1715
      %v1717 = vpop.f32.mrf.mxu0
      %v1718 = vadd.f32 0.0, %v1717
      %1719 = vmatmul.bf16.gmra.mxu0 %v957
      %v1720 = vpop.f32.mrf.mxu0
      %v1721 = vadd.f32 0.0, %v1720
      %v1722 = vpop.f32.mrf.mxu0
      %v1723 = vadd.f32 0.0, %v1722
      %1724 = vmatmul.bf16.gmra.mxu0 %v1352
      %v1725 = vpop.f32.mrf.mxu0
      %v1726 = vadd.f32 0.0, %v1725
      %v1727 = vpop.f32.mrf.mxu0
      %v1728 = vadd.f32 0.0, %v1727
      %1729 = vmatmul.bf16.gmra.mxu0 %v1684
      %v1730 = vpop.f32.mrf.mxu0
      %v1731 = vadd.f32 0.0, %v1730
      %v1732 = vpop.f32.mrf.mxu0
      %v1733 = vadd.f32 0.0, %v1732
      %1734 = vdwg.mxu0
      %v1735 = vadd.f32 %v1657, %v1696
      %v1736 = vadd.f32 %v1658, %v1698
      %v1737 = vadd.f32 %v1659, %v1701
      %v1738 = vadd.f32 %v1660, %v1703
      %v1739 = vadd.f32 %v1661, %v1706
      %v1740 = vadd.f32 %v1662, %v1708
      %v1741 = vadd.f32 %v1663, %v1711
      %v1742 = vadd.f32 %v1664, %v1713
      %v1743 = vadd.f32 %v1665, %v1716
      %v1744 = vadd.f32 %v1666, %v1718
      %v1745 = vadd.f32 %v1667, %v1721
      %v1746 = vadd.f32 %v1668, %v1723
      %v1747 = vadd.f32 %v1669, %v1726
      %v1748 = vadd.f32 %v1670, %v1728
      %v1749 = vadd.f32 %v1671, %v1731
      %v1750 = vadd.f32 %v1672, %v1733
      %v1751 = vpack.c.bf16 %v1552, %v1551
      %v1752 = vpack.c.bf16 %v1554, %v1553
      %v1753 = vpack.c.bf16 %v1556, %v1555
      %v1754 = vpack.c.bf16 %v1558, %v1557
      %v1755 = vpack.c.bf16 %v1560, %v1559
      %v1756 = vpack.c.bf16 %v1562, %v1561
      %v1757 = vpack.c.bf16 %v1564, %v1563
      %v1758 = vpack.c.bf16 %v1566, %v1565
      %s1759 = scalar_lea.vmem %s4, 64
      %v1760 = vld [vmem:[%s1759] sm:$0xf]
      %v1761 = vld [vmem:[%s1759 + $0x4] sm:$0xf]
      %v1764 = vunpack.c.l.b16 %v1760
      %v1765 = vunpack.c.l.b16 %v1761
      %v1766 = vpack.c.b16 %v1765, %v1764
      %v1769 = vsel %vm934, %v1751, 0
      %v1772 = vsel %vm934, %v1752, 0
      %v1775 = vsel %vm934, %v1753, 0
      %v1778 = vsel %vm934, %v1754, 0
      %v1781 = vsel %vm934, %v1755, 0
      %v1784 = vsel %vm934, %v1756, 0
      %v1787 = vsel %vm934, %v1757, 0
      %v1790 = vsel %vm934, %v1758, 0
      %1792 = vmatpush.bf16.msra.mxu0 0
      %1793 = vmatpush.bf16.msra.mxu0 0
      %1794 = vmatpush.bf16.msra.mxu0 0
      %1795 = vmatpush.bf16.msra.mxu0 0
      %1796 = vmatpush.bf16.msra.mxu0 0
      %1797 = vmatpush.bf16.msra.mxu0 0
      %1798 = vmatpush.bf16.msra.mxu0 0
      %1799 = vmatpush.bf16.msra.mxu0 %v1766
      %1800 = vmatmul.bf16.gmra.mxu0 %v1769
      %v1801 = vpop.f32.mrf.mxu0
      %v1802 = vadd.f32 0.0, %v1801
      %v1803 = vpop.f32.mrf.mxu0
      %v1804 = vadd.f32 0.0, %v1803
      %1805 = vmatmul.bf16.gmra.mxu0 %v1772
      %v1806 = vpop.f32.mrf.mxu0
      %v1807 = vadd.f32 0.0, %v1806
      %v1808 = vpop.f32.mrf.mxu0
      %v1809 = vadd.f32 0.0, %v1808
      %1810 = vmatmul.bf16.gmra.mxu0 %v1775
      %v1811 = vpop.f32.mrf.mxu0
      %v1812 = vadd.f32 0.0, %v1811
      %v1813 = vpop.f32.mrf.mxu0
      %v1814 = vadd.f32 0.0, %v1813
      %1815 = vmatmul.bf16.gmra.mxu0 %v1778
      %v1816 = vpop.f32.mrf.mxu0
      %v1817 = vadd.f32 0.0, %v1816
      %v1818 = vpop.f32.mrf.mxu0
      %v1819 = vadd.f32 0.0, %v1818
      %1820 = vmatmul.bf16.gmra.mxu0 %v1781
      %v1821 = vpop.f32.mrf.mxu0
      %v1822 = vadd.f32 0.0, %v1821
      %v1823 = vpop.f32.mrf.mxu0
      %v1824 = vadd.f32 0.0, %v1823
      %1825 = vmatmul.bf16.gmra.mxu0 %v1784
      %v1826 = vpop.f32.mrf.mxu0
      %v1827 = vadd.f32 0.0, %v1826
      %v1828 = vpop.f32.mrf.mxu0
      %v1829 = vadd.f32 0.0, %v1828
      %1830 = vmatmul.bf16.gmra.mxu0 %v1787
      %v1831 = vpop.f32.mrf.mxu0
      %v1832 = vadd.f32 0.0, %v1831
      %v1833 = vpop.f32.mrf.mxu0
      %v1834 = vadd.f32 0.0, %v1833
      %1835 = vmatmul.bf16.gmra.mxu0 %v1790
      %v1836 = vpop.f32.mrf.mxu0
      %v1837 = vadd.f32 0.0, %v1836
      %v1838 = vpop.f32.mrf.mxu0
      %v1839 = vadd.f32 0.0, %v1838
      %1840 = vdwg.mxu0
      %v1841 = vadd.f32 %v1735, %v1802
      %v1842 = vadd.f32 %v1736, %v1804
      %v1843 = vadd.f32 %v1737, %v1807
      %v1844 = vadd.f32 %v1738, %v1809
      %v1845 = vadd.f32 %v1739, %v1812
      %v1846 = vadd.f32 %v1740, %v1814
      %v1847 = vadd.f32 %v1741, %v1817
      %v1848 = vadd.f32 %v1742, %v1819
      %v1849 = vadd.f32 %v1743, %v1822
      %v1850 = vadd.f32 %v1744, %v1824
      %v1851 = vadd.f32 %v1745, %v1827
      %v1852 = vadd.f32 %v1746, %v1829
      %v1853 = vadd.f32 %v1747, %v1832
      %v1854 = vadd.f32 %v1748, %v1834
      %v1855 = vadd.f32 %v1749, %v1837
      %v1856 = vadd.f32 %v1750, %v1839
      %v1857 = vld [vmem:[%s5] sm:$0x1]
      %v1859 = vperm.slane %v1857, 0
      %v1861 = vmul.f32 %v1841, %v1859
      %v1862 = vmul.f32 %v1842, %v1859
      %v1863 = vmul.f32 %v1843, %v1859
      %v1864 = vmul.f32 %v1844, %v1859
      %v1865 = vmul.f32 %v1845, %v1859
      %v1866 = vmul.f32 %v1846, %v1859
      %v1867 = vmul.f32 %v1847, %v1859
      %v1868 = vmul.f32 %v1848, %v1859
      %v1869 = vmul.f32 %v1849, %v1859
      %v1870 = vmul.f32 %v1850, %v1859
      %v1871 = vmul.f32 %v1851, %v1859
      %v1872 = vmul.f32 %v1852, %v1859
      %v1873 = vmul.f32 %v1853, %v1859
      %v1874 = vmul.f32 %v1854, %v1859
      %v1875 = vmul.f32 %v1855, %v1859
      %v1876 = vmul.f32 %v1856, %v1859
      %v1877 = vld [vmem:[%s6] sm:$0x1]
      %v1879 = vperm.slane %v1877, 0
      %v1881 = vadd.f32 %v1861, %v1879
      %v1882 = vadd.f32 %v1862, %v1879
      %v1883 = vadd.f32 %v1863, %v1879
      %v1884 = vadd.f32 %v1864, %v1879
      %v1885 = vadd.f32 %v1865, %v1879
      %v1886 = vadd.f32 %v1866, %v1879
      %v1887 = vadd.f32 %v1867, %v1879
      %v1888 = vadd.f32 %v1868, %v1879
      %v1889 = vadd.f32 %v1869, %v1879
      %v1890 = vadd.f32 %v1870, %v1879
      %v1891 = vadd.f32 %v1871, %v1879
      %v1892 = vadd.f32 %v1872, %v1879
      %v1893 = vadd.f32 %v1873, %v1879
      %v1894 = vadd.f32 %v1874, %v1879
      %v1895 = vadd.f32 %v1875, %v1879
      %v1896 = vadd.f32 %v1876, %v1879
      %vm1897 = vcmp.ge.f32.partialorder %v1881, 0.0
      %vm1898 = vcmp.ge.f32.partialorder %v1882, 0.0
      %vm1899 = vcmp.ge.f32.partialorder %v1883, 0.0
      %vm1900 = vcmp.ge.f32.partialorder %v1884, 0.0
      %vm1901 = vcmp.ge.f32.partialorder %v1885, 0.0
      %vm1902 = vcmp.ge.f32.partialorder %v1886, 0.0
      %vm1903 = vcmp.ge.f32.partialorder %v1887, 0.0
      %vm1904 = vcmp.ge.f32.partialorder %v1888, 0.0
      %vm1905 = vcmp.ge.f32.partialorder %v1889, 0.0
      %vm1906 = vcmp.ge.f32.partialorder %v1890, 0.0
      %vm1907 = vcmp.ge.f32.partialorder %v1891, 0.0
      %vm1908 = vcmp.ge.f32.partialorder %v1892, 0.0
      %vm1909 = vcmp.ge.f32.partialorder %v1893, 0.0
      %vm1910 = vcmp.ge.f32.partialorder %v1894, 0.0
      %vm1911 = vcmp.ge.f32.partialorder %v1895, 0.0
      %vm1912 = vcmp.ge.f32.partialorder %v1896, 0.0
      %v1913 = vld [vmem:[%s7] sm:$0x1]
      %v1915 = vperm.slane %v1913, 0
      %v1917 = vmul.f32 %v1915, %v1881
      %v1918 = vmul.f32 %v1915, %v1882
      %v1919 = vmul.f32 %v1915, %v1883
      %v1920 = vmul.f32 %v1915, %v1884
      %v1921 = vmul.f32 %v1915, %v1885
      %v1922 = vmul.f32 %v1915, %v1886
      %v1923 = vmul.f32 %v1915, %v1887
      %v1924 = vmul.f32 %v1915, %v1888
      %v1925 = vmul.f32 %v1915, %v1889
      %v1926 = vmul.f32 %v1915, %v1890
      %v1927 = vmul.f32 %v1915, %v1891
      %v1928 = vmul.f32 %v1915, %v1892
      %v1929 = vmul.f32 %v1915, %v1893
      %v1930 = vmul.f32 %v1915, %v1894
      %v1931 = vmul.f32 %v1915, %v1895
      %v1932 = vmul.f32 %v1915, %v1896
      %v1933 = vsel %vm1897, %v1881, %v1917
      %v1934 = vsel %vm1898, %v1882, %v1918
      %v1935 = vsel %vm1899, %v1883, %v1919
      %v1936 = vsel %vm1900, %v1884, %v1920
      %v1937 = vsel %vm1901, %v1885, %v1921
      %v1938 = vsel %vm1902, %v1886, %v1922
      %v1939 = vsel %vm1903, %v1887, %v1923
      %v1940 = vsel %vm1904, %v1888, %v1924
      %v1941 = vsel %vm1905, %v1889, %v1925
      %v1942 = vsel %vm1906, %v1890, %v1926
      %v1943 = vsel %vm1907, %v1891, %v1927
      %v1944 = vsel %vm1908, %v1892, %v1928
      %v1945 = vsel %vm1909, %v1893, %v1929
      %v1946 = vsel %vm1910, %v1894, %v1930
      %v1947 = vsel %vm1911, %v1895, %v1931
      %v1948 = vsel %vm1912, %v1896, %v1932
      %v1949 = vld [vmem:[%s523] sm:$0xff]
      %v1950 = vld [vmem:[%s523 + $0x8] sm:$0xff]
      %v1951 = vld [vmem:[%s523 + $0x10] sm:$0xff]
      %v1952 = vld [vmem:[%s523 + $0x18] sm:$0xff]
      %v1953 = vld [vmem:[%s523 + $0x20] sm:$0xff]
      %v1954 = vld [vmem:[%s523 + $0x28] sm:$0xff]
      %v1955 = vld [vmem:[%s523 + $0x30] sm:$0xff]
      %v1956 = vld [vmem:[%s523 + $0x38] sm:$0xff]
      %v1957 = vld [vmem:[%s523 + $0x40] sm:$0xff]
      %v1958 = vld [vmem:[%s523 + $0x48] sm:$0xff]
      %v1959 = vld [vmem:[%s523 + $0x50] sm:$0xff]
      %v1960 = vld [vmem:[%s523 + $0x58] sm:$0xff]
      %v1961 = vld [vmem:[%s523 + $0x60] sm:$0xff]
      %v1962 = vld [vmem:[%s523 + $0x68] sm:$0xff]
      %v1963 = vld [vmem:[%s523 + $0x70] sm:$0xff]
      %v1964 = vld [vmem:[%s523 + $0x78] sm:$0xff]
      %v1965 = vadd.f32 %v1933, %v1949
      %v1966 = vadd.f32 %v1934, %v1950
      %v1967 = vadd.f32 %v1935, %v1951
      %v1968 = vadd.f32 %v1936, %v1952
      %v1969 = vadd.f32 %v1937, %v1953
      %v1970 = vadd.f32 %v1938, %v1954
      %v1971 = vadd.f32 %v1939, %v1955
      %v1972 = vadd.f32 %v1940, %v1956
      %v1973 = vadd.f32 %v1941, %v1957
      %v1974 = vadd.f32 %v1942, %v1958
      %v1975 = vadd.f32 %v1943, %v1959
      %v1976 = vadd.f32 %v1944, %v1960
      %v1977 = vadd.f32 %v1945, %v1961
      %v1978 = vadd.f32 %v1946, %v1962
      %v1979 = vadd.f32 %v1947, %v1963
      %v1980 = vadd.f32 %v1948, %v1964
      %vm1981 = vcmp.ge.f32.partialorder %v1965, 0.0
      %vm1982 = vcmp.ge.f32.partialorder %v1966, 0.0
      %vm1983 = vcmp.ge.f32.partialorder %v1967, 0.0
      %vm1984 = vcmp.ge.f32.partialorder %v1968, 0.0
      %vm1985 = vcmp.ge.f32.partialorder %v1969, 0.0
      %vm1986 = vcmp.ge.f32.partialorder %v1970, 0.0
      %vm1987 = vcmp.ge.f32.partialorder %v1971, 0.0
      %vm1988 = vcmp.ge.f32.partialorder %v1972, 0.0
      %vm1989 = vcmp.ge.f32.partialorder %v1973, 0.0
      %vm1990 = vcmp.ge.f32.partialorder %v1974, 0.0
      %vm1991 = vcmp.ge.f32.partialorder %v1975, 0.0
      %vm1992 = vcmp.ge.f32.partialorder %v1976, 0.0
      %vm1993 = vcmp.ge.f32.partialorder %v1977, 0.0
      %vm1994 = vcmp.ge.f32.partialorder %v1978, 0.0
      %vm1995 = vcmp.ge.f32.partialorder %v1979, 0.0
      %vm1996 = vcmp.ge.f32.partialorder %v1980, 0.0
      %v1997 = vld [vmem:[%s8] sm:$0x1]
      %v1999 = vperm.slane %v1997, 0
      %v2001 = vmul.f32 %v1999, %v1965
      %v2002 = vmul.f32 %v1999, %v1966
      %v2003 = vmul.f32 %v1999, %v1967
      %v2004 = vmul.f32 %v1999, %v1968
      %v2005 = vmul.f32 %v1999, %v1969
      %v2006 = vmul.f32 %v1999, %v1970
      %v2007 = vmul.f32 %v1999, %v1971
      %v2008 = vmul.f32 %v1999, %v1972
      %v2009 = vmul.f32 %v1999, %v1973
      %v2010 = vmul.f32 %v1999, %v1974
      %v2011 = vmul.f32 %v1999, %v1975
      %v2012 = vmul.f32 %v1999, %v1976
      %v2013 = vmul.f32 %v1999, %v1977
      %v2014 = vmul.f32 %v1999, %v1978
      %v2015 = vmul.f32 %v1999, %v1979
      %v2016 = vmul.f32 %v1999, %v1980
      %v2017 = vsel %vm1981, %v1965, %v2001
      %v2018 = vsel %vm1982, %v1966, %v2002
      %v2019 = vsel %vm1983, %v1967, %v2003
      %v2020 = vsel %vm1984, %v1968, %v2004
      %v2021 = vsel %vm1985, %v1969, %v2005
      %v2022 = vsel %vm1986, %v1970, %v2006
      %v2023 = vsel %vm1987, %v1971, %v2007
      %v2024 = vsel %vm1988, %v1972, %v2008
      %v2025 = vsel %vm1989, %v1973, %v2009
      %v2026 = vsel %vm1990, %v1974, %v2010
      %v2027 = vsel %vm1991, %v1975, %v2011
      %v2028 = vsel %vm1992, %v1976, %v2012
      %v2029 = vsel %vm1993, %v1977, %v2013
      %v2030 = vsel %vm1994, %v1978, %v2014
      %v2031 = vsel %vm1995, %v1979, %v2015
      %v2032 = vsel %vm1996, %v1980, %v2016
      %2033 = vst.msk [vmem:[%s534] sm:$0xff] %vm934, %v2017
      %2034 = vst.msk [vmem:[%s534 + $0x8] sm:$0xff] %vm934, %v2018
      %2035 = vst.msk [vmem:[%s534 + $0x10] sm:$0xff] %vm934, %v2019
      %2036 = vst.msk [vmem:[%s534 + $0x18] sm:$0xff] %vm934, %v2020
      %2037 = vst.msk [vmem:[%s534 + $0x20] sm:$0xff] %vm934, %v2021
      %2038 = vst.msk [vmem:[%s534 + $0x28] sm:$0xff] %vm934, %v2022
      %2039 = vst.msk [vmem:[%s534 + $0x30] sm:$0xff] %vm934, %v2023
      %2040 = vst.msk [vmem:[%s534 + $0x38] sm:$0xff] %vm934, %v2024
      %2041 = vst.msk [vmem:[%s534 + $0x40] sm:$0xff] %vm934, %v2025
      %2042 = vst.msk [vmem:[%s534 + $0x48] sm:$0xff] %vm934, %v2026
      %2043 = vst.msk [vmem:[%s534 + $0x50] sm:$0xff] %vm934, %v2027
      %2044 = vst.msk [vmem:[%s534 + $0x58] sm:$0xff] %vm934, %v2028
      %2045 = vst.msk [vmem:[%s534 + $0x60] sm:$0xff] %vm934, %v2029
      %2046 = vst.msk [vmem:[%s534 + $0x68] sm:$0xff] %vm934, %v2030
      %2047 = vst.msk [vmem:[%s534 + $0x70] sm:$0xff] %vm934, %v2031
      %2048 = vst.msk [vmem:[%s534 + $0x78] sm:$0xff] %vm934, %v2032
      %s2049 = smul.u32 8, %s25
      %p2050 = scmp.lt.s32.totalorder %s24, 1
      %s2051 = scalar_select %p2050, %s24, 1
      %p2052 = scmp.lt.s32.totalorder %s2049, 15
      %s2053 = scalar_select %p2052, %s2049, 15
      %s2054 = smul.addr %s2053, 2
      %s2055 = smul.addr %s2051, 32
      %s2056 = sadd.s32 %s2054, %s2055
      %s2057 = smul.addr %s2056, 8
      %s2058 = scalar_lea.vmem %s9, %s2057
      // Predicated region
      $region57: #{up_conv_block_forward.5} parent=55 // pred_check
        %p2059 = pneg %p281
      $region58: #{up_conv_block_forward.5} parent=55 // pred_check_branch
        %2061 = sbr.rel (%p2059) target = $region60
      $region59: #{up_conv_block_forward.5} parent=55 // pred_region
        %s2062 = smul.u32 8, %s25
      $region60: #{up_conv_block_forward.5} parent=55 // pred_fallthru
        _
    $region56: #{up_conv_block_forward.5} parent=5 // pred_fallthru
      _
    %p2063 = scmp.le.s32.totalorder 2, %s15
    // Predicated region
    $region61: #{up_conv_block_forward.5} parent=5 // pred_check
      %p2064 = pneg %p2063
    $region62: #{up_conv_block_forward.5} parent=5 // pred_check_branch
      %2066 = sbr.rel (%p2064) target = $region64
    $region63: #{up_conv_block_forward.5} parent=5 // pred_region
      %s2067 = ssub.s32 %s15, 2
      // Predicated region
      $region65: #{up_conv_block_forward.5} parent=63 // pred_check
        %p2068 = pneg %p287
      $region66: #{up_conv_block_forward.5} parent=63 // pred_check_branch
        %2070 = sbr.rel (%p2068) target = $region68
      $region67: #{up_conv_block_forward.5} parent=63 // pred_region
        %s2071 = smul.u32 8, %s27
        %p2072 = scmp.lt.s32.totalorder %s26, 1
        %s2073 = scalar_select %p2072, %s26, 1
        %p2074 = scmp.lt.s32.totalorder %s2071, 15
        %s2075 = scalar_select %p2074, %s2071, 15
        %s2076 = smul.addr %s2075, 2
        %s2077 = smul.addr %s2073, 32
        %s2078 = sadd.s32 %s2076, %s2077
        %s2079 = smul.addr %s2078, 8
        %s2080 = scalar_lea.vmem %s9, %s2079
      $region68: #{up_conv_block_forward.5} parent=63 // pred_fallthru
        _
    $region64: #{up_conv_block_forward.5} parent=5 // pred_fallthru
      _
  $region6: #{up_conv_block_forward.5} parent=0 // loop_footer
    %s19 = sadd.s32 1, %s15
  $region7: #{up_conv_block_forward.5} parent=0 // loop_footer_branch
    %14 = sbr.rel target = $region3
  $region8: #{up_conv_block_forward.5} parent=0 // loop_exit
    _

</llo_original>
